<compile_context>
chip_gen: v7x
topology: tpu7x:2x2x1
jax: 0.10.0
libtpu: 0.0.40
codegen_flags: <defaults>
</compile_context>

<pallas_src>
import functools

import jax
import jax.numpy as jnp
from jax.experimental import pallas as pl
from jax.experimental.pallas import tpu as pltpu


HID = 16
NB = 8  # graph-batches per grid step -> NB * HID == 128 (lane-dense out block)

# Sublane-aligned row offsets inside the packed parameter buffer [40, HID]:
#   rows 0:3   -> W1 (3, 16)     (rows 3..7 zero pad)
#   row  8     -> b1 (1, 16)     (rows 9..15 zero pad)
#   rows 16:32 -> W2 (16, 16)
#   row  32    -> b2 (1, 16)     (rows 33..39 zero pad)
_W1_OFF, _B1_OFF, _W2_OFF, _B2_OFF, _PARAM_ROWS = 0, 8, 16, 32, 40

# Per-batch packed aux buffer [8 + N, N]:
#   rows 0:G      -> PA = pool @ adj_norm   (rows G..7 zero pad)
#   rows 8:8+N    -> x  (cols 0:3; rest zero pad)
_PA_OFF, _X_OFF = 0, 8


def gcn_kernel(adj_ref, aux_ref, params_ref, out_ref, *, n_nodes, n_graphs, n_sub):
    # Loop-invariant parameter slices (single packed buffer -> one DMA total).
    w1_r0 = params_ref[_W1_OFF + 0:_W1_OFF + 1, :]   # [1, 16]  (ones column)
    w1_r1 = params_ref[_W1_OFF + 1:_W1_OFF + 2, :]   # [1, 16]  (degree column)
    w1_r2 = params_ref[_W1_OFF + 2:_W1_OFF + 3, :]   # [1, 16]  (rand column)
    b1 = params_ref[_B1_OFF:_B1_OFF + 1, :]          # [1, 16]
    w2 = params_ref[_W2_OFF:_W2_OFF + HID, :]        # [16, 16]
    b2 = params_ref[_B2_OFF:_B2_OFF + 1, :]          # [1, 16]

    results = []
    for i in range(n_sub):                  # static unroll over sub-batches
        adj = adj_ref[i]                                       # [N, N]
        aux = aux_ref[i]                                       # [8+N, N]
        pa = aux[_PA_OFF:_PA_OFF + n_graphs, :]                # [G, N]
        x_deg = aux[_X_OFF:_X_OFF + n_nodes, 1:2]              # [N, 1]
        x_rnd = aux[_X_OFF:_X_OFF + n_nodes, 2:3]              # [N, 1]

        # GCNConv1 projection on the VPU.  x[:,0] == 1 exactly, so its term is
        # just W1 row 0 (broadcast); only 2 broadcast-FMAs remain.
        xw1 = w1_r0 + x_deg * w1_r1 + x_rnd * w1_r2            # [N, 16]

        # GCNConv1 aggregation + bias + ReLU (the only substantive MXU pass).
        h1 = jnp.dot(adj, xw1, preferred_element_type=jnp.float32) + b1
        h1 = jnp.maximum(h1, 0.0)                              # [N, 16]

        # GCNConv2 + global_mean_pool, fused and reassociated:
        #   pool @ (adj @ (h1 @ W2) + b2) == ((pool @ adj) @ h1) @ W2 + b2
        agg = jnp.dot(pa, h1, preferred_element_type=jnp.float32)   # [G, 16]

        # [G,16] @ [16,16] as 16 VPU broadcast-FMAs (skip the MXU push/pop
        # round trip on this <1%-utilization matmul; matters on v5e/v6e MRF).
        pooled = b2
        for k in range(HID):
            pooled = pooled + agg[:, k:k + 1] * w2[k:k + 1, :]       # [G, 16]

        # log_softmax over dim 1 (max-subtracted, f32).
        m = jnp.max(pooled, axis=-1, keepdims=True)
        z = pooled - m
        lse = jnp.log(jnp.sum(jnp.exp(z), axis=-1, keepdims=True))
        results.append(z - lse)                                # [G, 16]

    # Lane-dense (G, NB*HID) block -> single unmasked store + wide writeback.
    out_ref[...] = jnp.concatenate(results, axis=-1)


def gcn_forward(adj_all, aux_all, params, *, num_graphs):
    """adj_all: [B,N,N], aux_all: [B,8+N,N], params: [40,HID] -> [B,G,HID]."""
    B, N, _ = adj_all.shape
    C = params.shape[1]                              # = HID (fc never applied)

    # Pad the batch axis up to a multiple of NB (padded entries are all-zero:
    # they produce log_softmax(b2), finite, and are sliced off below).
    pad = (-B) % NB
    if pad:
        adj_all = jnp.pad(adj_all, ((0, pad), (0, 0), (0, 0)))
        aux_all = jnp.pad(aux_all, ((0, pad), (0, 0), (0, 0)))
    BP = B + pad
    steps = BP // NB

    # Advisory cost hint so XLA can overlap this call with surrounding ops.
    flops = BP * (2 * N * N * HID + 2 * num_graphs * N * HID
                  + 2 * num_graphs * HID * HID + 4 * N * HID)
    transcendentals = BP * (num_graphs * HID + num_graphs)
    bytes_accessed = 4 * (BP * N * N + BP * (_X_OFF + N) * N
                          + _PARAM_ROWS * C + num_graphs * BP * C)

    out = pl.pallas_call(
        functools.partial(gcn_kernel, n_nodes=N, n_graphs=num_graphs, n_sub=NB),
        out_shape=jax.ShapeDtypeStruct((num_graphs, BP * C), jnp.float32),
        grid_spec=pltpu.PrefetchScalarGridSpec(
            num_scalar_prefetch=0,
            grid=(steps,),
            in_specs=[
                pl.BlockSpec((NB, N, N), lambda b: (b, 0, 0)),           # adj
                pl.BlockSpec((NB, _X_OFF + N, N), lambda b: (b, 0, 0)),  # aux
                pl.BlockSpec((_PARAM_ROWS, C), lambda b: (0, 0)),        # params
            ],
            out_specs=pl.BlockSpec((num_graphs, NB * C), lambda b: (0, b)),
        ),
        compiler_params=pltpu.CompilerParams(
            dimension_semantics=("parallel",)),       # both TCs on v7x
        cost_estimate=pl.CostEstimate(
            flops=flops, transcendentals=transcendentals,
            bytes_accessed=bytes_accessed),
    )(adj_all, aux_all, params)

    # [G, BP*HID] (batch-major lane stacking) -> [BP, G, HID] -> slice real B.
    return out.reshape(num_graphs, BP, C).transpose(1, 0, 2)[:B]


if __name__ == "__main__":
    key = jax.random.PRNGKey(0)
    B, N, E, G = 16, 32, 64, 4       # 16 graph-batches; 32 nodes / 4 graphs each
    F_IN = 3
    NUM_CLASSES = 5                  # fc(16, num_classes) is unused in forward()

    kparam, kdata = jax.random.split(key)
    kw1, kb1, kw2, kb2 = jax.random.split(kparam, 4)
    batch_keys = jax.random.split(kdata, B)

    # --- per-graph-batch data + static graph preprocessing (host side) ---
    # TODO(synk): sparse edge_index gather/scatter message passing has no clean
    # Pallas equivalent at this scale; we densify the normalized adjacency once
    # per graph batch and aggregate with MXU matmuls in-kernel.
    def make_graph_batch(k):
        k_src, k_off, k_rand = jax.random.split(k, 3)
        src = jax.random.randint(k_src, (E,), 0, N)
        dst = (src + jax.random.randint(k_off, (E,), 1, N)) % N
        batch = jnp.arange(N) // (N // G)

        # node features (glue): ones, degree (both endpoints), rand
        deg = jnp.zeros((N,), jnp.float32).at[src].add(1.0).at[dst].add(1.0)
        x = jnp.concatenate([jnp.ones((N, 1), jnp.float32), deg[:, None],
                             jax.random.uniform(k_rand, (N, 1), jnp.float32)],
                            axis=1)

        # dense normalized adjacency D^-1/2 (A + I) D^-1/2 (undirected edges)
        a_hat = (jnp.zeros((N, N), jnp.float32)
                 .at[dst, src].add(1.0)
                 .at[src, dst].add(1.0)
                 + jnp.eye(N, dtype=jnp.float32))
        deg_hat = a_hat.sum(axis=1)
        d_inv_sqrt = jnp.where(deg_hat > 0, 1.0 / jnp.sqrt(deg_hat), 0.0)
        adj_norm = d_inv_sqrt[:, None] * a_hat * d_inv_sqrt[None, :]

        # mean-pooling matrix [G, N]
        onehot = (batch[None, :] == jnp.arange(G)[:, None]).astype(jnp.float32)
        counts = onehot.sum(axis=1, keepdims=True)
        pool = onehot / jnp.maximum(counts, 1.0)
        return x, adj_norm, pool

    xs, adjs, pools = [], [], []
    for bk in batch_keys:
        xb, ab, pb = make_graph_batch(bk)
        xs.append(xb), adjs.append(ab), pools.append(pb)
    x_all = jnp.stack(xs)            # [B, N, 3]
    adj_all = jnp.stack(adjs)        # [B, N, N]
    pool_all = jnp.stack(pools)      # [B, G, N]

    # fusion exactness guard: every graph must have >=1 node (pool rows sum to 1)
    assert bool(jnp.all(pool_all.sum(axis=-1) > 0.5))

    # fused PA = pool @ adj_norm (static per graph batch, outside the hot path)
    pa_all = jnp.einsum('bgn,bnm->bgm', pool_all, adj_all)      # [B, G, N]

    # pack per-batch aux buffer [8+N, N]: rows 0:G = PA, rows 8:8+N cols 0:3 = x
    aux_all = (jnp.zeros((B, _X_OFF + N, N), jnp.float32)
               .at[:, _PA_OFF:_PA_OFF + G, :].set(pa_all)
               .at[:, _X_OFF:_X_OFF + N, :F_IN].set(x_all))

    # --- deterministic parameter init (shapes from __init__) ---
    def glorot(k, shape):
        lim = jnp.sqrt(6.0 / (shape[0] + shape[1]))
        return jax.random.uniform(k, shape, jnp.float32, -lim, lim)

    w1 = glorot(kw1, (F_IN, HID))                                # GCNConv(3, 16)
    b1 = 0.01 * jax.random.uniform(kb1, (1, HID), jnp.float32)
    w2 = glorot(kw2, (HID, HID))                                 # GCNConv(16, 16)
    b2 = 0.01 * jax.random.uniform(kb2, (1, HID), jnp.float32)
    # self.fc = Linear(16, NUM_CLASSES) exists in __init__ but is never applied
    # in forward(); we faithfully skip it.

    # pack all parameters into one sublane-aligned VMEM buffer (one DMA total)
    params = (jnp.zeros((_PARAM_ROWS, HID), jnp.float32)
              .at[_W1_OFF:_W1_OFF + F_IN, :].set(w1)
              .at[_B1_OFF, :].set(b1[0])
              .at[_W2_OFF:_W2_OFF + HID, :].set(w2)
              .at[_B2_OFF, :].set(b2[0]))

    out = jax.block_until_ready(gcn_forward(adj_all, aux_all, params,
                                            num_graphs=G))

    # pure-JAX reference (un-fused, matches the PyTorch forward exactly)
    h = jnp.maximum(jnp.einsum('bnm,bmh->bnh', adj_all, x_all @ w1) + b1, 0.0)
    h = jnp.einsum('bnm,bmh->bnh', adj_all, h @ w2) + b2
    ref = jax.nn.log_softmax(jnp.einsum('bgn,bnh->bgh', pool_all, h), axis=-1)

    assert out.shape == (B, G, HID)
    assert jnp.allclose(out, ref, atol=1e-4, rtol=1e-4), \
        float(jnp.max(jnp.abs(out - ref)))

    print("KERNEL_OK")
</pallas_src>

<mosaic_0001>
module attributes {stable_mosaic.version = 11 : i64} {
  func.func @gcn_kernel(%arg0: i32, %arg1: memref<8x32x32xf32, #tpu.memory_space<vmem>>, %arg2: memref<8x40x32xf32, #tpu.memory_space<vmem>>, %arg3: memref<40x16xf32, #tpu.memory_space<vmem>>, %arg4: memref<4x128xf32, #tpu.memory_space<vmem>>) attributes {dimension_semantics = [#tpu.dimension_semantics<parallel>], iteration_bounds = array<i64: 2>, scalar_prefetch = 0 : i64, scratch_operands = 0 : i64, tpu.core_type = #tpu.core_type<tc>, window_params = [{transform_indices = @transform_0, window_bounds = array<i64: 8, 32, 32>}, {transform_indices = @transform_1, window_bounds = array<i64: 8, 40, 32>}, {pipeline_mode = #tpu.pipeline_mode<synchronous>, transform_indices = @transform_2, window_bounds = array<i64: 40, 16>}, {transform_indices = @transform_3, window_bounds = array<i64: 4, 128>}]} {
    %c0 = arith.constant 0 : index
    %c0_0 = arith.constant 0 : index
    %0 = vector.load %arg3[%c0, %c0_0] : memref<40x16xf32, #tpu.memory_space<vmem>>, vector<1x16xf32>
    %c1 = arith.constant 1 : index
    %c0_1 = arith.constant 0 : index
    %1 = vector.load %arg3[%c1, %c0_1] : memref<40x16xf32, #tpu.memory_space<vmem>>, vector<1x16xf32>
    %c2 = arith.constant 2 : index
    %c0_2 = arith.constant 0 : index
    %2 = vector.load %arg3[%c2, %c0_2] : memref<40x16xf32, #tpu.memory_space<vmem>>, vector<1x16xf32>
    %c8 = arith.constant 8 : index
    %c0_3 = arith.constant 0 : index
    %3 = vector.load %arg3[%c8, %c0_3] : memref<40x16xf32, #tpu.memory_space<vmem>>, vector<1x16xf32>
    %c16 = arith.constant 16 : index
    %c0_4 = arith.constant 0 : index
    %4 = vector.load %arg3[%c16, %c0_4] : memref<40x16xf32, #tpu.memory_space<vmem>>, vector<16x16xf32>
    %c32 = arith.constant 32 : index
    %c0_5 = arith.constant 0 : index
    %5 = vector.load %arg3[%c32, %c0_5] : memref<40x16xf32, #tpu.memory_space<vmem>>, vector<1x16xf32>
    %c0_6 = arith.constant 0 : index
    %c0_7 = arith.constant 0 : index
    %c0_8 = arith.constant 0 : index
    %6 = vector.load %arg1[%c0_6, %c0_7, %c0_8] : memref<8x32x32xf32, #tpu.memory_space<vmem>>, vector<1x32x32xf32>
    %7 = vector.shape_cast %6 : vector<1x32x32xf32> to vector<32x32xf32>
    %c0_9 = arith.constant 0 : index
    %c0_10 = arith.constant 0 : index
    %c0_11 = arith.constant 0 : index
    %8 = vector.load %arg2[%c0_9, %c0_10, %c0_11] : memref<8x40x32xf32, #tpu.memory_space<vmem>>, vector<1x40x32xf32>
    %9 = vector.shape_cast %8 : vector<1x40x32xf32> to vector<40x32xf32>
    %10 = vector.extract_strided_slice %9 {offsets = [0, 0], sizes = [4, 32], strides = [1, 1]} : vector<40x32xf32> to vector<4x32xf32>
    %11 = vector.extract_strided_slice %9 {offsets = [8, 1], sizes = [32, 1], strides = [1, 1]} : vector<40x32xf32> to vector<32x1xf32>
    %12 = vector.extract_strided_slice %9 {offsets = [8, 2], sizes = [32, 1], strides = [1, 1]} : vector<40x32xf32> to vector<32x1xf32>
    %13 = vector.broadcast %11 : vector<32x1xf32> to vector<32x16xf32>
    %14 = vector.broadcast %1 : vector<1x16xf32> to vector<32x16xf32>
    %15 = arith.mulf %13, %14 : vector<32x16xf32>
    %16 = vector.broadcast %0 : vector<1x16xf32> to vector<32x16xf32>
    %17 = arith.addf %16, %15 : vector<32x16xf32>
    %18 = vector.broadcast %12 : vector<32x1xf32> to vector<32x16xf32>
    %19 = vector.broadcast %2 : vector<1x16xf32> to vector<32x16xf32>
    %20 = arith.mulf %18, %19 : vector<32x16xf32>
    %21 = arith.addf %17, %20 : vector<32x16xf32>
    %cst = arith.constant dense<0.000000e+00> : vector<32x16xf32>
    %22 = tpu.matmul %7, %21, %cst {dimension_numbers = #tpu.dot_dimension_numbers<[1], [0], [0], [1], [0, 0, 1, 1], [], []>} : vector<32x32xf32>, vector<32x16xf32>, vector<32x16xf32> -> vector<32x16xf32>
    %23 = vector.broadcast %3 : vector<1x16xf32> to vector<32x16xf32>
    %24 = arith.addf %22, %23 : vector<32x16xf32>
    %cst_12 = arith.constant 0.000000e+00 : f32
    %25 = vector.broadcast %cst_12 : f32 to vector<32x16xf32>
    %26 = arith.maximumf %24, %25 : vector<32x16xf32>
    %cst_13 = arith.constant dense<0.000000e+00> : vector<4x16xf32>
    %27 = tpu.matmul %10, %26, %cst_13 {dimension_numbers = #tpu.dot_dimension_numbers<[1], [0], [0], [1], [0, 0, 1, 1], [], []>} : vector<4x32xf32>, vector<32x16xf32>, vector<4x16xf32> -> vector<4x16xf32>
    %28 = vector.extract_strided_slice %27 {offsets = [0, 0], sizes = [4, 1], strides = [1, 1]} : vector<4x16xf32> to vector<4x1xf32>
    %29 = vector.extract_strided_slice %4 {offsets = [0, 0], sizes = [1, 16], strides = [1, 1]} : vector<16x16xf32> to vector<1x16xf32>
    %30 = vector.broadcast %28 : vector<4x1xf32> to vector<4x16xf32>
    %31 = vector.broadcast %29 : vector<1x16xf32> to vector<4x16xf32>
    %32 = arith.mulf %30, %31 : vector<4x16xf32>
    %33 = vector.broadcast %5 : vector<1x16xf32> to vector<4x16xf32>
    %34 = arith.addf %33, %32 : vector<4x16xf32>
    %35 = vector.extract_strided_slice %27 {offsets = [0, 1], sizes = [4, 1], strides = [1, 1]} : vector<4x16xf32> to vector<4x1xf32>
    %36 = vector.extract_strided_slice %4 {offsets = [1, 0], sizes = [1, 16], strides = [1, 1]} : vector<16x16xf32> to vector<1x16xf32>
    %37 = vector.broadcast %35 : vector<4x1xf32> to vector<4x16xf32>
    %38 = vector.broadcast %36 : vector<1x16xf32> to vector<4x16xf32>
    %39 = arith.mulf %37, %38 : vector<4x16xf32>
    %40 = arith.addf %34, %39 : vector<4x16xf32>
    %41 = vector.extract_strided_slice %27 {offsets = [0, 2], sizes = [4, 1], strides = [1, 1]} : vector<4x16xf32> to vector<4x1xf32>
    %42 = vector.extract_strided_slice %4 {offsets = [2, 0], sizes = [1, 16], strides = [1, 1]} : vector<16x16xf32> to vector<1x16xf32>
    %43 = vector.broadcast %41 : vector<4x1xf32> to vector<4x16xf32>
    %44 = vector.broadcast %42 : vector<1x16xf32> to vector<4x16xf32>
    %45 = arith.mulf %43, %44 : vector<4x16xf32>
    %46 = arith.addf %40, %45 : vector<4x16xf32>
    %47 = vector.extract_strided_slice %27 {offsets = [0, 3], sizes = [4, 1], strides = [1, 1]} : vector<4x16xf32> to vector<4x1xf32>
    %48 = vector.extract_strided_slice %4 {offsets = [3, 0], sizes = [1, 16], strides = [1, 1]} : vector<16x16xf32> to vector<1x16xf32>
    %49 = vector.broadcast %47 : vector<4x1xf32> to vector<4x16xf32>
    %50 = vector.broadcast %48 : vector<1x16xf32> to vector<4x16xf32>
    %51 = arith.mulf %49, %50 : vector<4x16xf32>
    %52 = arith.addf %46, %51 : vector<4x16xf32>
    %53 = vector.extract_strided_slice %27 {offsets = [0, 4], sizes = [4, 1], strides = [1, 1]} : vector<4x16xf32> to vector<4x1xf32>
    %54 = vector.extract_strided_slice %4 {offsets = [4, 0], sizes = [1, 16], strides = [1, 1]} : vector<16x16xf32> to vector<1x16xf32>
    %55 = vector.broadcast %53 : vector<4x1xf32> to vector<4x16xf32>
    %56 = vector.broadcast %54 : vector<1x16xf32> to vector<4x16xf32>
    %57 = arith.mulf %55, %56 : vector<4x16xf32>
    %58 = arith.addf %52, %57 : vector<4x16xf32>
    %59 = vector.extract_strided_slice %27 {offsets = [0, 5], sizes = [4, 1], strides = [1, 1]} : vector<4x16xf32> to vector<4x1xf32>
    %60 = vector.extract_strided_slice %4 {offsets = [5, 0], sizes = [1, 16], strides = [1, 1]} : vector<16x16xf32> to vector<1x16xf32>
    %61 = vector.broadcast %59 : vector<4x1xf32> to vector<4x16xf32>
    %62 = vector.broadcast %60 : vector<1x16xf32> to vector<4x16xf32>
    %63 = arith.mulf %61, %62 : vector<4x16xf32>
    %64 = arith.addf %58, %63 : vector<4x16xf32>
    %65 = vector.extract_strided_slice %27 {offsets = [0, 6], sizes = [4, 1], strides = [1, 1]} : vector<4x16xf32> to vector<4x1xf32>
    %66 = vector.extract_strided_slice %4 {offsets = [6, 0], sizes = [1, 16], strides = [1, 1]} : vector<16x16xf32> to vector<1x16xf32>
    %67 = vector.broadcast %65 : vector<4x1xf32> to vector<4x16xf32>
    %68 = vector.broadcast %66 : vector<1x16xf32> to vector<4x16xf32>
    %69 = arith.mulf %67, %68 : vector<4x16xf32>
    %70 = arith.addf %64, %69 : vector<4x16xf32>
    %71 = vector.extract_strided_slice %27 {offsets = [0, 7], sizes = [4, 1], strides = [1, 1]} : vector<4x16xf32> to vector<4x1xf32>
    %72 = vector.extract_strided_slice %4 {offsets = [7, 0], sizes = [1, 16], strides = [1, 1]} : vector<16x16xf32> to vector<1x16xf32>
    %73 = vector.broadcast %71 : vector<4x1xf32> to vector<4x16xf32>
    %74 = vector.broadcast %72 : vector<1x16xf32> to vector<4x16xf32>
    %75 = arith.mulf %73, %74 : vector<4x16xf32>
    %76 = arith.addf %70, %75 : vector<4x16xf32>
    %77 = vector.extract_strided_slice %27 {offsets = [0, 8], sizes = [4, 1], strides = [1, 1]} : vector<4x16xf32> to vector<4x1xf32>
    %78 = vector.extract_strided_slice %4 {offsets = [8, 0], sizes = [1, 16], strides = [1, 1]} : vector<16x16xf32> to vector<1x16xf32>
    %79 = vector.broadcast %77 : vector<4x1xf32> to vector<4x16xf32>
    %80 = vector.broadcast %78 : vector<1x16xf32> to vector<4x16xf32>
    %81 = arith.mulf %79, %80 : vector<4x16xf32>
    %82 = arith.addf %76, %81 : vector<4x16xf32>
    %83 = vector.extract_strided_slice %27 {offsets = [0, 9], sizes = [4, 1], strides = [1, 1]} : vector<4x16xf32> to vector<4x1xf32>
    %84 = vector.extract_strided_slice %4 {offsets = [9, 0], sizes = [1, 16], strides = [1, 1]} : vector<16x16xf32> to vector<1x16xf32>
    %85 = vector.broadcast %83 : vector<4x1xf32> to vector<4x16xf32>
    %86 = vector.broadcast %84 : vector<1x16xf32> to vector<4x16xf32>
    %87 = arith.mulf %85, %86 : vector<4x16xf32>
    %88 = arith.addf %82, %87 : vector<4x16xf32>
    %89 = vector.extract_strided_slice %27 {offsets = [0, 10], sizes = [4, 1], strides = [1, 1]} : vector<4x16xf32> to vector<4x1xf32>
    %90 = vector.extract_strided_slice %4 {offsets = [10, 0], sizes = [1, 16], strides = [1, 1]} : vector<16x16xf32> to vector<1x16xf32>
    %91 = vector.broadcast %89 : vector<4x1xf32> to vector<4x16xf32>
    %92 = vector.broadcast %90 : vector<1x16xf32> to vector<4x16xf32>
    %93 = arith.mulf %91, %92 : vector<4x16xf32>
    %94 = arith.addf %88, %93 : vector<4x16xf32>
    %95 = vector.extract_strided_slice %27 {offsets = [0, 11], sizes = [4, 1], strides = [1, 1]} : vector<4x16xf32> to vector<4x1xf32>
    %96 = vector.extract_strided_slice %4 {offsets = [11, 0], sizes = [1, 16], strides = [1, 1]} : vector<16x16xf32> to vector<1x16xf32>
    %97 = vector.broadcast %95 : vector<4x1xf32> to vector<4x16xf32>
    %98 = vector.broadcast %96 : vector<1x16xf32> to vector<4x16xf32>
    %99 = arith.mulf %97, %98 : vector<4x16xf32>
    %100 = arith.addf %94, %99 : vector<4x16xf32>
    %101 = vector.extract_strided_slice %27 {offsets = [0, 12], sizes = [4, 1], strides = [1, 1]} : vector<4x16xf32> to vector<4x1xf32>
    %102 = vector.extract_strided_slice %4 {offsets = [12, 0], sizes = [1, 16], strides = [1, 1]} : vector<16x16xf32> to vector<1x16xf32>
    %103 = vector.broadcast %101 : vector<4x1xf32> to vector<4x16xf32>
    %104 = vector.broadcast %102 : vector<1x16xf32> to vector<4x16xf32>
    %105 = arith.mulf %103, %104 : vector<4x16xf32>
    %106 = arith.addf %100, %105 : vector<4x16xf32>
    %107 = vector.extract_strided_slice %27 {offsets = [0, 13], sizes = [4, 1], strides = [1, 1]} : vector<4x16xf32> to vector<4x1xf32>
    %108 = vector.extract_strided_slice %4 {offsets = [13, 0], sizes = [1, 16], strides = [1, 1]} : vector<16x16xf32> to vector<1x16xf32>
    %109 = vector.broadcast %107 : vector<4x1xf32> to vector<4x16xf32>
    %110 = vector.broadcast %108 : vector<1x16xf32> to vector<4x16xf32>
    %111 = arith.mulf %109, %110 : vector<4x16xf32>
    %112 = arith.addf %106, %111 : vector<4x16xf32>
    %113 = vector.extract_strided_slice %27 {offsets = [0, 14], sizes = [4, 1], strides = [1, 1]} : vector<4x16xf32> to vector<4x1xf32>
    %114 = vector.extract_strided_slice %4 {offsets = [14, 0], sizes = [1, 16], strides = [1, 1]} : vector<16x16xf32> to vector<1x16xf32>
    %115 = vector.broadcast %113 : vector<4x1xf32> to vector<4x16xf32>
    %116 = vector.broadcast %114 : vector<1x16xf32> to vector<4x16xf32>
    %117 = arith.mulf %115, %116 : vector<4x16xf32>
    %118 = arith.addf %112, %117 : vector<4x16xf32>
    %119 = vector.extract_strided_slice %27 {offsets = [0, 15], sizes = [4, 1], strides = [1, 1]} : vector<4x16xf32> to vector<4x1xf32>
    %120 = vector.extract_strided_slice %4 {offsets = [15, 0], sizes = [1, 16], strides = [1, 1]} : vector<16x16xf32> to vector<1x16xf32>
    %121 = vector.broadcast %119 : vector<4x1xf32> to vector<4x16xf32>
    %122 = vector.broadcast %120 : vector<1x16xf32> to vector<4x16xf32>
    %123 = arith.mulf %121, %122 : vector<4x16xf32>
    %124 = arith.addf %118, %123 : vector<4x16xf32>
    %cst_14 = arith.constant dense<0xFF800000> : vector<4xf32>
    %125 = vector.multi_reduction <maximumf>, %124, %cst_14 [1] : vector<4x16xf32> to vector<4xf32>
    %126 = vector.shape_cast %125 : vector<4xf32> to vector<4x1xf32>
    %127 = vector.broadcast %126 : vector<4x1xf32> to vector<4x16xf32>
    %128 = arith.subf %124, %127 : vector<4x16xf32>
    %129 = math.exp %128 : vector<4x16xf32>
    %cst_15 = arith.constant dense<0.000000e+00> : vector<4xf32>
    %130 = vector.multi_reduction <add>, %129, %cst_15 [1] : vector<4x16xf32> to vector<4xf32>
    %131 = vector.shape_cast %130 : vector<4xf32> to vector<4x1xf32>
    %132 = math.log %131 : vector<4x1xf32>
    %133 = vector.broadcast %132 : vector<4x1xf32> to vector<4x16xf32>
    %134 = arith.subf %128, %133 : vector<4x16xf32>
    %c1_16 = arith.constant 1 : index
    %c0_17 = arith.constant 0 : index
    %c0_18 = arith.constant 0 : index
    %135 = vector.load %arg1[%c1_16, %c0_17, %c0_18] : memref<8x32x32xf32, #tpu.memory_space<vmem>>, vector<1x32x32xf32>
    %136 = vector.shape_cast %135 : vector<1x32x32xf32> to vector<32x32xf32>
    %c1_19 = arith.constant 1 : index
    %c0_20 = arith.constant 0 : index
    %c0_21 = arith.constant 0 : index
    %137 = vector.load %arg2[%c1_19, %c0_20, %c0_21] : memref<8x40x32xf32, #tpu.memory_space<vmem>>, vector<1x40x32xf32>
    %138 = vector.shape_cast %137 : vector<1x40x32xf32> to vector<40x32xf32>
    %139 = vector.extract_strided_slice %138 {offsets = [0, 0], sizes = [4, 32], strides = [1, 1]} : vector<40x32xf32> to vector<4x32xf32>
    %140 = vector.extract_strided_slice %138 {offsets = [8, 1], sizes = [32, 1], strides = [1, 1]} : vector<40x32xf32> to vector<32x1xf32>
    %141 = vector.extract_strided_slice %138 {offsets = [8, 2], sizes = [32, 1], strides = [1, 1]} : vector<40x32xf32> to vector<32x1xf32>
    %142 = vector.broadcast %140 : vector<32x1xf32> to vector<32x16xf32>
    %143 = vector.broadcast %1 : vector<1x16xf32> to vector<32x16xf32>
    %144 = arith.mulf %142, %143 : vector<32x16xf32>
    %145 = vector.broadcast %0 : vector<1x16xf32> to vector<32x16xf32>
    %146 = arith.addf %145, %144 : vector<32x16xf32>
    %147 = vector.broadcast %141 : vector<32x1xf32> to vector<32x16xf32>
    %148 = vector.broadcast %2 : vector<1x16xf32> to vector<32x16xf32>
    %149 = arith.mulf %147, %148 : vector<32x16xf32>
    %150 = arith.addf %146, %149 : vector<32x16xf32>
    %cst_22 = arith.constant dense<0.000000e+00> : vector<32x16xf32>
    %151 = tpu.matmul %136, %150, %cst_22 {dimension_numbers = #tpu.dot_dimension_numbers<[1], [0], [0], [1], [0, 0, 1, 1], [], []>} : vector<32x32xf32>, vector<32x16xf32>, vector<32x16xf32> -> vector<32x16xf32>
    %152 = vector.broadcast %3 : vector<1x16xf32> to vector<32x16xf32>
    %153 = arith.addf %151, %152 : vector<32x16xf32>
    %cst_23 = arith.constant 0.000000e+00 : f32
    %154 = vector.broadcast %cst_23 : f32 to vector<32x16xf32>
    %155 = arith.maximumf %153, %154 : vector<32x16xf32>
    %cst_24 = arith.constant dense<0.000000e+00> : vector<4x16xf32>
    %156 = tpu.matmul %139, %155, %cst_24 {dimension_numbers = #tpu.dot_dimension_numbers<[1], [0], [0], [1], [0, 0, 1, 1], [], []>} : vector<4x32xf32>, vector<32x16xf32>, vector<4x16xf32> -> vector<4x16xf32>
    %157 = vector.extract_strided_slice %156 {offsets = [0, 0], sizes = [4, 1], strides = [1, 1]} : vector<4x16xf32> to vector<4x1xf32>
    %158 = vector.extract_strided_slice %4 {offsets = [0, 0], sizes = [1, 16], strides = [1, 1]} : vector<16x16xf32> to vector<1x16xf32>
    %159 = vector.broadcast %157 : vector<4x1xf32> to vector<4x16xf32>
    %160 = vector.broadcast %158 : vector<1x16xf32> to vector<4x16xf32>
    %161 = arith.mulf %159, %160 : vector<4x16xf32>
    %162 = vector.broadcast %5 : vector<1x16xf32> to vector<4x16xf32>
    %163 = arith.addf %162, %161 : vector<4x16xf32>
    %164 = vector.extract_strided_slice %156 {offsets = [0, 1], sizes = [4, 1], strides = [1, 1]} : vector<4x16xf32> to vector<4x1xf32>
    %165 = vector.extract_strided_slice %4 {offsets = [1, 0], sizes = [1, 16], strides = [1, 1]} : vector<16x16xf32> to vector<1x16xf32>
    %166 = vector.broadcast %164 : vector<4x1xf32> to vector<4x16xf32>
    %167 = vector.broadcast %165 : vector<1x16xf32> to vector<4x16xf32>
    %168 = arith.mulf %166, %167 : vector<4x16xf32>
    %169 = arith.addf %163, %168 : vector<4x16xf32>
    %170 = vector.extract_strided_slice %156 {offsets = [0, 2], sizes = [4, 1], strides = [1, 1]} : vector<4x16xf32> to vector<4x1xf32>
    %171 = vector.extract_strided_slice %4 {offsets = [2, 0], sizes = [1, 16], strides = [1, 1]} : vector<16x16xf32> to vector<1x16xf32>
    %172 = vector.broadcast %170 : vector<4x1xf32> to vector<4x16xf32>
    %173 = vector.broadcast %171 : vector<1x16xf32> to vector<4x16xf32>
    %174 = arith.mulf %172, %173 : vector<4x16xf32>
    %175 = arith.addf %169, %174 : vector<4x16xf32>
    %176 = vector.extract_strided_slice %156 {offsets = [0, 3], sizes = [4, 1], strides = [1, 1]} : vector<4x16xf32> to vector<4x1xf32>
    %177 = vector.extract_strided_slice %4 {offsets = [3, 0], sizes = [1, 16], strides = [1, 1]} : vector<16x16xf32> to vector<1x16xf32>
    %178 = vector.broadcast %176 : vector<4x1xf32> to vector<4x16xf32>
    %179 = vector.broadcast %177 : vector<1x16xf32> to vector<4x16xf32>
    %180 = arith.mulf %178, %179 : vector<4x16xf32>
    %181 = arith.addf %175, %180 : vector<4x16xf32>
    %182 = vector.extract_strided_slice %156 {offsets = [0, 4], sizes = [4, 1], strides = [1, 1]} : vector<4x16xf32> to vector<4x1xf32>
    %183 = vector.extract_strided_slice %4 {offsets = [4, 0], sizes = [1, 16], strides = [1, 1]} : vector<16x16xf32> to vector<1x16xf32>
    %184 = vector.broadcast %182 : vector<4x1xf32> to vector<4x16xf32>
    %185 = vector.broadcast %183 : vector<1x16xf32> to vector<4x16xf32>
    %186 = arith.mulf %184, %185 : vector<4x16xf32>
    %187 = arith.addf %181, %186 : vector<4x16xf32>
    %188 = vector.extract_strided_slice %156 {offsets = [0, 5], sizes = [4, 1], strides = [1, 1]} : vector<4x16xf32> to vector<4x1xf32>
    %189 = vector.extract_strided_slice %4 {offsets = [5, 0], sizes = [1, 16], strides = [1, 1]} : vector<16x16xf32> to vector<1x16xf32>
    %190 = vector.broadcast %188 : vector<4x1xf32> to vector<4x16xf32>
    %191 = vector.broadcast %189 : vector<1x16xf32> to vector<4x16xf32>
    %192 = arith.mulf %190, %191 : vector<4x16xf32>
    %193 = arith.addf %187, %192 : vector<4x16xf32>
    %194 = vector.extract_strided_slice %156 {offsets = [0, 6], sizes = [4, 1], strides = [1, 1]} : vector<4x16xf32> to vector<4x1xf32>
    %195 = vector.extract_strided_slice %4 {offsets = [6, 0], sizes = [1, 16], strides = [1, 1]} : vector<16x16xf32> to vector<1x16xf32>
    %196 = vector.broadcast %194 : vector<4x1xf32> to vector<4x16xf32>
    %197 = vector.broadcast %195 : vector<1x16xf32> to vector<4x16xf32>
    %198 = arith.mulf %196, %197 : vector<4x16xf32>
    %199 = arith.addf %193, %198 : vector<4x16xf32>
    %200 = vector.extract_strided_slice %156 {offsets = [0, 7], sizes = [4, 1], strides = [1, 1]} : vector<4x16xf32> to vector<4x1xf32>
    %201 = vector.extract_strided_slice %4 {offsets = [7, 0], sizes = [1, 16], strides = [1, 1]} : vector<16x16xf32> to vector<1x16xf32>
    %202 = vector.broadcast %200 : vector<4x1xf32> to vector<4x16xf32>
    %203 = vector.broadcast %201 : vector<1x16xf32> to vector<4x16xf32>
    %204 = arith.mulf %202, %203 : vector<4x16xf32>
    %205 = arith.addf %199, %204 : vector<4x16xf32>
    %206 = vector.extract_strided_slice %156 {offsets = [0, 8], sizes = [4, 1], strides = [1, 1]} : vector<4x16xf32> to vector<4x1xf32>
    %207 = vector.extract_strided_slice %4 {offsets = [8, 0], sizes = [1, 16], strides = [1, 1]} : vector<16x16xf32> to vector<1x16xf32>
    %208 = vector.broadcast %206 : vector<4x1xf32> to vector<4x16xf32>
    %209 = vector.broadcast %207 : vector<1x16xf32> to vector<4x16xf32>
    %210 = arith.mulf %208, %209 : vector<4x16xf32>
    %211 = arith.addf %205, %210 : vector<4x16xf32>
    %212 = vector.extract_strided_slice %156 {offsets = [0, 9], sizes = [4, 1], strides = [1, 1]} : vector<4x16xf32> to vector<4x1xf32>
    %213 = vector.extract_strided_slice %4 {offsets = [9, 0], sizes = [1, 16], strides = [1, 1]} : vector<16x16xf32> to vector<1x16xf32>
    %214 = vector.broadcast %212 : vector<4x1xf32> to vector<4x16xf32>
    %215 = vector.broadcast %213 : vector<1x16xf32> to vector<4x16xf32>
    %216 = arith.mulf %214, %215 : vector<4x16xf32>
    %217 = arith.addf %211, %216 : vector<4x16xf32>
    %218 = vector.extract_strided_slice %156 {offsets = [0, 10], sizes = [4, 1], strides = [1, 1]} : vector<4x16xf32> to vector<4x1xf32>
    %219 = vector.extract_strided_slice %4 {offsets = [10, 0], sizes = [1, 16], strides = [1, 1]} : vector<16x16xf32> to vector<1x16xf32>
    %220 = vector.broadcast %218 : vector<4x1xf32> to vector<4x16xf32>
    %221 = vector.broadcast %219 : vector<1x16xf32> to vector<4x16xf32>
    %222 = arith.mulf %220, %221 : vector<4x16xf32>
    %223 = arith.addf %217, %222 : vector<4x16xf32>
    %224 = vector.extract_strided_slice %156 {offsets = [0, 11], sizes = [4, 1], strides = [1, 1]} : vector<4x16xf32> to vector<4x1xf32>
    %225 = vector.extract_strided_slice %4 {offsets = [11, 0], sizes = [1, 16], strides = [1, 1]} : vector<16x16xf32> to vector<1x16xf32>
    %226 = vector.broadcast %224 : vector<4x1xf32> to vector<4x16xf32>
    %227 = vector.broadcast %225 : vector<1x16xf32> to vector<4x16xf32>
    %228 = arith.mulf %226, %227 : vector<4x16xf32>
    %229 = arith.addf %223, %228 : vector<4x16xf32>
    %230 = vector.extract_strided_slice %156 {offsets = [0, 12], sizes = [4, 1], strides = [1, 1]} : vector<4x16xf32> to vector<4x1xf32>
    %231 = vector.extract_strided_slice %4 {offsets = [12, 0], sizes = [1, 16], strides = [1, 1]} : vector<16x16xf32> to vector<1x16xf32>
    %232 = vector.broadcast %230 : vector<4x1xf32> to vector<4x16xf32>
    %233 = vector.broadcast %231 : vector<1x16xf32> to vector<4x16xf32>
    %234 = arith.mulf %232, %233 : vector<4x16xf32>
    %235 = arith.addf %229, %234 : vector<4x16xf32>
    %236 = vector.extract_strided_slice %156 {offsets = [0, 13], sizes = [4, 1], strides = [1, 1]} : vector<4x16xf32> to vector<4x1xf32>
    %237 = vector.extract_strided_slice %4 {offsets = [13, 0], sizes = [1, 16], strides = [1, 1]} : vector<16x16xf32> to vector<1x16xf32>
    %238 = vector.broadcast %236 : vector<4x1xf32> to vector<4x16xf32>
    %239 = vector.broadcast %237 : vector<1x16xf32> to vector<4x16xf32>
    %240 = arith.mulf %238, %239 : vector<4x16xf32>
    %241 = arith.addf %235, %240 : vector<4x16xf32>
    %242 = vector.extract_strided_slice %156 {offsets = [0, 14], sizes = [4, 1], strides = [1, 1]} : vector<4x16xf32> to vector<4x1xf32>
    %243 = vector.extract_strided_slice %4 {offsets = [14, 0], sizes = [1, 16], strides = [1, 1]} : vector<16x16xf32> to vector<1x16xf32>
    %244 = vector.broadcast %242 : vector<4x1xf32> to vector<4x16xf32>
    %245 = vector.broadcast %243 : vector<1x16xf32> to vector<4x16xf32>
    %246 = arith.mulf %244, %245 : vector<4x16xf32>
    %247 = arith.addf %241, %246 : vector<4x16xf32>
    %248 = vector.extract_strided_slice %156 {offsets = [0, 15], sizes = [4, 1], strides = [1, 1]} : vector<4x16xf32> to vector<4x1xf32>
    %249 = vector.extract_strided_slice %4 {offsets = [15, 0], sizes = [1, 16], strides = [1, 1]} : vector<16x16xf32> to vector<1x16xf32>
    %250 = vector.broadcast %248 : vector<4x1xf32> to vector<4x16xf32>
    %251 = vector.broadcast %249 : vector<1x16xf32> to vector<4x16xf32>
    %252 = arith.mulf %250, %251 : vector<4x16xf32>
    %253 = arith.addf %247, %252 : vector<4x16xf32>
    %cst_25 = arith.constant dense<0xFF800000> : vector<4xf32>
    %254 = vector.multi_reduction <maximumf>, %253, %cst_25 [1] : vector<4x16xf32> to vector<4xf32>
    %255 = vector.shape_cast %254 : vector<4xf32> to vector<4x1xf32>
    %256 = vector.broadcast %255 : vector<4x1xf32> to vector<4x16xf32>
    %257 = arith.subf %253, %256 : vector<4x16xf32>
    %258 = math.exp %257 : vector<4x16xf32>
    %cst_26 = arith.constant dense<0.000000e+00> : vector<4xf32>
    %259 = vector.multi_reduction <add>, %258, %cst_26 [1] : vector<4x16xf32> to vector<4xf32>
    %260 = vector.shape_cast %259 : vector<4xf32> to vector<4x1xf32>
    %261 = math.log %260 : vector<4x1xf32>
    %262 = vector.broadcast %261 : vector<4x1xf32> to vector<4x16xf32>
    %263 = arith.subf %257, %262 : vector<4x16xf32>
    %c2_27 = arith.constant 2 : index
    %c0_28 = arith.constant 0 : index
    %c0_29 = arith.constant 0 : index
    %264 = vector.load %arg1[%c2_27, %c0_28, %c0_29] : memref<8x32x32xf32, #tpu.memory_space<vmem>>, vector<1x32x32xf32>
    %265 = vector.shape_cast %264 : vector<1x32x32xf32> to vector<32x32xf32>
    %c2_30 = arith.constant 2 : index
    %c0_31 = arith.constant 0 : index
    %c0_32 = arith.constant 0 : index
    %266 = vector.load %arg2[%c2_30, %c0_31, %c0_32] : memref<8x40x32xf32, #tpu.memory_space<vmem>>, vector<1x40x32xf32>
    %267 = vector.shape_cast %266 : vector<1x40x32xf32> to vector<40x32xf32>
    %268 = vector.extract_strided_slice %267 {offsets = [0, 0], sizes = [4, 32], strides = [1, 1]} : vector<40x32xf32> to vector<4x32xf32>
    %269 = vector.extract_strided_slice %267 {offsets = [8, 1], sizes = [32, 1], strides = [1, 1]} : vector<40x32xf32> to vector<32x1xf32>
    %270 = vector.extract_strided_slice %267 {offsets = [8, 2], sizes = [32, 1], strides = [1, 1]} : vector<40x32xf32> to vector<32x1xf32>
    %271 = vector.broadcast %269 : vector<32x1xf32> to vector<32x16xf32>
    %272 = vector.broadcast %1 : vector<1x16xf32> to vector<32x16xf32>
    %273 = arith.mulf %271, %272 : vector<32x16xf32>
    %274 = vector.broadcast %0 : vector<1x16xf32> to vector<32x16xf32>
    %275 = arith.addf %274, %273 : vector<32x16xf32>
    %276 = vector.broadcast %270 : vector<32x1xf32> to vector<32x16xf32>
    %277 = vector.broadcast %2 : vector<1x16xf32> to vector<32x16xf32>
    %278 = arith.mulf %276, %277 : vector<32x16xf32>
    %279 = arith.addf %275, %278 : vector<32x16xf32>
    %cst_33 = arith.constant dense<0.000000e+00> : vector<32x16xf32>
    %280 = tpu.matmul %265, %279, %cst_33 {dimension_numbers = #tpu.dot_dimension_numbers<[1], [0], [0], [1], [0, 0, 1, 1], [], []>} : vector<32x32xf32>, vector<32x16xf32>, vector<32x16xf32> -> vector<32x16xf32>
    %281 = vector.broadcast %3 : vector<1x16xf32> to vector<32x16xf32>
    %282 = arith.addf %280, %281 : vector<32x16xf32>
    %cst_34 = arith.constant 0.000000e+00 : f32
    %283 = vector.broadcast %cst_34 : f32 to vector<32x16xf32>
    %284 = arith.maximumf %282, %283 : vector<32x16xf32>
    %cst_35 = arith.constant dense<0.000000e+00> : vector<4x16xf32>
    %285 = tpu.matmul %268, %284, %cst_35 {dimension_numbers = #tpu.dot_dimension_numbers<[1], [0], [0], [1], [0, 0, 1, 1], [], []>} : vector<4x32xf32>, vector<32x16xf32>, vector<4x16xf32> -> vector<4x16xf32>
    %286 = vector.extract_strided_slice %285 {offsets = [0, 0], sizes = [4, 1], strides = [1, 1]} : vector<4x16xf32> to vector<4x1xf32>
    %287 = vector.extract_strided_slice %4 {offsets = [0, 0], sizes = [1, 16], strides = [1, 1]} : vector<16x16xf32> to vector<1x16xf32>
    %288 = vector.broadcast %286 : vector<4x1xf32> to vector<4x16xf32>
    %289 = vector.broadcast %287 : vector<1x16xf32> to vector<4x16xf32>
    %290 = arith.mulf %288, %289 : vector<4x16xf32>
    %291 = vector.broadcast %5 : vector<1x16xf32> to vector<4x16xf32>
    %292 = arith.addf %291, %290 : vector<4x16xf32>
    %293 = vector.extract_strided_slice %285 {offsets = [0, 1], sizes = [4, 1], strides = [1, 1]} : vector<4x16xf32> to vector<4x1xf32>
    %294 = vector.extract_strided_slice %4 {offsets = [1, 0], sizes = [1, 16], strides = [1, 1]} : vector<16x16xf32> to vector<1x16xf32>
    %295 = vector.broadcast %293 : vector<4x1xf32> to vector<4x16xf32>
    %296 = vector.broadcast %294 : vector<1x16xf32> to vector<4x16xf32>
    %297 = arith.mulf %295, %296 : vector<4x16xf32>
    %298 = arith.addf %292, %297 : vector<4x16xf32>
    %299 = vector.extract_strided_slice %285 {offsets = [0, 2], sizes = [4, 1], strides = [1, 1]} : vector<4x16xf32> to vector<4x1xf32>
    %300 = vector.extract_strided_slice %4 {offsets = [2, 0], sizes = [1, 16], strides = [1, 1]} : vector<16x16xf32> to vector<1x16xf32>
    %301 = vector.broadcast %299 : vector<4x1xf32> to vector<4x16xf32>
    %302 = vector.broadcast %300 : vector<1x16xf32> to vector<4x16xf32>
    %303 = arith.mulf %301, %302 : vector<4x16xf32>
    %304 = arith.addf %298, %303 : vector<4x16xf32>
    %305 = vector.extract_strided_slice %285 {offsets = [0, 3], sizes = [4, 1], strides = [1, 1]} : vector<4x16xf32> to vector<4x1xf32>
    %306 = vector.extract_strided_slice %4 {offsets = [3, 0], sizes = [1, 16], strides = [1, 1]} : vector<16x16xf32> to vector<1x16xf32>
    %307 = vector.broadcast %305 : vector<4x1xf32> to vector<4x16xf32>
    %308 = vector.broadcast %306 : vector<1x16xf32> to vector<4x16xf32>
    %309 = arith.mulf %307, %308 : vector<4x16xf32>
    %310 = arith.addf %304, %309 : vector<4x16xf32>
    %311 = vector.extract_strided_slice %285 {offsets = [0, 4], sizes = [4, 1], strides = [1, 1]} : vector<4x16xf32> to vector<4x1xf32>
    %312 = vector.extract_strided_slice %4 {offsets = [4, 0], sizes = [1, 16], strides = [1, 1]} : vector<16x16xf32> to vector<1x16xf32>
    %313 = vector.broadcast %311 : vector<4x1xf32> to vector<4x16xf32>
    %314 = vector.broadcast %312 : vector<1x16xf32> to vector<4x16xf32>
    %315 = arith.mulf %313, %314 : vector<4x16xf32>
    %316 = arith.addf %310, %315 : vector<4x16xf32>
    %317 = vector.extract_strided_slice %285 {offsets = [0, 5], sizes = [4, 1], strides = [1, 1]} : vector<4x16xf32> to vector<4x1xf32>
    %318 = vector.extract_strided_slice %4 {offsets = [5, 0], sizes = [1, 16], strides = [1, 1]} : vector<16x16xf32> to vector<1x16xf32>
    %319 = vector.broadcast %317 : vector<4x1xf32> to vector<4x16xf32>
    %320 = vector.broadcast %318 : vector<1x16xf32> to vector<4x16xf32>
    %321 = arith.mulf %319, %320 : vector<4x16xf32>
    %322 = arith.addf %316, %321 : vector<4x16xf32>
    %323 = vector.extract_strided_slice %285 {offsets = [0, 6], sizes = [4, 1], strides = [1, 1]} : vector<4x16xf32> to vector<4x1xf32>
    %324 = vector.extract_strided_slice %4 {offsets = [6, 0], sizes = [1, 16], strides = [1, 1]} : vector<16x16xf32> to vector<1x16xf32>
    %325 = vector.broadcast %323 : vector<4x1xf32> to vector<4x16xf32>
    %326 = vector.broadcast %324 : vector<1x16xf32> to vector<4x16xf32>
    %327 = arith.mulf %325, %326 : vector<4x16xf32>
    %328 = arith.addf %322, %327 : vector<4x16xf32>
    %329 = vector.extract_strided_slice %285 {offsets = [0, 7], sizes = [4, 1], strides = [1, 1]} : vector<4x16xf32> to vector<4x1xf32>
    %330 = vector.extract_strided_slice %4 {offsets = [7, 0], sizes = [1, 16], strides = [1, 1]} : vector<16x16xf32> to vector<1x16xf32>
    %331 = vector.broadcast %329 : vector<4x1xf32> to vector<4x16xf32>
    %332 = vector.broadcast %330 : vector<1x16xf32> to vector<4x16xf32>
    %333 = arith.mulf %331, %332 : vector<4x16xf32>
    %334 = arith.addf %328, %333 : vector<4x16xf32>
    %335 = vector.extract_strided_slice %285 {offsets = [0, 8], sizes = [4, 1], strides = [1, 1]} : vector<4x16xf32> to vector<4x1xf32>
    %336 = vector.extract_strided_slice %4 {offsets = [8, 0], sizes = [1, 16], strides = [1, 1]} : vector<16x16xf32> to vector<1x16xf32>
    %337 = vector.broadcast %335 : vector<4x1xf32> to vector<4x16xf32>
    %338 = vector.broadcast %336 : vector<1x16xf32> to vector<4x16xf32>
    %339 = arith.mulf %337, %338 : vector<4x16xf32>
    %340 = arith.addf %334, %339 : vector<4x16xf32>
    %341 = vector.extract_strided_slice %285 {offsets = [0, 9], sizes = [4, 1], strides = [1, 1]} : vector<4x16xf32> to vector<4x1xf32>
    %342 = vector.extract_strided_slice %4 {offsets = [9, 0], sizes = [1, 16], strides = [1, 1]} : vector<16x16xf32> to vector<1x16xf32>
    %343 = vector.broadcast %341 : vector<4x1xf32> to vector<4x16xf32>
    %344 = vector.broadcast %342 : vector<1x16xf32> to vector<4x16xf32>
    %345 = arith.mulf %343, %344 : vector<4x16xf32>
    %346 = arith.addf %340, %345 : vector<4x16xf32>
    %347 = vector.extract_strided_slice %285 {offsets = [0, 10], sizes = [4, 1], strides = [1, 1]} : vector<4x16xf32> to vector<4x1xf32>
    %348 = vector.extract_strided_slice %4 {offsets = [10, 0], sizes = [1, 16], strides = [1, 1]} : vector<16x16xf32> to vector<1x16xf32>
    %349 = vector.broadcast %347 : vector<4x1xf32> to vector<4x16xf32>
    %350 = vector.broadcast %348 : vector<1x16xf32> to vector<4x16xf32>
    %351 = arith.mulf %349, %350 : vector<4x16xf32>
    %352 = arith.addf %346, %351 : vector<4x16xf32>
    %353 = vector.extract_strided_slice %285 {offsets = [0, 11], sizes = [4, 1], strides = [1, 1]} : vector<4x16xf32> to vector<4x1xf32>
    %354 = vector.extract_strided_slice %4 {offsets = [11, 0], sizes = [1, 16], strides = [1, 1]} : vector<16x16xf32> to vector<1x16xf32>
    %355 = vector.broadcast %353 : vector<4x1xf32> to vector<4x16xf32>
    %356 = vector.broadcast %354 : vector<1x16xf32> to vector<4x16xf32>
    %357 = arith.mulf %355, %356 : vector<4x16xf32>
    %358 = arith.addf %352, %357 : vector<4x16xf32>
    %359 = vector.extract_strided_slice %285 {offsets = [0, 12], sizes = [4, 1], strides = [1, 1]} : vector<4x16xf32> to vector<4x1xf32>
    %360 = vector.extract_strided_slice %4 {offsets = [12, 0], sizes = [1, 16], strides = [1, 1]} : vector<16x16xf32> to vector<1x16xf32>
    %361 = vector.broadcast %359 : vector<4x1xf32> to vector<4x16xf32>
    %362 = vector.broadcast %360 : vector<1x16xf32> to vector<4x16xf32>
    %363 = arith.mulf %361, %362 : vector<4x16xf32>
    %364 = arith.addf %358, %363 : vector<4x16xf32>
    %365 = vector.extract_strided_slice %285 {offsets = [0, 13], sizes = [4, 1], strides = [1, 1]} : vector<4x16xf32> to vector<4x1xf32>
    %366 = vector.extract_strided_slice %4 {offsets = [13, 0], sizes = [1, 16], strides = [1, 1]} : vector<16x16xf32> to vector<1x16xf32>
    %367 = vector.broadcast %365 : vector<4x1xf32> to vector<4x16xf32>
    %368 = vector.broadcast %366 : vector<1x16xf32> to vector<4x16xf32>
    %369 = arith.mulf %367, %368 : vector<4x16xf32>
    %370 = arith.addf %364, %369 : vector<4x16xf32>
    %371 = vector.extract_strided_slice %285 {offsets = [0, 14], sizes = [4, 1], strides = [1, 1]} : vector<4x16xf32> to vector<4x1xf32>
    %372 = vector.extract_strided_slice %4 {offsets = [14, 0], sizes = [1, 16], strides = [1, 1]} : vector<16x16xf32> to vector<1x16xf32>
    %373 = vector.broadcast %371 : vector<4x1xf32> to vector<4x16xf32>
    %374 = vector.broadcast %372 : vector<1x16xf32> to vector<4x16xf32>
    %375 = arith.mulf %373, %374 : vector<4x16xf32>
    %376 = arith.addf %370, %375 : vector<4x16xf32>
    %377 = vector.extract_strided_slice %285 {offsets = [0, 15], sizes = [4, 1], strides = [1, 1]} : vector<4x16xf32> to vector<4x1xf32>
    %378 = vector.extract_strided_slice %4 {offsets = [15, 0], sizes = [1, 16], strides = [1, 1]} : vector<16x16xf32> to vector<1x16xf32>
    %379 = vector.broadcast %377 : vector<4x1xf32> to vector<4x16xf32>
    %380 = vector.broadcast %378 : vector<1x16xf32> to vector<4x16xf32>
    %381 = arith.mulf %379, %380 : vector<4x16xf32>
    %382 = arith.addf %376, %381 : vector<4x16xf32>
    %cst_36 = arith.constant dense<0xFF800000> : vector<4xf32>
    %383 = vector.multi_reduction <maximumf>, %382, %cst_36 [1] : vector<4x16xf32> to vector<4xf32>
    %384 = vector.shape_cast %383 : vector<4xf32> to vector<4x1xf32>
    %385 = vector.broadcast %384 : vector<4x1xf32> to vector<4x16xf32>
    %386 = arith.subf %382, %385 : vector<4x16xf32>
    %387 = math.exp %386 : vector<4x16xf32>
    %cst_37 = arith.constant dense<0.000000e+00> : vector<4xf32>
    %388 = vector.multi_reduction <add>, %387, %cst_37 [1] : vector<4x16xf32> to vector<4xf32>
    %389 = vector.shape_cast %388 : vector<4xf32> to vector<4x1xf32>
    %390 = math.log %389 : vector<4x1xf32>
    %391 = vector.broadcast %390 : vector<4x1xf32> to vector<4x16xf32>
    %392 = arith.subf %386, %391 : vector<4x16xf32>
    %c3 = arith.constant 3 : index
    %c0_38 = arith.constant 0 : index
    %c0_39 = arith.constant 0 : index
    %393 = vector.load %arg1[%c3, %c0_38, %c0_39] : memref<8x32x32xf32, #tpu.memory_space<vmem>>, vector<1x32x32xf32>
    %394 = vector.shape_cast %393 : vector<1x32x32xf32> to vector<32x32xf32>
    %c3_40 = arith.constant 3 : index
    %c0_41 = arith.constant 0 : index
    %c0_42 = arith.constant 0 : index
    %395 = vector.load %arg2[%c3_40, %c0_41, %c0_42] : memref<8x40x32xf32, #tpu.memory_space<vmem>>, vector<1x40x32xf32>
    %396 = vector.shape_cast %395 : vector<1x40x32xf32> to vector<40x32xf32>
    %397 = vector.extract_strided_slice %396 {offsets = [0, 0], sizes = [4, 32], strides = [1, 1]} : vector<40x32xf32> to vector<4x32xf32>
    %398 = vector.extract_strided_slice %396 {offsets = [8, 1], sizes = [32, 1], strides = [1, 1]} : vector<40x32xf32> to vector<32x1xf32>
    %399 = vector.extract_strided_slice %396 {offsets = [8, 2], sizes = [32, 1], strides = [1, 1]} : vector<40x32xf32> to vector<32x1xf32>
    %400 = vector.broadcast %398 : vector<32x1xf32> to vector<32x16xf32>
    %401 = vector.broadcast %1 : vector<1x16xf32> to vector<32x16xf32>
    %402 = arith.mulf %400, %401 : vector<32x16xf32>
    %403 = vector.broadcast %0 : vector<1x16xf32> to vector<32x16xf32>
    %404 = arith.addf %403, %402 : vector<32x16xf32>
    %405 = vector.broadcast %399 : vector<32x1xf32> to vector<32x16xf32>
    %406 = vector.broadcast %2 : vector<1x16xf32> to vector<32x16xf32>
    %407 = arith.mulf %405, %406 : vector<32x16xf32>
    %408 = arith.addf %404, %407 : vector<32x16xf32>
    %cst_43 = arith.constant dense<0.000000e+00> : vector<32x16xf32>
    %409 = tpu.matmul %394, %408, %cst_43 {dimension_numbers = #tpu.dot_dimension_numbers<[1], [0], [0], [1], [0, 0, 1, 1], [], []>} : vector<32x32xf32>, vector<32x16xf32>, vector<32x16xf32> -> vector<32x16xf32>
    %410 = vector.broadcast %3 : vector<1x16xf32> to vector<32x16xf32>
    %411 = arith.addf %409, %410 : vector<32x16xf32>
    %cst_44 = arith.constant 0.000000e+00 : f32
    %412 = vector.broadcast %cst_44 : f32 to vector<32x16xf32>
    %413 = arith.maximumf %411, %412 : vector<32x16xf32>
    %cst_45 = arith.constant dense<0.000000e+00> : vector<4x16xf32>
    %414 = tpu.matmul %397, %413, %cst_45 {dimension_numbers = #tpu.dot_dimension_numbers<[1], [0], [0], [1], [0, 0, 1, 1], [], []>} : vector<4x32xf32>, vector<32x16xf32>, vector<4x16xf32> -> vector<4x16xf32>
    %415 = vector.extract_strided_slice %414 {offsets = [0, 0], sizes = [4, 1], strides = [1, 1]} : vector<4x16xf32> to vector<4x1xf32>
    %416 = vector.extract_strided_slice %4 {offsets = [0, 0], sizes = [1, 16], strides = [1, 1]} : vector<16x16xf32> to vector<1x16xf32>
    %417 = vector.broadcast %415 : vector<4x1xf32> to vector<4x16xf32>
    %418 = vector.broadcast %416 : vector<1x16xf32> to vector<4x16xf32>
    %419 = arith.mulf %417, %418 : vector<4x16xf32>
    %420 = vector.broadcast %5 : vector<1x16xf32> to vector<4x16xf32>
    %421 = arith.addf %420, %419 : vector<4x16xf32>
    %422 = vector.extract_strided_slice %414 {offsets = [0, 1], sizes = [4, 1], strides = [1, 1]} : vector<4x16xf32> to vector<4x1xf32>
    %423 = vector.extract_strided_slice %4 {offsets = [1, 0], sizes = [1, 16], strides = [1, 1]} : vector<16x16xf32> to vector<1x16xf32>
    %424 = vector.broadcast %422 : vector<4x1xf32> to vector<4x16xf32>
    %425 = vector.broadcast %423 : vector<1x16xf32> to vector<4x16xf32>
    %426 = arith.mulf %424, %425 : vector<4x16xf32>
    %427 = arith.addf %421, %426 : vector<4x16xf32>
    %428 = vector.extract_strided_slice %414 {offsets = [0, 2], sizes = [4, 1], strides = [1, 1]} : vector<4x16xf32> to vector<4x1xf32>
    %429 = vector.extract_strided_slice %4 {offsets = [2, 0], sizes = [1, 16], strides = [1, 1]} : vector<16x16xf32> to vector<1x16xf32>
    %430 = vector.broadcast %428 : vector<4x1xf32> to vector<4x16xf32>
    %431 = vector.broadcast %429 : vector<1x16xf32> to vector<4x16xf32>
    %432 = arith.mulf %430, %431 : vector<4x16xf32>
    %433 = arith.addf %427, %432 : vector<4x16xf32>
    %434 = vector.extract_strided_slice %414 {offsets = [0, 3], sizes = [4, 1], strides = [1, 1]} : vector<4x16xf32> to vector<4x1xf32>
    %435 = vector.extract_strided_slice %4 {offsets = [3, 0], sizes = [1, 16], strides = [1, 1]} : vector<16x16xf32> to vector<1x16xf32>
    %436 = vector.broadcast %434 : vector<4x1xf32> to vector<4x16xf32>
    %437 = vector.broadcast %435 : vector<1x16xf32> to vector<4x16xf32>
    %438 = arith.mulf %436, %437 : vector<4x16xf32>
    %439 = arith.addf %433, %438 : vector<4x16xf32>
    %440 = vector.extract_strided_slice %414 {offsets = [0, 4], sizes = [4, 1], strides = [1, 1]} : vector<4x16xf32> to vector<4x1xf32>
    %441 = vector.extract_strided_slice %4 {offsets = [4, 0], sizes = [1, 16], strides = [1, 1]} : vector<16x16xf32> to vector<1x16xf32>
    %442 = vector.broadcast %440 : vector<4x1xf32> to vector<4x16xf32>
    %443 = vector.broadcast %441 : vector<1x16xf32> to vector<4x16xf32>
    %444 = arith.mulf %442, %443 : vector<4x16xf32>
    %445 = arith.addf %439, %444 : vector<4x16xf32>
    %446 = vector.extract_strided_slice %414 {offsets = [0, 5], sizes = [4, 1], strides = [1, 1]} : vector<4x16xf32> to vector<4x1xf32>
    %447 = vector.extract_strided_slice %4 {offsets = [5, 0], sizes = [1, 16], strides = [1, 1]} : vector<16x16xf32> to vector<1x16xf32>
    %448 = vector.broadcast %446 : vector<4x1xf32> to vector<4x16xf32>
    %449 = vector.broadcast %447 : vector<1x16xf32> to vector<4x16xf32>
    %450 = arith.mulf %448, %449 : vector<4x16xf32>
    %451 = arith.addf %445, %450 : vector<4x16xf32>
    %452 = vector.extract_strided_slice %414 {offsets = [0, 6], sizes = [4, 1], strides = [1, 1]} : vector<4x16xf32> to vector<4x1xf32>
    %453 = vector.extract_strided_slice %4 {offsets = [6, 0], sizes = [1, 16], strides = [1, 1]} : vector<16x16xf32> to vector<1x16xf32>
    %454 = vector.broadcast %452 : vector<4x1xf32> to vector<4x16xf32>
    %455 = vector.broadcast %453 : vector<1x16xf32> to vector<4x16xf32>
    %456 = arith.mulf %454, %455 : vector<4x16xf32>
    %457 = arith.addf %451, %456 : vector<4x16xf32>
    %458 = vector.extract_strided_slice %414 {offsets = [0, 7], sizes = [4, 1], strides = [1, 1]} : vector<4x16xf32> to vector<4x1xf32>
    %459 = vector.extract_strided_slice %4 {offsets = [7, 0], sizes = [1, 16], strides = [1, 1]} : vector<16x16xf32> to vector<1x16xf32>
    %460 = vector.broadcast %458 : vector<4x1xf32> to vector<4x16xf32>
    %461 = vector.broadcast %459 : vector<1x16xf32> to vector<4x16xf32>
    %462 = arith.mulf %460, %461 : vector<4x16xf32>
    %463 = arith.addf %457, %462 : vector<4x16xf32>
    %464 = vector.extract_strided_slice %414 {offsets = [0, 8], sizes = [4, 1], strides = [1, 1]} : vector<4x16xf32> to vector<4x1xf32>
    %465 = vector.extract_strided_slice %4 {offsets = [8, 0], sizes = [1, 16], strides = [1, 1]} : vector<16x16xf32> to vector<1x16xf32>
    %466 = vector.broadcast %464 : vector<4x1xf32> to vector<4x16xf32>
    %467 = vector.broadcast %465 : vector<1x16xf32> to vector<4x16xf32>
    %468 = arith.mulf %466, %467 : vector<4x16xf32>
    %469 = arith.addf %463, %468 : vector<4x16xf32>
    %470 = vector.extract_strided_slice %414 {offsets = [0, 9], sizes = [4, 1], strides = [1, 1]} : vector<4x16xf32> to vector<4x1xf32>
    %471 = vector.extract_strided_slice %4 {offsets = [9, 0], sizes = [1, 16], strides = [1, 1]} : vector<16x16xf32> to vector<1x16xf32>
    %472 = vector.broadcast %470 : vector<4x1xf32> to vector<4x16xf32>
    %473 = vector.broadcast %471 : vector<1x16xf32> to vector<4x16xf32>
    %474 = arith.mulf %472, %473 : vector<4x16xf32>
    %475 = arith.addf %469, %474 : vector<4x16xf32>
    %476 = vector.extract_strided_slice %414 {offsets = [0, 10], sizes = [4, 1], strides = [1, 1]} : vector<4x16xf32> to vector<4x1xf32>
    %477 = vector.extract_strided_slice %4 {offsets = [10, 0], sizes = [1, 16], strides = [1, 1]} : vector<16x16xf32> to vector<1x16xf32>
    %478 = vector.broadcast %476 : vector<4x1xf32> to vector<4x16xf32>
    %479 = vector.broadcast %477 : vector<1x16xf32> to vector<4x16xf32>
    %480 = arith.mulf %478, %479 : vector<4x16xf32>
    %481 = arith.addf %475, %480 : vector<4x16xf32>
    %482 = vector.extract_strided_slice %414 {offsets = [0, 11], sizes = [4, 1], strides = [1, 1]} : vector<4x16xf32> to vector<4x1xf32>
    %483 = vector.extract_strided_slice %4 {offsets = [11, 0], sizes = [1, 16], strides = [1, 1]} : vector<16x16xf32> to vector<1x16xf32>
    %484 = vector.broadcast %482 : vector<4x1xf32> to vector<4x16xf32>
    %485 = vector.broadcast %483 : vector<1x16xf32> to vector<4x16xf32>
    %486 = arith.mulf %484, %485 : vector<4x16xf32>
    %487 = arith.addf %481, %486 : vector<4x16xf32>
    %488 = vector.extract_strided_slice %414 {offsets = [0, 12], sizes = [4, 1], strides = [1, 1]} : vector<4x16xf32> to vector<4x1xf32>
    %489 = vector.extract_strided_slice %4 {offsets = [12, 0], sizes = [1, 16], strides = [1, 1]} : vector<16x16xf32> to vector<1x16xf32>
    %490 = vector.broadcast %488 : vector<4x1xf32> to vector<4x16xf32>
    %491 = vector.broadcast %489 : vector<1x16xf32> to vector<4x16xf32>
    %492 = arith.mulf %490, %491 : vector<4x16xf32>
    %493 = arith.addf %487, %492 : vector<4x16xf32>
    %494 = vector.extract_strided_slice %414 {offsets = [0, 13], sizes = [4, 1], strides = [1, 1]} : vector<4x16xf32> to vector<4x1xf32>
    %495 = vector.extract_strided_slice %4 {offsets = [13, 0], sizes = [1, 16], strides = [1, 1]} : vector<16x16xf32> to vector<1x16xf32>
    %496 = vector.broadcast %494 : vector<4x1xf32> to vector<4x16xf32>
    %497 = vector.broadcast %495 : vector<1x16xf32> to vector<4x16xf32>
    %498 = arith.mulf %496, %497 : vector<4x16xf32>
    %499 = arith.addf %493, %498 : vector<4x16xf32>
    %500 = vector.extract_strided_slice %414 {offsets = [0, 14], sizes = [4, 1], strides = [1, 1]} : vector<4x16xf32> to vector<4x1xf32>
    %501 = vector.extract_strided_slice %4 {offsets = [14, 0], sizes = [1, 16], strides = [1, 1]} : vector<16x16xf32> to vector<1x16xf32>
    %502 = vector.broadcast %500 : vector<4x1xf32> to vector<4x16xf32>
    %503 = vector.broadcast %501 : vector<1x16xf32> to vector<4x16xf32>
    %504 = arith.mulf %502, %503 : vector<4x16xf32>
    %505 = arith.addf %499, %504 : vector<4x16xf32>
    %506 = vector.extract_strided_slice %414 {offsets = [0, 15], sizes = [4, 1], strides = [1, 1]} : vector<4x16xf32> to vector<4x1xf32>
    %507 = vector.extract_strided_slice %4 {offsets = [15, 0], sizes = [1, 16], strides = [1, 1]} : vector<16x16xf32> to vector<1x16xf32>
    %508 = vector.broadcast %506 : vector<4x1xf32> to vector<4x16xf32>
    %509 = vector.broadcast %507 : vector<1x16xf32> to vector<4x16xf32>
    %510 = arith.mulf %508, %509 : vector<4x16xf32>
    %511 = arith.addf %505, %510 : vector<4x16xf32>
    %cst_46 = arith.constant dense<0xFF800000> : vector<4xf32>
    %512 = vector.multi_reduction <maximumf>, %511, %cst_46 [1] : vector<4x16xf32> to vector<4xf32>
    %513 = vector.shape_cast %512 : vector<4xf32> to vector<4x1xf32>
    %514 = vector.broadcast %513 : vector<4x1xf32> to vector<4x16xf32>
    %515 = arith.subf %511, %514 : vector<4x16xf32>
    %516 = math.exp %515 : vector<4x16xf32>
    %cst_47 = arith.constant dense<0.000000e+00> : vector<4xf32>
    %517 = vector.multi_reduction <add>, %516, %cst_47 [1] : vector<4x16xf32> to vector<4xf32>
    %518 = vector.shape_cast %517 : vector<4xf32> to vector<4x1xf32>
    %519 = math.log %518 : vector<4x1xf32>
    %520 = vector.broadcast %519 : vector<4x1xf32> to vector<4x16xf32>
    %521 = arith.subf %515, %520 : vector<4x16xf32>
    %c4 = arith.constant 4 : index
    %c0_48 = arith.constant 0 : index
    %c0_49 = arith.constant 0 : index
    %522 = vector.load %arg1[%c4, %c0_48, %c0_49] : memref<8x32x32xf32, #tpu.memory_space<vmem>>, vector<1x32x32xf32>
    %523 = vector.shape_cast %522 : vector<1x32x32xf32> to vector<32x32xf32>
    %c4_50 = arith.constant 4 : index
    %c0_51 = arith.constant 0 : index
    %c0_52 = arith.constant 0 : index
    %524 = vector.load %arg2[%c4_50, %c0_51, %c0_52] : memref<8x40x32xf32, #tpu.memory_space<vmem>>, vector<1x40x32xf32>
    %525 = vector.shape_cast %524 : vector<1x40x32xf32> to vector<40x32xf32>
    %526 = vector.extract_strided_slice %525 {offsets = [0, 0], sizes = [4, 32], strides = [1, 1]} : vector<40x32xf32> to vector<4x32xf32>
    %527 = vector.extract_strided_slice %525 {offsets = [8, 1], sizes = [32, 1], strides = [1, 1]} : vector<40x32xf32> to vector<32x1xf32>
    %528 = vector.extract_strided_slice %525 {offsets = [8, 2], sizes = [32, 1], strides = [1, 1]} : vector<40x32xf32> to vector<32x1xf32>
    %529 = vector.broadcast %527 : vector<32x1xf32> to vector<32x16xf32>
    %530 = vector.broadcast %1 : vector<1x16xf32> to vector<32x16xf32>
    %531 = arith.mulf %529, %530 : vector<32x16xf32>
    %532 = vector.broadcast %0 : vector<1x16xf32> to vector<32x16xf32>
    %533 = arith.addf %532, %531 : vector<32x16xf32>
    %534 = vector.broadcast %528 : vector<32x1xf32> to vector<32x16xf32>
    %535 = vector.broadcast %2 : vector<1x16xf32> to vector<32x16xf32>
    %536 = arith.mulf %534, %535 : vector<32x16xf32>
    %537 = arith.addf %533, %536 : vector<32x16xf32>
    %cst_53 = arith.constant dense<0.000000e+00> : vector<32x16xf32>
    %538 = tpu.matmul %523, %537, %cst_53 {dimension_numbers = #tpu.dot_dimension_numbers<[1], [0], [0], [1], [0, 0, 1, 1], [], []>} : vector<32x32xf32>, vector<32x16xf32>, vector<32x16xf32> -> vector<32x16xf32>
    %539 = vector.broadcast %3 : vector<1x16xf32> to vector<32x16xf32>
    %540 = arith.addf %538, %539 : vector<32x16xf32>
    %cst_54 = arith.constant 0.000000e+00 : f32
    %541 = vector.broadcast %cst_54 : f32 to vector<32x16xf32>
    %542 = arith.maximumf %540, %541 : vector<32x16xf32>
    %cst_55 = arith.constant dense<0.000000e+00> : vector<4x16xf32>
    %543 = tpu.matmul %526, %542, %cst_55 {dimension_numbers = #tpu.dot_dimension_numbers<[1], [0], [0], [1], [0, 0, 1, 1], [], []>} : vector<4x32xf32>, vector<32x16xf32>, vector<4x16xf32> -> vector<4x16xf32>
    %544 = vector.extract_strided_slice %543 {offsets = [0, 0], sizes = [4, 1], strides = [1, 1]} : vector<4x16xf32> to vector<4x1xf32>
    %545 = vector.extract_strided_slice %4 {offsets = [0, 0], sizes = [1, 16], strides = [1, 1]} : vector<16x16xf32> to vector<1x16xf32>
    %546 = vector.broadcast %544 : vector<4x1xf32> to vector<4x16xf32>
    %547 = vector.broadcast %545 : vector<1x16xf32> to vector<4x16xf32>
    %548 = arith.mulf %546, %547 : vector<4x16xf32>
    %549 = vector.broadcast %5 : vector<1x16xf32> to vector<4x16xf32>
    %550 = arith.addf %549, %548 : vector<4x16xf32>
    %551 = vector.extract_strided_slice %543 {offsets = [0, 1], sizes = [4, 1], strides = [1, 1]} : vector<4x16xf32> to vector<4x1xf32>
    %552 = vector.extract_strided_slice %4 {offsets = [1, 0], sizes = [1, 16], strides = [1, 1]} : vector<16x16xf32> to vector<1x16xf32>
    %553 = vector.broadcast %551 : vector<4x1xf32> to vector<4x16xf32>
    %554 = vector.broadcast %552 : vector<1x16xf32> to vector<4x16xf32>
    %555 = arith.mulf %553, %554 : vector<4x16xf32>
    %556 = arith.addf %550, %555 : vector<4x16xf32>
    %557 = vector.extract_strided_slice %543 {offsets = [0, 2], sizes = [4, 1], strides = [1, 1]} : vector<4x16xf32> to vector<4x1xf32>
    %558 = vector.extract_strided_slice %4 {offsets = [2, 0], sizes = [1, 16], strides = [1, 1]} : vector<16x16xf32> to vector<1x16xf32>
    %559 = vector.broadcast %557 : vector<4x1xf32> to vector<4x16xf32>
    %560 = vector.broadcast %558 : vector<1x16xf32> to vector<4x16xf32>
    %561 = arith.mulf %559, %560 : vector<4x16xf32>
    %562 = arith.addf %556, %561 : vector<4x16xf32>
    %563 = vector.extract_strided_slice %543 {offsets = [0, 3], sizes = [4, 1], strides = [1, 1]} : vector<4x16xf32> to vector<4x1xf32>
    %564 = vector.extract_strided_slice %4 {offsets = [3, 0], sizes = [1, 16], strides = [1, 1]} : vector<16x16xf32> to vector<1x16xf32>
    %565 = vector.broadcast %563 : vector<4x1xf32> to vector<4x16xf32>
    %566 = vector.broadcast %564 : vector<1x16xf32> to vector<4x16xf32>
    %567 = arith.mulf %565, %566 : vector<4x16xf32>
    %568 = arith.addf %562, %567 : vector<4x16xf32>
    %569 = vector.extract_strided_slice %543 {offsets = [0, 4], sizes = [4, 1], strides = [1, 1]} : vector<4x16xf32> to vector<4x1xf32>
    %570 = vector.extract_strided_slice %4 {offsets = [4, 0], sizes = [1, 16], strides = [1, 1]} : vector<16x16xf32> to vector<1x16xf32>
    %571 = vector.broadcast %569 : vector<4x1xf32> to vector<4x16xf32>
    %572 = vector.broadcast %570 : vector<1x16xf32> to vector<4x16xf32>
    %573 = arith.mulf %571, %572 : vector<4x16xf32>
    %574 = arith.addf %568, %573 : vector<4x16xf32>
    %575 = vector.extract_strided_slice %543 {offsets = [0, 5], sizes = [4, 1], strides = [1, 1]} : vector<4x16xf32> to vector<4x1xf32>
    %576 = vector.extract_strided_slice %4 {offsets = [5, 0], sizes = [1, 16], strides = [1, 1]} : vector<16x16xf32> to vector<1x16xf32>
    %577 = vector.broadcast %575 : vector<4x1xf32> to vector<4x16xf32>
    %578 = vector.broadcast %576 : vector<1x16xf32> to vector<4x16xf32>
    %579 = arith.mulf %577, %578 : vector<4x16xf32>
    %580 = arith.addf %574, %579 : vector<4x16xf32>
    %581 = vector.extract_strided_slice %543 {offsets = [0, 6], sizes = [4, 1], strides = [1, 1]} : vector<4x16xf32> to vector<4x1xf32>
    %582 = vector.extract_strided_slice %4 {offsets = [6, 0], sizes = [1, 16], strides = [1, 1]} : vector<16x16xf32> to vector<1x16xf32>
    %583 = vector.broadcast %581 : vector<4x1xf32> to vector<4x16xf32>
    %584 = vector.broadcast %582 : vector<1x16xf32> to vector<4x16xf32>
    %585 = arith.mulf %583, %584 : vector<4x16xf32>
    %586 = arith.addf %580, %585 : vector<4x16xf32>
    %587 = vector.extract_strided_slice %543 {offsets = [0, 7], sizes = [4, 1], strides = [1, 1]} : vector<4x16xf32> to vector<4x1xf32>
    %588 = vector.extract_strided_slice %4 {offsets = [7, 0], sizes = [1, 16], strides = [1, 1]} : vector<16x16xf32> to vector<1x16xf32>
    %589 = vector.broadcast %587 : vector<4x1xf32> to vector<4x16xf32>
    %590 = vector.broadcast %588 : vector<1x16xf32> to vector<4x16xf32>
    %591 = arith.mulf %589, %590 : vector<4x16xf32>
    %592 = arith.addf %586, %591 : vector<4x16xf32>
    %593 = vector.extract_strided_slice %543 {offsets = [0, 8], sizes = [4, 1], strides = [1, 1]} : vector<4x16xf32> to vector<4x1xf32>
    %594 = vector.extract_strided_slice %4 {offsets = [8, 0], sizes = [1, 16], strides = [1, 1]} : vector<16x16xf32> to vector<1x16xf32>
    %595 = vector.broadcast %593 : vector<4x1xf32> to vector<4x16xf32>
    %596 = vector.broadcast %594 : vector<1x16xf32> to vector<4x16xf32>
    %597 = arith.mulf %595, %596 : vector<4x16xf32>
    %598 = arith.addf %592, %597 : vector<4x16xf32>
    %599 = vector.extract_strided_slice %543 {offsets = [0, 9], sizes = [4, 1], strides = [1, 1]} : vector<4x16xf32> to vector<4x1xf32>
    %600 = vector.extract_strided_slice %4 {offsets = [9, 0], sizes = [1, 16], strides = [1, 1]} : vector<16x16xf32> to vector<1x16xf32>
    %601 = vector.broadcast %599 : vector<4x1xf32> to vector<4x16xf32>
    %602 = vector.broadcast %600 : vector<1x16xf32> to vector<4x16xf32>
    %603 = arith.mulf %601, %602 : vector<4x16xf32>
    %604 = arith.addf %598, %603 : vector<4x16xf32>
    %605 = vector.extract_strided_slice %543 {offsets = [0, 10], sizes = [4, 1], strides = [1, 1]} : vector<4x16xf32> to vector<4x1xf32>
    %606 = vector.extract_strided_slice %4 {offsets = [10, 0], sizes = [1, 16], strides = [1, 1]} : vector<16x16xf32> to vector<1x16xf32>
    %607 = vector.broadcast %605 : vector<4x1xf32> to vector<4x16xf32>
    %608 = vector.broadcast %606 : vector<1x16xf32> to vector<4x16xf32>
    %609 = arith.mulf %607, %608 : vector<4x16xf32>
    %610 = arith.addf %604, %609 : vector<4x16xf32>
    %611 = vector.extract_strided_slice %543 {offsets = [0, 11], sizes = [4, 1], strides = [1, 1]} : vector<4x16xf32> to vector<4x1xf32>
    %612 = vector.extract_strided_slice %4 {offsets = [11, 0], sizes = [1, 16], strides = [1, 1]} : vector<16x16xf32> to vector<1x16xf32>
    %613 = vector.broadcast %611 : vector<4x1xf32> to vector<4x16xf32>
    %614 = vector.broadcast %612 : vector<1x16xf32> to vector<4x16xf32>
    %615 = arith.mulf %613, %614 : vector<4x16xf32>
    %616 = arith.addf %610, %615 : vector<4x16xf32>
    %617 = vector.extract_strided_slice %543 {offsets = [0, 12], sizes = [4, 1], strides = [1, 1]} : vector<4x16xf32> to vector<4x1xf32>
    %618 = vector.extract_strided_slice %4 {offsets = [12, 0], sizes = [1, 16], strides = [1, 1]} : vector<16x16xf32> to vector<1x16xf32>
    %619 = vector.broadcast %617 : vector<4x1xf32> to vector<4x16xf32>
    %620 = vector.broadcast %618 : vector<1x16xf32> to vector<4x16xf32>
    %621 = arith.mulf %619, %620 : vector<4x16xf32>
    %622 = arith.addf %616, %621 : vector<4x16xf32>
    %623 = vector.extract_strided_slice %543 {offsets = [0, 13], sizes = [4, 1], strides = [1, 1]} : vector<4x16xf32> to vector<4x1xf32>
    %624 = vector.extract_strided_slice %4 {offsets = [13, 0], sizes = [1, 16], strides = [1, 1]} : vector<16x16xf32> to vector<1x16xf32>
    %625 = vector.broadcast %623 : vector<4x1xf32> to vector<4x16xf32>
    %626 = vector.broadcast %624 : vector<1x16xf32> to vector<4x16xf32>
    %627 = arith.mulf %625, %626 : vector<4x16xf32>
    %628 = arith.addf %622, %627 : vector<4x16xf32>
    %629 = vector.extract_strided_slice %543 {offsets = [0, 14], sizes = [4, 1], strides = [1, 1]} : vector<4x16xf32> to vector<4x1xf32>
    %630 = vector.extract_strided_slice %4 {offsets = [14, 0], sizes = [1, 16], strides = [1, 1]} : vector<16x16xf32> to vector<1x16xf32>
    %631 = vector.broadcast %629 : vector<4x1xf32> to vector<4x16xf32>
    %632 = vector.broadcast %630 : vector<1x16xf32> to vector<4x16xf32>
    %633 = arith.mulf %631, %632 : vector<4x16xf32>
    %634 = arith.addf %628, %633 : vector<4x16xf32>
    %635 = vector.extract_strided_slice %543 {offsets = [0, 15], sizes = [4, 1], strides = [1, 1]} : vector<4x16xf32> to vector<4x1xf32>
    %636 = vector.extract_strided_slice %4 {offsets = [15, 0], sizes = [1, 16], strides = [1, 1]} : vector<16x16xf32> to vector<1x16xf32>
    %637 = vector.broadcast %635 : vector<4x1xf32> to vector<4x16xf32>
    %638 = vector.broadcast %636 : vector<1x16xf32> to vector<4x16xf32>
    %639 = arith.mulf %637, %638 : vector<4x16xf32>
    %640 = arith.addf %634, %639 : vector<4x16xf32>
    %cst_56 = arith.constant dense<0xFF800000> : vector<4xf32>
    %641 = vector.multi_reduction <maximumf>, %640, %cst_56 [1] : vector<4x16xf32> to vector<4xf32>
    %642 = vector.shape_cast %641 : vector<4xf32> to vector<4x1xf32>
    %643 = vector.broadcast %642 : vector<4x1xf32> to vector<4x16xf32>
    %644 = arith.subf %640, %643 : vector<4x16xf32>
    %645 = math.exp %644 : vector<4x16xf32>
    %cst_57 = arith.constant dense<0.000000e+00> : vector<4xf32>
    %646 = vector.multi_reduction <add>, %645, %cst_57 [1] : vector<4x16xf32> to vector<4xf32>
    %647 = vector.shape_cast %646 : vector<4xf32> to vector<4x1xf32>
    %648 = math.log %647 : vector<4x1xf32>
    %649 = vector.broadcast %648 : vector<4x1xf32> to vector<4x16xf32>
    %650 = arith.subf %644, %649 : vector<4x16xf32>
    %c5 = arith.constant 5 : index
    %c0_58 = arith.constant 0 : index
    %c0_59 = arith.constant 0 : index
    %651 = vector.load %arg1[%c5, %c0_58, %c0_59] : memref<8x32x32xf32, #tpu.memory_space<vmem>>, vector<1x32x32xf32>
    %652 = vector.shape_cast %651 : vector<1x32x32xf32> to vector<32x32xf32>
    %c5_60 = arith.constant 5 : index
    %c0_61 = arith.constant 0 : index
    %c0_62 = arith.constant 0 : index
    %653 = vector.load %arg2[%c5_60, %c0_61, %c0_62] : memref<8x40x32xf32, #tpu.memory_space<vmem>>, vector<1x40x32xf32>
    %654 = vector.shape_cast %653 : vector<1x40x32xf32> to vector<40x32xf32>
    %655 = vector.extract_strided_slice %654 {offsets = [0, 0], sizes = [4, 32], strides = [1, 1]} : vector<40x32xf32> to vector<4x32xf32>
    %656 = vector.extract_strided_slice %654 {offsets = [8, 1], sizes = [32, 1], strides = [1, 1]} : vector<40x32xf32> to vector<32x1xf32>
    %657 = vector.extract_strided_slice %654 {offsets = [8, 2], sizes = [32, 1], strides = [1, 1]} : vector<40x32xf32> to vector<32x1xf32>
    %658 = vector.broadcast %656 : vector<32x1xf32> to vector<32x16xf32>
    %659 = vector.broadcast %1 : vector<1x16xf32> to vector<32x16xf32>
    %660 = arith.mulf %658, %659 : vector<32x16xf32>
    %661 = vector.broadcast %0 : vector<1x16xf32> to vector<32x16xf32>
    %662 = arith.addf %661, %660 : vector<32x16xf32>
    %663 = vector.broadcast %657 : vector<32x1xf32> to vector<32x16xf32>
    %664 = vector.broadcast %2 : vector<1x16xf32> to vector<32x16xf32>
    %665 = arith.mulf %663, %664 : vector<32x16xf32>
    %666 = arith.addf %662, %665 : vector<32x16xf32>
    %cst_63 = arith.constant dense<0.000000e+00> : vector<32x16xf32>
    %667 = tpu.matmul %652, %666, %cst_63 {dimension_numbers = #tpu.dot_dimension_numbers<[1], [0], [0], [1], [0, 0, 1, 1], [], []>} : vector<32x32xf32>, vector<32x16xf32>, vector<32x16xf32> -> vector<32x16xf32>
    %668 = vector.broadcast %3 : vector<1x16xf32> to vector<32x16xf32>
    %669 = arith.addf %667, %668 : vector<32x16xf32>
    %cst_64 = arith.constant 0.000000e+00 : f32
    %670 = vector.broadcast %cst_64 : f32 to vector<32x16xf32>
    %671 = arith.maximumf %669, %670 : vector<32x16xf32>
    %cst_65 = arith.constant dense<0.000000e+00> : vector<4x16xf32>
    %672 = tpu.matmul %655, %671, %cst_65 {dimension_numbers = #tpu.dot_dimension_numbers<[1], [0], [0], [1], [0, 0, 1, 1], [], []>} : vector<4x32xf32>, vector<32x16xf32>, vector<4x16xf32> -> vector<4x16xf32>
    %673 = vector.extract_strided_slice %672 {offsets = [0, 0], sizes = [4, 1], strides = [1, 1]} : vector<4x16xf32> to vector<4x1xf32>
    %674 = vector.extract_strided_slice %4 {offsets = [0, 0], sizes = [1, 16], strides = [1, 1]} : vector<16x16xf32> to vector<1x16xf32>
    %675 = vector.broadcast %673 : vector<4x1xf32> to vector<4x16xf32>
    %676 = vector.broadcast %674 : vector<1x16xf32> to vector<4x16xf32>
    %677 = arith.mulf %675, %676 : vector<4x16xf32>
    %678 = vector.broadcast %5 : vector<1x16xf32> to vector<4x16xf32>
    %679 = arith.addf %678, %677 : vector<4x16xf32>
    %680 = vector.extract_strided_slice %672 {offsets = [0, 1], sizes = [4, 1], strides = [1, 1]} : vector<4x16xf32> to vector<4x1xf32>
    %681 = vector.extract_strided_slice %4 {offsets = [1, 0], sizes = [1, 16], strides = [1, 1]} : vector<16x16xf32> to vector<1x16xf32>
    %682 = vector.broadcast %680 : vector<4x1xf32> to vector<4x16xf32>
    %683 = vector.broadcast %681 : vector<1x16xf32> to vector<4x16xf32>
    %684 = arith.mulf %682, %683 : vector<4x16xf32>
    %685 = arith.addf %679, %684 : vector<4x16xf32>
    %686 = vector.extract_strided_slice %672 {offsets = [0, 2], sizes = [4, 1], strides = [1, 1]} : vector<4x16xf32> to vector<4x1xf32>
    %687 = vector.extract_strided_slice %4 {offsets = [2, 0], sizes = [1, 16], strides = [1, 1]} : vector<16x16xf32> to vector<1x16xf32>
    %688 = vector.broadcast %686 : vector<4x1xf32> to vector<4x16xf32>
    %689 = vector.broadcast %687 : vector<1x16xf32> to vector<4x16xf32>
    %690 = arith.mulf %688, %689 : vector<4x16xf32>
    %691 = arith.addf %685, %690 : vector<4x16xf32>
    %692 = vector.extract_strided_slice %672 {offsets = [0, 3], sizes = [4, 1], strides = [1, 1]} : vector<4x16xf32> to vector<4x1xf32>
    %693 = vector.extract_strided_slice %4 {offsets = [3, 0], sizes = [1, 16], strides = [1, 1]} : vector<16x16xf32> to vector<1x16xf32>
    %694 = vector.broadcast %692 : vector<4x1xf32> to vector<4x16xf32>
    %695 = vector.broadcast %693 : vector<1x16xf32> to vector<4x16xf32>
    %696 = arith.mulf %694, %695 : vector<4x16xf32>
    %697 = arith.addf %691, %696 : vector<4x16xf32>
    %698 = vector.extract_strided_slice %672 {offsets = [0, 4], sizes = [4, 1], strides = [1, 1]} : vector<4x16xf32> to vector<4x1xf32>
    %699 = vector.extract_strided_slice %4 {offsets = [4, 0], sizes = [1, 16], strides = [1, 1]} : vector<16x16xf32> to vector<1x16xf32>
    %700 = vector.broadcast %698 : vector<4x1xf32> to vector<4x16xf32>
    %701 = vector.broadcast %699 : vector<1x16xf32> to vector<4x16xf32>
    %702 = arith.mulf %700, %701 : vector<4x16xf32>
    %703 = arith.addf %697, %702 : vector<4x16xf32>
    %704 = vector.extract_strided_slice %672 {offsets = [0, 5], sizes = [4, 1], strides = [1, 1]} : vector<4x16xf32> to vector<4x1xf32>
    %705 = vector.extract_strided_slice %4 {offsets = [5, 0], sizes = [1, 16], strides = [1, 1]} : vector<16x16xf32> to vector<1x16xf32>
    %706 = vector.broadcast %704 : vector<4x1xf32> to vector<4x16xf32>
    %707 = vector.broadcast %705 : vector<1x16xf32> to vector<4x16xf32>
    %708 = arith.mulf %706, %707 : vector<4x16xf32>
    %709 = arith.addf %703, %708 : vector<4x16xf32>
    %710 = vector.extract_strided_slice %672 {offsets = [0, 6], sizes = [4, 1], strides = [1, 1]} : vector<4x16xf32> to vector<4x1xf32>
    %711 = vector.extract_strided_slice %4 {offsets = [6, 0], sizes = [1, 16], strides = [1, 1]} : vector<16x16xf32> to vector<1x16xf32>
    %712 = vector.broadcast %710 : vector<4x1xf32> to vector<4x16xf32>
    %713 = vector.broadcast %711 : vector<1x16xf32> to vector<4x16xf32>
    %714 = arith.mulf %712, %713 : vector<4x16xf32>
    %715 = arith.addf %709, %714 : vector<4x16xf32>
    %716 = vector.extract_strided_slice %672 {offsets = [0, 7], sizes = [4, 1], strides = [1, 1]} : vector<4x16xf32> to vector<4x1xf32>
    %717 = vector.extract_strided_slice %4 {offsets = [7, 0], sizes = [1, 16], strides = [1, 1]} : vector<16x16xf32> to vector<1x16xf32>
    %718 = vector.broadcast %716 : vector<4x1xf32> to vector<4x16xf32>
    %719 = vector.broadcast %717 : vector<1x16xf32> to vector<4x16xf32>
    %720 = arith.mulf %718, %719 : vector<4x16xf32>
    %721 = arith.addf %715, %720 : vector<4x16xf32>
    %722 = vector.extract_strided_slice %672 {offsets = [0, 8], sizes = [4, 1], strides = [1, 1]} : vector<4x16xf32> to vector<4x1xf32>
    %723 = vector.extract_strided_slice %4 {offsets = [8, 0], sizes = [1, 16], strides = [1, 1]} : vector<16x16xf32> to vector<1x16xf32>
    %724 = vector.broadcast %722 : vector<4x1xf32> to vector<4x16xf32>
    %725 = vector.broadcast %723 : vector<1x16xf32> to vector<4x16xf32>
    %726 = arith.mulf %724, %725 : vector<4x16xf32>
    %727 = arith.addf %721, %726 : vector<4x16xf32>
    %728 = vector.extract_strided_slice %672 {offsets = [0, 9], sizes = [4, 1], strides = [1, 1]} : vector<4x16xf32> to vector<4x1xf32>
    %729 = vector.extract_strided_slice %4 {offsets = [9, 0], sizes = [1, 16], strides = [1, 1]} : vector<16x16xf32> to vector<1x16xf32>
    %730 = vector.broadcast %728 : vector<4x1xf32> to vector<4x16xf32>
    %731 = vector.broadcast %729 : vector<1x16xf32> to vector<4x16xf32>
    %732 = arith.mulf %730, %731 : vector<4x16xf32>
    %733 = arith.addf %727, %732 : vector<4x16xf32>
    %734 = vector.extract_strided_slice %672 {offsets = [0, 10], sizes = [4, 1], strides = [1, 1]} : vector<4x16xf32> to vector<4x1xf32>
    %735 = vector.extract_strided_slice %4 {offsets = [10, 0], sizes = [1, 16], strides = [1, 1]} : vector<16x16xf32> to vector<1x16xf32>
    %736 = vector.broadcast %734 : vector<4x1xf32> to vector<4x16xf32>
    %737 = vector.broadcast %735 : vector<1x16xf32> to vector<4x16xf32>
    %738 = arith.mulf %736, %737 : vector<4x16xf32>
    %739 = arith.addf %733, %738 : vector<4x16xf32>
    %740 = vector.extract_strided_slice %672 {offsets = [0, 11], sizes = [4, 1], strides = [1, 1]} : vector<4x16xf32> to vector<4x1xf32>
    %741 = vector.extract_strided_slice %4 {offsets = [11, 0], sizes = [1, 16], strides = [1, 1]} : vector<16x16xf32> to vector<1x16xf32>
    %742 = vector.broadcast %740 : vector<4x1xf32> to vector<4x16xf32>
    %743 = vector.broadcast %741 : vector<1x16xf32> to vector<4x16xf32>
    %744 = arith.mulf %742, %743 : vector<4x16xf32>
    %745 = arith.addf %739, %744 : vector<4x16xf32>
    %746 = vector.extract_strided_slice %672 {offsets = [0, 12], sizes = [4, 1], strides = [1, 1]} : vector<4x16xf32> to vector<4x1xf32>
    %747 = vector.extract_strided_slice %4 {offsets = [12, 0], sizes = [1, 16], strides = [1, 1]} : vector<16x16xf32> to vector<1x16xf32>
    %748 = vector.broadcast %746 : vector<4x1xf32> to vector<4x16xf32>
    %749 = vector.broadcast %747 : vector<1x16xf32> to vector<4x16xf32>
    %750 = arith.mulf %748, %749 : vector<4x16xf32>
    %751 = arith.addf %745, %750 : vector<4x16xf32>
    %752 = vector.extract_strided_slice %672 {offsets = [0, 13], sizes = [4, 1], strides = [1, 1]} : vector<4x16xf32> to vector<4x1xf32>
    %753 = vector.extract_strided_slice %4 {offsets = [13, 0], sizes = [1, 16], strides = [1, 1]} : vector<16x16xf32> to vector<1x16xf32>
    %754 = vector.broadcast %752 : vector<4x1xf32> to vector<4x16xf32>
    %755 = vector.broadcast %753 : vector<1x16xf32> to vector<4x16xf32>
    %756 = arith.mulf %754, %755 : vector<4x16xf32>
    %757 = arith.addf %751, %756 : vector<4x16xf32>
    %758 = vector.extract_strided_slice %672 {offsets = [0, 14], sizes = [4, 1], strides = [1, 1]} : vector<4x16xf32> to vector<4x1xf32>
    %759 = vector.extract_strided_slice %4 {offsets = [14, 0], sizes = [1, 16], strides = [1, 1]} : vector<16x16xf32> to vector<1x16xf32>
    %760 = vector.broadcast %758 : vector<4x1xf32> to vector<4x16xf32>
    %761 = vector.broadcast %759 : vector<1x16xf32> to vector<4x16xf32>
    %762 = arith.mulf %760, %761 : vector<4x16xf32>
    %763 = arith.addf %757, %762 : vector<4x16xf32>
    %764 = vector.extract_strided_slice %672 {offsets = [0, 15], sizes = [4, 1], strides = [1, 1]} : vector<4x16xf32> to vector<4x1xf32>
    %765 = vector.extract_strided_slice %4 {offsets = [15, 0], sizes = [1, 16], strides = [1, 1]} : vector<16x16xf32> to vector<1x16xf32>
    %766 = vector.broadcast %764 : vector<4x1xf32> to vector<4x16xf32>
    %767 = vector.broadcast %765 : vector<1x16xf32> to vector<4x16xf32>
    %768 = arith.mulf %766, %767 : vector<4x16xf32>
    %769 = arith.addf %763, %768 : vector<4x16xf32>
    %cst_66 = arith.constant dense<0xFF800000> : vector<4xf32>
    %770 = vector.multi_reduction <maximumf>, %769, %cst_66 [1] : vector<4x16xf32> to vector<4xf32>
    %771 = vector.shape_cast %770 : vector<4xf32> to vector<4x1xf32>
    %772 = vector.broadcast %771 : vector<4x1xf32> to vector<4x16xf32>
    %773 = arith.subf %769, %772 : vector<4x16xf32>
    %774 = math.exp %773 : vector<4x16xf32>
    %cst_67 = arith.constant dense<0.000000e+00> : vector<4xf32>
    %775 = vector.multi_reduction <add>, %774, %cst_67 [1] : vector<4x16xf32> to vector<4xf32>
    %776 = vector.shape_cast %775 : vector<4xf32> to vector<4x1xf32>
    %777 = math.log %776 : vector<4x1xf32>
    %778 = vector.broadcast %777 : vector<4x1xf32> to vector<4x16xf32>
    %779 = arith.subf %773, %778 : vector<4x16xf32>
    %c6 = arith.constant 6 : index
    %c0_68 = arith.constant 0 : index
    %c0_69 = arith.constant 0 : index
    %780 = vector.load %arg1[%c6, %c0_68, %c0_69] : memref<8x32x32xf32, #tpu.memory_space<vmem>>, vector<1x32x32xf32>
    %781 = vector.shape_cast %780 : vector<1x32x32xf32> to vector<32x32xf32>
    %c6_70 = arith.constant 6 : index
    %c0_71 = arith.constant 0 : index
    %c0_72 = arith.constant 0 : index
    %782 = vector.load %arg2[%c6_70, %c0_71, %c0_72] : memref<8x40x32xf32, #tpu.memory_space<vmem>>, vector<1x40x32xf32>
    %783 = vector.shape_cast %782 : vector<1x40x32xf32> to vector<40x32xf32>
    %784 = vector.extract_strided_slice %783 {offsets = [0, 0], sizes = [4, 32], strides = [1, 1]} : vector<40x32xf32> to vector<4x32xf32>
    %785 = vector.extract_strided_slice %783 {offsets = [8, 1], sizes = [32, 1], strides = [1, 1]} : vector<40x32xf32> to vector<32x1xf32>
    %786 = vector.extract_strided_slice %783 {offsets = [8, 2], sizes = [32, 1], strides = [1, 1]} : vector<40x32xf32> to vector<32x1xf32>
    %787 = vector.broadcast %785 : vector<32x1xf32> to vector<32x16xf32>
    %788 = vector.broadcast %1 : vector<1x16xf32> to vector<32x16xf32>
    %789 = arith.mulf %787, %788 : vector<32x16xf32>
    %790 = vector.broadcast %0 : vector<1x16xf32> to vector<32x16xf32>
    %791 = arith.addf %790, %789 : vector<32x16xf32>
    %792 = vector.broadcast %786 : vector<32x1xf32> to vector<32x16xf32>
    %793 = vector.broadcast %2 : vector<1x16xf32> to vector<32x16xf32>
    %794 = arith.mulf %792, %793 : vector<32x16xf32>
    %795 = arith.addf %791, %794 : vector<32x16xf32>
    %cst_73 = arith.constant dense<0.000000e+00> : vector<32x16xf32>
    %796 = tpu.matmul %781, %795, %cst_73 {dimension_numbers = #tpu.dot_dimension_numbers<[1], [0], [0], [1], [0, 0, 1, 1], [], []>} : vector<32x32xf32>, vector<32x16xf32>, vector<32x16xf32> -> vector<32x16xf32>
    %797 = vector.broadcast %3 : vector<1x16xf32> to vector<32x16xf32>
    %798 = arith.addf %796, %797 : vector<32x16xf32>
    %cst_74 = arith.constant 0.000000e+00 : f32
    %799 = vector.broadcast %cst_74 : f32 to vector<32x16xf32>
    %800 = arith.maximumf %798, %799 : vector<32x16xf32>
    %cst_75 = arith.constant dense<0.000000e+00> : vector<4x16xf32>
    %801 = tpu.matmul %784, %800, %cst_75 {dimension_numbers = #tpu.dot_dimension_numbers<[1], [0], [0], [1], [0, 0, 1, 1], [], []>} : vector<4x32xf32>, vector<32x16xf32>, vector<4x16xf32> -> vector<4x16xf32>
    %802 = vector.extract_strided_slice %801 {offsets = [0, 0], sizes = [4, 1], strides = [1, 1]} : vector<4x16xf32> to vector<4x1xf32>
    %803 = vector.extract_strided_slice %4 {offsets = [0, 0], sizes = [1, 16], strides = [1, 1]} : vector<16x16xf32> to vector<1x16xf32>
    %804 = vector.broadcast %802 : vector<4x1xf32> to vector<4x16xf32>
    %805 = vector.broadcast %803 : vector<1x16xf32> to vector<4x16xf32>
    %806 = arith.mulf %804, %805 : vector<4x16xf32>
    %807 = vector.broadcast %5 : vector<1x16xf32> to vector<4x16xf32>
    %808 = arith.addf %807, %806 : vector<4x16xf32>
    %809 = vector.extract_strided_slice %801 {offsets = [0, 1], sizes = [4, 1], strides = [1, 1]} : vector<4x16xf32> to vector<4x1xf32>
    %810 = vector.extract_strided_slice %4 {offsets = [1, 0], sizes = [1, 16], strides = [1, 1]} : vector<16x16xf32> to vector<1x16xf32>
    %811 = vector.broadcast %809 : vector<4x1xf32> to vector<4x16xf32>
    %812 = vector.broadcast %810 : vector<1x16xf32> to vector<4x16xf32>
    %813 = arith.mulf %811, %812 : vector<4x16xf32>
    %814 = arith.addf %808, %813 : vector<4x16xf32>
    %815 = vector.extract_strided_slice %801 {offsets = [0, 2], sizes = [4, 1], strides = [1, 1]} : vector<4x16xf32> to vector<4x1xf32>
    %816 = vector.extract_strided_slice %4 {offsets = [2, 0], sizes = [1, 16], strides = [1, 1]} : vector<16x16xf32> to vector<1x16xf32>
    %817 = vector.broadcast %815 : vector<4x1xf32> to vector<4x16xf32>
    %818 = vector.broadcast %816 : vector<1x16xf32> to vector<4x16xf32>
    %819 = arith.mulf %817, %818 : vector<4x16xf32>
    %820 = arith.addf %814, %819 : vector<4x16xf32>
    %821 = vector.extract_strided_slice %801 {offsets = [0, 3], sizes = [4, 1], strides = [1, 1]} : vector<4x16xf32> to vector<4x1xf32>
    %822 = vector.extract_strided_slice %4 {offsets = [3, 0], sizes = [1, 16], strides = [1, 1]} : vector<16x16xf32> to vector<1x16xf32>
    %823 = vector.broadcast %821 : vector<4x1xf32> to vector<4x16xf32>
    %824 = vector.broadcast %822 : vector<1x16xf32> to vector<4x16xf32>
    %825 = arith.mulf %823, %824 : vector<4x16xf32>
    %826 = arith.addf %820, %825 : vector<4x16xf32>
    %827 = vector.extract_strided_slice %801 {offsets = [0, 4], sizes = [4, 1], strides = [1, 1]} : vector<4x16xf32> to vector<4x1xf32>
    %828 = vector.extract_strided_slice %4 {offsets = [4, 0], sizes = [1, 16], strides = [1, 1]} : vector<16x16xf32> to vector<1x16xf32>
    %829 = vector.broadcast %827 : vector<4x1xf32> to vector<4x16xf32>
    %830 = vector.broadcast %828 : vector<1x16xf32> to vector<4x16xf32>
    %831 = arith.mulf %829, %830 : vector<4x16xf32>
    %832 = arith.addf %826, %831 : vector<4x16xf32>
    %833 = vector.extract_strided_slice %801 {offsets = [0, 5], sizes = [4, 1], strides = [1, 1]} : vector<4x16xf32> to vector<4x1xf32>
    %834 = vector.extract_strided_slice %4 {offsets = [5, 0], sizes = [1, 16], strides = [1, 1]} : vector<16x16xf32> to vector<1x16xf32>
    %835 = vector.broadcast %833 : vector<4x1xf32> to vector<4x16xf32>
    %836 = vector.broadcast %834 : vector<1x16xf32> to vector<4x16xf32>
    %837 = arith.mulf %835, %836 : vector<4x16xf32>
    %838 = arith.addf %832, %837 : vector<4x16xf32>
    %839 = vector.extract_strided_slice %801 {offsets = [0, 6], sizes = [4, 1], strides = [1, 1]} : vector<4x16xf32> to vector<4x1xf32>
    %840 = vector.extract_strided_slice %4 {offsets = [6, 0], sizes = [1, 16], strides = [1, 1]} : vector<16x16xf32> to vector<1x16xf32>
    %841 = vector.broadcast %839 : vector<4x1xf32> to vector<4x16xf32>
    %842 = vector.broadcast %840 : vector<1x16xf32> to vector<4x16xf32>
    %843 = arith.mulf %841, %842 : vector<4x16xf32>
    %844 = arith.addf %838, %843 : vector<4x16xf32>
    %845 = vector.extract_strided_slice %801 {offsets = [0, 7], sizes = [4, 1], strides = [1, 1]} : vector<4x16xf32> to vector<4x1xf32>
    %846 = vector.extract_strided_slice %4 {offsets = [7, 0], sizes = [1, 16], strides = [1, 1]} : vector<16x16xf32> to vector<1x16xf32>
    %847 = vector.broadcast %845 : vector<4x1xf32> to vector<4x16xf32>
    %848 = vector.broadcast %846 : vector<1x16xf32> to vector<4x16xf32>
    %849 = arith.mulf %847, %848 : vector<4x16xf32>
    %850 = arith.addf %844, %849 : vector<4x16xf32>
    %851 = vector.extract_strided_slice %801 {offsets = [0, 8], sizes = [4, 1], strides = [1, 1]} : vector<4x16xf32> to vector<4x1xf32>
    %852 = vector.extract_strided_slice %4 {offsets = [8, 0], sizes = [1, 16], strides = [1, 1]} : vector<16x16xf32> to vector<1x16xf32>
    %853 = vector.broadcast %851 : vector<4x1xf32> to vector<4x16xf32>
    %854 = vector.broadcast %852 : vector<1x16xf32> to vector<4x16xf32>
    %855 = arith.mulf %853, %854 : vector<4x16xf32>
    %856 = arith.addf %850, %855 : vector<4x16xf32>
    %857 = vector.extract_strided_slice %801 {offsets = [0, 9], sizes = [4, 1], strides = [1, 1]} : vector<4x16xf32> to vector<4x1xf32>
    %858 = vector.extract_strided_slice %4 {offsets = [9, 0], sizes = [1, 16], strides = [1, 1]} : vector<16x16xf32> to vector<1x16xf32>
    %859 = vector.broadcast %857 : vector<4x1xf32> to vector<4x16xf32>
    %860 = vector.broadcast %858 : vector<1x16xf32> to vector<4x16xf32>
    %861 = arith.mulf %859, %860 : vector<4x16xf32>
    %862 = arith.addf %856, %861 : vector<4x16xf32>
    %863 = vector.extract_strided_slice %801 {offsets = [0, 10], sizes = [4, 1], strides = [1, 1]} : vector<4x16xf32> to vector<4x1xf32>
    %864 = vector.extract_strided_slice %4 {offsets = [10, 0], sizes = [1, 16], strides = [1, 1]} : vector<16x16xf32> to vector<1x16xf32>
    %865 = vector.broadcast %863 : vector<4x1xf32> to vector<4x16xf32>
    %866 = vector.broadcast %864 : vector<1x16xf32> to vector<4x16xf32>
    %867 = arith.mulf %865, %866 : vector<4x16xf32>
    %868 = arith.addf %862, %867 : vector<4x16xf32>
    %869 = vector.extract_strided_slice %801 {offsets = [0, 11], sizes = [4, 1], strides = [1, 1]} : vector<4x16xf32> to vector<4x1xf32>
    %870 = vector.extract_strided_slice %4 {offsets = [11, 0], sizes = [1, 16], strides = [1, 1]} : vector<16x16xf32> to vector<1x16xf32>
    %871 = vector.broadcast %869 : vector<4x1xf32> to vector<4x16xf32>
    %872 = vector.broadcast %870 : vector<1x16xf32> to vector<4x16xf32>
    %873 = arith.mulf %871, %872 : vector<4x16xf32>
    %874 = arith.addf %868, %873 : vector<4x16xf32>
    %875 = vector.extract_strided_slice %801 {offsets = [0, 12], sizes = [4, 1], strides = [1, 1]} : vector<4x16xf32> to vector<4x1xf32>
    %876 = vector.extract_strided_slice %4 {offsets = [12, 0], sizes = [1, 16], strides = [1, 1]} : vector<16x16xf32> to vector<1x16xf32>
    %877 = vector.broadcast %875 : vector<4x1xf32> to vector<4x16xf32>
    %878 = vector.broadcast %876 : vector<1x16xf32> to vector<4x16xf32>
    %879 = arith.mulf %877, %878 : vector<4x16xf32>
    %880 = arith.addf %874, %879 : vector<4x16xf32>
    %881 = vector.extract_strided_slice %801 {offsets = [0, 13], sizes = [4, 1], strides = [1, 1]} : vector<4x16xf32> to vector<4x1xf32>
    %882 = vector.extract_strided_slice %4 {offsets = [13, 0], sizes = [1, 16], strides = [1, 1]} : vector<16x16xf32> to vector<1x16xf32>
    %883 = vector.broadcast %881 : vector<4x1xf32> to vector<4x16xf32>
    %884 = vector.broadcast %882 : vector<1x16xf32> to vector<4x16xf32>
    %885 = arith.mulf %883, %884 : vector<4x16xf32>
    %886 = arith.addf %880, %885 : vector<4x16xf32>
    %887 = vector.extract_strided_slice %801 {offsets = [0, 14], sizes = [4, 1], strides = [1, 1]} : vector<4x16xf32> to vector<4x1xf32>
    %888 = vector.extract_strided_slice %4 {offsets = [14, 0], sizes = [1, 16], strides = [1, 1]} : vector<16x16xf32> to vector<1x16xf32>
    %889 = vector.broadcast %887 : vector<4x1xf32> to vector<4x16xf32>
    %890 = vector.broadcast %888 : vector<1x16xf32> to vector<4x16xf32>
    %891 = arith.mulf %889, %890 : vector<4x16xf32>
    %892 = arith.addf %886, %891 : vector<4x16xf32>
    %893 = vector.extract_strided_slice %801 {offsets = [0, 15], sizes = [4, 1], strides = [1, 1]} : vector<4x16xf32> to vector<4x1xf32>
    %894 = vector.extract_strided_slice %4 {offsets = [15, 0], sizes = [1, 16], strides = [1, 1]} : vector<16x16xf32> to vector<1x16xf32>
    %895 = vector.broadcast %893 : vector<4x1xf32> to vector<4x16xf32>
    %896 = vector.broadcast %894 : vector<1x16xf32> to vector<4x16xf32>
    %897 = arith.mulf %895, %896 : vector<4x16xf32>
    %898 = arith.addf %892, %897 : vector<4x16xf32>
    %cst_76 = arith.constant dense<0xFF800000> : vector<4xf32>
    %899 = vector.multi_reduction <maximumf>, %898, %cst_76 [1] : vector<4x16xf32> to vector<4xf32>
    %900 = vector.shape_cast %899 : vector<4xf32> to vector<4x1xf32>
    %901 = vector.broadcast %900 : vector<4x1xf32> to vector<4x16xf32>
    %902 = arith.subf %898, %901 : vector<4x16xf32>
    %903 = math.exp %902 : vector<4x16xf32>
    %cst_77 = arith.constant dense<0.000000e+00> : vector<4xf32>
    %904 = vector.multi_reduction <add>, %903, %cst_77 [1] : vector<4x16xf32> to vector<4xf32>
    %905 = vector.shape_cast %904 : vector<4xf32> to vector<4x1xf32>
    %906 = math.log %905 : vector<4x1xf32>
    %907 = vector.broadcast %906 : vector<4x1xf32> to vector<4x16xf32>
    %908 = arith.subf %902, %907 : vector<4x16xf32>
    %c7 = arith.constant 7 : index
    %c0_78 = arith.constant 0 : index
    %c0_79 = arith.constant 0 : index
    %909 = vector.load %arg1[%c7, %c0_78, %c0_79] : memref<8x32x32xf32, #tpu.memory_space<vmem>>, vector<1x32x32xf32>
    %910 = vector.shape_cast %909 : vector<1x32x32xf32> to vector<32x32xf32>
    %c7_80 = arith.constant 7 : index
    %c0_81 = arith.constant 0 : index
    %c0_82 = arith.constant 0 : index
    %911 = vector.load %arg2[%c7_80, %c0_81, %c0_82] : memref<8x40x32xf32, #tpu.memory_space<vmem>>, vector<1x40x32xf32>
    %912 = vector.shape_cast %911 : vector<1x40x32xf32> to vector<40x32xf32>
    %913 = vector.extract_strided_slice %912 {offsets = [0, 0], sizes = [4, 32], strides = [1, 1]} : vector<40x32xf32> to vector<4x32xf32>
    %914 = vector.extract_strided_slice %912 {offsets = [8, 1], sizes = [32, 1], strides = [1, 1]} : vector<40x32xf32> to vector<32x1xf32>
    %915 = vector.extract_strided_slice %912 {offsets = [8, 2], sizes = [32, 1], strides = [1, 1]} : vector<40x32xf32> to vector<32x1xf32>
    %916 = vector.broadcast %914 : vector<32x1xf32> to vector<32x16xf32>
    %917 = vector.broadcast %1 : vector<1x16xf32> to vector<32x16xf32>
    %918 = arith.mulf %916, %917 : vector<32x16xf32>
    %919 = vector.broadcast %0 : vector<1x16xf32> to vector<32x16xf32>
    %920 = arith.addf %919, %918 : vector<32x16xf32>
    %921 = vector.broadcast %915 : vector<32x1xf32> to vector<32x16xf32>
    %922 = vector.broadcast %2 : vector<1x16xf32> to vector<32x16xf32>
    %923 = arith.mulf %921, %922 : vector<32x16xf32>
    %924 = arith.addf %920, %923 : vector<32x16xf32>
    %cst_83 = arith.constant dense<0.000000e+00> : vector<32x16xf32>
    %925 = tpu.matmul %910, %924, %cst_83 {dimension_numbers = #tpu.dot_dimension_numbers<[1], [0], [0], [1], [0, 0, 1, 1], [], []>} : vector<32x32xf32>, vector<32x16xf32>, vector<32x16xf32> -> vector<32x16xf32>
    %926 = vector.broadcast %3 : vector<1x16xf32> to vector<32x16xf32>
    %927 = arith.addf %925, %926 : vector<32x16xf32>
    %cst_84 = arith.constant 0.000000e+00 : f32
    %928 = vector.broadcast %cst_84 : f32 to vector<32x16xf32>
    %929 = arith.maximumf %927, %928 : vector<32x16xf32>
    %cst_85 = arith.constant dense<0.000000e+00> : vector<4x16xf32>
    %930 = tpu.matmul %913, %929, %cst_85 {dimension_numbers = #tpu.dot_dimension_numbers<[1], [0], [0], [1], [0, 0, 1, 1], [], []>} : vector<4x32xf32>, vector<32x16xf32>, vector<4x16xf32> -> vector<4x16xf32>
    %931 = vector.extract_strided_slice %930 {offsets = [0, 0], sizes = [4, 1], strides = [1, 1]} : vector<4x16xf32> to vector<4x1xf32>
    %932 = vector.extract_strided_slice %4 {offsets = [0, 0], sizes = [1, 16], strides = [1, 1]} : vector<16x16xf32> to vector<1x16xf32>
    %933 = vector.broadcast %931 : vector<4x1xf32> to vector<4x16xf32>
    %934 = vector.broadcast %932 : vector<1x16xf32> to vector<4x16xf32>
    %935 = arith.mulf %933, %934 : vector<4x16xf32>
    %936 = vector.broadcast %5 : vector<1x16xf32> to vector<4x16xf32>
    %937 = arith.addf %936, %935 : vector<4x16xf32>
    %938 = vector.extract_strided_slice %930 {offsets = [0, 1], sizes = [4, 1], strides = [1, 1]} : vector<4x16xf32> to vector<4x1xf32>
    %939 = vector.extract_strided_slice %4 {offsets = [1, 0], sizes = [1, 16], strides = [1, 1]} : vector<16x16xf32> to vector<1x16xf32>
    %940 = vector.broadcast %938 : vector<4x1xf32> to vector<4x16xf32>
    %941 = vector.broadcast %939 : vector<1x16xf32> to vector<4x16xf32>
    %942 = arith.mulf %940, %941 : vector<4x16xf32>
    %943 = arith.addf %937, %942 : vector<4x16xf32>
    %944 = vector.extract_strided_slice %930 {offsets = [0, 2], sizes = [4, 1], strides = [1, 1]} : vector<4x16xf32> to vector<4x1xf32>
    %945 = vector.extract_strided_slice %4 {offsets = [2, 0], sizes = [1, 16], strides = [1, 1]} : vector<16x16xf32> to vector<1x16xf32>
    %946 = vector.broadcast %944 : vector<4x1xf32> to vector<4x16xf32>
    %947 = vector.broadcast %945 : vector<1x16xf32> to vector<4x16xf32>
    %948 = arith.mulf %946, %947 : vector<4x16xf32>
    %949 = arith.addf %943, %948 : vector<4x16xf32>
    %950 = vector.extract_strided_slice %930 {offsets = [0, 3], sizes = [4, 1], strides = [1, 1]} : vector<4x16xf32> to vector<4x1xf32>
    %951 = vector.extract_strided_slice %4 {offsets = [3, 0], sizes = [1, 16], strides = [1, 1]} : vector<16x16xf32> to vector<1x16xf32>
    %952 = vector.broadcast %950 : vector<4x1xf32> to vector<4x16xf32>
    %953 = vector.broadcast %951 : vector<1x16xf32> to vector<4x16xf32>
    %954 = arith.mulf %952, %953 : vector<4x16xf32>
    %955 = arith.addf %949, %954 : vector<4x16xf32>
    %956 = vector.extract_strided_slice %930 {offsets = [0, 4], sizes = [4, 1], strides = [1, 1]} : vector<4x16xf32> to vector<4x1xf32>
    %957 = vector.extract_strided_slice %4 {offsets = [4, 0], sizes = [1, 16], strides = [1, 1]} : vector<16x16xf32> to vector<1x16xf32>
    %958 = vector.broadcast %956 : vector<4x1xf32> to vector<4x16xf32>
    %959 = vector.broadcast %957 : vector<1x16xf32> to vector<4x16xf32>
    %960 = arith.mulf %958, %959 : vector<4x16xf32>
    %961 = arith.addf %955, %960 : vector<4x16xf32>
    %962 = vector.extract_strided_slice %930 {offsets = [0, 5], sizes = [4, 1], strides = [1, 1]} : vector<4x16xf32> to vector<4x1xf32>
    %963 = vector.extract_strided_slice %4 {offsets = [5, 0], sizes = [1, 16], strides = [1, 1]} : vector<16x16xf32> to vector<1x16xf32>
    %964 = vector.broadcast %962 : vector<4x1xf32> to vector<4x16xf32>
    %965 = vector.broadcast %963 : vector<1x16xf32> to vector<4x16xf32>
    %966 = arith.mulf %964, %965 : vector<4x16xf32>
    %967 = arith.addf %961, %966 : vector<4x16xf32>
    %968 = vector.extract_strided_slice %930 {offsets = [0, 6], sizes = [4, 1], strides = [1, 1]} : vector<4x16xf32> to vector<4x1xf32>
    %969 = vector.extract_strided_slice %4 {offsets = [6, 0], sizes = [1, 16], strides = [1, 1]} : vector<16x16xf32> to vector<1x16xf32>
    %970 = vector.broadcast %968 : vector<4x1xf32> to vector<4x16xf32>
    %971 = vector.broadcast %969 : vector<1x16xf32> to vector<4x16xf32>
    %972 = arith.mulf %970, %971 : vector<4x16xf32>
    %973 = arith.addf %967, %972 : vector<4x16xf32>
    %974 = vector.extract_strided_slice %930 {offsets = [0, 7], sizes = [4, 1], strides = [1, 1]} : vector<4x16xf32> to vector<4x1xf32>
    %975 = vector.extract_strided_slice %4 {offsets = [7, 0], sizes = [1, 16], strides = [1, 1]} : vector<16x16xf32> to vector<1x16xf32>
    %976 = vector.broadcast %974 : vector<4x1xf32> to vector<4x16xf32>
    %977 = vector.broadcast %975 : vector<1x16xf32> to vector<4x16xf32>
    %978 = arith.mulf %976, %977 : vector<4x16xf32>
    %979 = arith.addf %973, %978 : vector<4x16xf32>
    %980 = vector.extract_strided_slice %930 {offsets = [0, 8], sizes = [4, 1], strides = [1, 1]} : vector<4x16xf32> to vector<4x1xf32>
    %981 = vector.extract_strided_slice %4 {offsets = [8, 0], sizes = [1, 16], strides = [1, 1]} : vector<16x16xf32> to vector<1x16xf32>
    %982 = vector.broadcast %980 : vector<4x1xf32> to vector<4x16xf32>
    %983 = vector.broadcast %981 : vector<1x16xf32> to vector<4x16xf32>
    %984 = arith.mulf %982, %983 : vector<4x16xf32>
    %985 = arith.addf %979, %984 : vector<4x16xf32>
    %986 = vector.extract_strided_slice %930 {offsets = [0, 9], sizes = [4, 1], strides = [1, 1]} : vector<4x16xf32> to vector<4x1xf32>
    %987 = vector.extract_strided_slice %4 {offsets = [9, 0], sizes = [1, 16], strides = [1, 1]} : vector<16x16xf32> to vector<1x16xf32>
    %988 = vector.broadcast %986 : vector<4x1xf32> to vector<4x16xf32>
    %989 = vector.broadcast %987 : vector<1x16xf32> to vector<4x16xf32>
    %990 = arith.mulf %988, %989 : vector<4x16xf32>
    %991 = arith.addf %985, %990 : vector<4x16xf32>
    %992 = vector.extract_strided_slice %930 {offsets = [0, 10], sizes = [4, 1], strides = [1, 1]} : vector<4x16xf32> to vector<4x1xf32>
    %993 = vector.extract_strided_slice %4 {offsets = [10, 0], sizes = [1, 16], strides = [1, 1]} : vector<16x16xf32> to vector<1x16xf32>
    %994 = vector.broadcast %992 : vector<4x1xf32> to vector<4x16xf32>
    %995 = vector.broadcast %993 : vector<1x16xf32> to vector<4x16xf32>
    %996 = arith.mulf %994, %995 : vector<4x16xf32>
    %997 = arith.addf %991, %996 : vector<4x16xf32>
    %998 = vector.extract_strided_slice %930 {offsets = [0, 11], sizes = [4, 1], strides = [1, 1]} : vector<4x16xf32> to vector<4x1xf32>
    %999 = vector.extract_strided_slice %4 {offsets = [11, 0], sizes = [1, 16], strides = [1, 1]} : vector<16x16xf32> to vector<1x16xf32>
    %1000 = vector.broadcast %998 : vector<4x1xf32> to vector<4x16xf32>
    %1001 = vector.broadcast %999 : vector<1x16xf32> to vector<4x16xf32>
    %1002 = arith.mulf %1000, %1001 : vector<4x16xf32>
    %1003 = arith.addf %997, %1002 : vector<4x16xf32>
    %1004 = vector.extract_strided_slice %930 {offsets = [0, 12], sizes = [4, 1], strides = [1, 1]} : vector<4x16xf32> to vector<4x1xf32>
    %1005 = vector.extract_strided_slice %4 {offsets = [12, 0], sizes = [1, 16], strides = [1, 1]} : vector<16x16xf32> to vector<1x16xf32>
    %1006 = vector.broadcast %1004 : vector<4x1xf32> to vector<4x16xf32>
    %1007 = vector.broadcast %1005 : vector<1x16xf32> to vector<4x16xf32>
    %1008 = arith.mulf %1006, %1007 : vector<4x16xf32>
    %1009 = arith.addf %1003, %1008 : vector<4x16xf32>
    %1010 = vector.extract_strided_slice %930 {offsets = [0, 13], sizes = [4, 1], strides = [1, 1]} : vector<4x16xf32> to vector<4x1xf32>
    %1011 = vector.extract_strided_slice %4 {offsets = [13, 0], sizes = [1, 16], strides = [1, 1]} : vector<16x16xf32> to vector<1x16xf32>
    %1012 = vector.broadcast %1010 : vector<4x1xf32> to vector<4x16xf32>
    %1013 = vector.broadcast %1011 : vector<1x16xf32> to vector<4x16xf32>
    %1014 = arith.mulf %1012, %1013 : vector<4x16xf32>
    %1015 = arith.addf %1009, %1014 : vector<4x16xf32>
    %1016 = vector.extract_strided_slice %930 {offsets = [0, 14], sizes = [4, 1], strides = [1, 1]} : vector<4x16xf32> to vector<4x1xf32>
    %1017 = vector.extract_strided_slice %4 {offsets = [14, 0], sizes = [1, 16], strides = [1, 1]} : vector<16x16xf32> to vector<1x16xf32>
    %1018 = vector.broadcast %1016 : vector<4x1xf32> to vector<4x16xf32>
    %1019 = vector.broadcast %1017 : vector<1x16xf32> to vector<4x16xf32>
    %1020 = arith.mulf %1018, %1019 : vector<4x16xf32>
    %1021 = arith.addf %1015, %1020 : vector<4x16xf32>
    %1022 = vector.extract_strided_slice %930 {offsets = [0, 15], sizes = [4, 1], strides = [1, 1]} : vector<4x16xf32> to vector<4x1xf32>
    %1023 = vector.extract_strided_slice %4 {offsets = [15, 0], sizes = [1, 16], strides = [1, 1]} : vector<16x16xf32> to vector<1x16xf32>
    %1024 = vector.broadcast %1022 : vector<4x1xf32> to vector<4x16xf32>
    %1025 = vector.broadcast %1023 : vector<1x16xf32> to vector<4x16xf32>
    %1026 = arith.mulf %1024, %1025 : vector<4x16xf32>
    %1027 = arith.addf %1021, %1026 : vector<4x16xf32>
    %cst_86 = arith.constant dense<0xFF800000> : vector<4xf32>
    %1028 = vector.multi_reduction <maximumf>, %1027, %cst_86 [1] : vector<4x16xf32> to vector<4xf32>
    %1029 = vector.shape_cast %1028 : vector<4xf32> to vector<4x1xf32>
    %1030 = vector.broadcast %1029 : vector<4x1xf32> to vector<4x16xf32>
    %1031 = arith.subf %1027, %1030 : vector<4x16xf32>
    %1032 = math.exp %1031 : vector<4x16xf32>
    %cst_87 = arith.constant dense<0.000000e+00> : vector<4xf32>
    %1033 = vector.multi_reduction <add>, %1032, %cst_87 [1] : vector<4x16xf32> to vector<4xf32>
    %1034 = vector.shape_cast %1033 : vector<4xf32> to vector<4x1xf32>
    %1035 = math.log %1034 : vector<4x1xf32>
    %1036 = vector.broadcast %1035 : vector<4x1xf32> to vector<4x16xf32>
    %1037 = arith.subf %1031, %1036 : vector<4x16xf32>
    %1038 = tpu.concatenate %134, %263, %392, %521, %650, %779, %908, %1037 in 1 : vector<4x16xf32>, vector<4x16xf32>, vector<4x16xf32>, vector<4x16xf32>, vector<4x16xf32>, vector<4x16xf32>, vector<4x16xf32>, vector<4x16xf32> -> vector<4x128xf32>
    %c0_88 = arith.constant 0 : index
    %c0_89 = arith.constant 0 : index
    %1039 = vector.load %arg4[%c0_88, %c0_89] : memref<4x128xf32, #tpu.memory_space<vmem>>, vector<4x128xf32>
    tpu.vector_store %arg4[%c0_88, %c0_89], %1038 {strides = array<i32>} : memref<4x128xf32, #tpu.memory_space<vmem>>, vector<4x128xf32>,
    return
  }
  func.func @transform_0(%arg0: i32) -> (i32, i32, i32) {
    %c0_i32 = arith.constant 0 : i32
    %c0_i32_0 = arith.constant 0 : i32
    %c0_i32_1 = arith.constant 0 : i32
    return %arg0, %c0_i32, %c0_i32_0 : i32, i32, i32
  }
  func.func @transform_1(%arg0: i32) -> (i32, i32, i32) {
    %c0_i32 = arith.constant 0 : i32
    %c0_i32_0 = arith.constant 0 : i32
    %c0_i32_1 = arith.constant 0 : i32
    return %arg0, %c0_i32, %c0_i32_0 : i32, i32, i32
  }
  func.func @transform_2(%arg0: i32) -> (i32, i32) {
    %c0_i32 = arith.constant 0 : i32
    %c0_i32_0 = arith.constant 0 : i32
    %c0_i32_1 = arith.constant 0 : i32
    return %c0_i32, %c0_i32_0 : i32, i32
  }
  func.func @transform_3(%arg0: i32) -> (i32, i32) {
    %c0_i32 = arith.constant 0 : i32
    %c0_i32_0 = arith.constant 0 : i32
    return %c0_i32, %arg0 : i32, i32
  }
}

</mosaic_0001>

<llo_original>
// kernel: tpu_custom_call.1
$region0: #{tpu_custom_call.1}
  #allocation0 [shape = 'u32[]', space=smem, size = 0x4, offset = 0x4, fixed_abs, tag = 'smem constant byte address 0x4 - core index']
  #allocation1 [shape = 'u32[144,128]{1,0:T(1,128)}', space=vmem, size = 0x12000, scoped, tag = 'internal scratch']
  %s0 = inlined_call_operand.vmem [shape: f32[16,32,32], index: 0, kind: input, shape index: {}]
  %s1 = inlined_call_operand.vmem [shape: f32[16,40,32], index: 1, kind: input, shape index: {}]
  %s2 = inlined_call_operand.vmem [shape: f32[40,16], index: 2, kind: input, shape index: {}]
  %s3 = inlined_call_operand.hbm [shape: f32[4,256], index: 3, kind: output, shape index: {}]
  %s4 = sld [smem:[#allocation0]]
  $region45: #{tpu_custom_call.1} parent=0
    _
  %s6 = ssub.s32 1, %s4
  %s7 = scalar_select 0, %s6, %s4
  $region1: #{tpu_custom_call.1} parent=0
    #allocation2 [shape = 'u8[4096]{0}', space=vmem, size = 0x1000, scoped, tag = 'output window, operand 0']
    #allocation3 [shape = 's32[2]{0}', space=sflag, size = 0x8, scoped, tag = 'scoped memory for tpu_custom_call.1']
    %8 = vsyncpa [#allocation3], 0
    %s9 = scalar_lea.sflag [#allocation3], 1
    %10 = vsyncpa %s9, 0
    loop: start=0, step=1, limit=4
    $region2: #{tpu_custom_call.1} parent=1 // loop_pre_header
      _
    $region3: #{tpu_custom_call.1} parent=1 // loop_header
      %s12 = sphi 0, %s16
      %p13 = scmp.ge.s32.totalorder %s12, 4
      %s22 = sphi 0, %s24
      %s25 = sphi 0, %s22
      %s26 = sphi 0, %s25
      %s42 = sphi 0, %s26
      %s48 = sphi 0, %s50
      %s51 = sphi 0, %s48
      %s52 = sphi 0, %s51
      %s68 = sphi 0, %s52
      %s72 = sphi 0, %s72
      %s74 = sphi 0, %s72
      %s75 = sphi 0, %s74
      %s89 = sphi 0, %s75
      %s95 = sphi 0, %s97
      %s98 = sphi 0, %s95
      %s99 = sphi 0, %s98
      %s115 = sphi 0, %s99
    $region4: #{tpu_custom_call.1} parent=1 // loop_header_branch
      %15 = sbr.rel (%p13) target = $region8
    $region5: #{tpu_custom_call.1} parent=1 // loop_body
      %s17 = ssub.s32 %s12, 1
      %s18 = ssub.s32 %s12, 2
      %s19 = sadd.s32 %s12, 1
      %s20 = ssub.s32 %s12, %s19
      %p21 = scmp.eq.s32.totalorder %s20, 0
      %s23 = sadd.s32 %s22, 1
      %s24 = scalar_select %p21, %s22, %s23
      %p27 = pneg %p21
      %p28 = scmp.eq.s32.totalorder %s12, 1
      %p29 = por %p27, %p28
      %p30 = scmp.ne.s32.totalorder %s22, %s25
      %p31 = scmp.eq.s32.totalorder %s12, 0
      %p32 = por %p30, %p31
      %p33 = scmp.ne.s32.totalorder %s22, %s25
      %p34 = scmp.eq.s32.totalorder %s17, 1
      %p35 = por %p33, %p34
      %p36 = scmp.ne.s32.totalorder %s25, %s26
      %p37 = scmp.eq.s32.totalorder %s17, 0
      %p38 = por %p36, %p37
      %p39 = scmp.ne.s32.totalorder %s25, %s26
      %p40 = scmp.eq.s32.totalorder %s18, 1
      %p41 = por %p39, %p40
      %p43 = scmp.ne.s32.totalorder %s26, %s42
      %p44 = scmp.eq.s32.totalorder %s18, 0
      %p45 = por %p43, %p44
      %s46 = ssub.s32 %s12, %s19
      %p47 = scmp.eq.s32.totalorder %s46, 0
      %s49 = sadd.s32 %s48, 1
      %s50 = scalar_select %p47, %s48, %s49
      %p53 = pneg %p47
      %p54 = scmp.eq.s32.totalorder %s12, 1
      %p55 = por %p53, %p54
      %p56 = scmp.ne.s32.totalorder %s48, %s51
      %p57 = scmp.eq.s32.totalorder %s12, 0
      %p58 = por %p56, %p57
      %p59 = scmp.ne.s32.totalorder %s48, %s51
      %p60 = scmp.eq.s32.totalorder %s17, 1
      %p61 = por %p59, %p60
      %p62 = scmp.ne.s32.totalorder %s51, %s52
      %p63 = scmp.eq.s32.totalorder %s17, 0
      %p64 = por %p62, %p63
      %p65 = scmp.ne.s32.totalorder %s51, %s52
      %p66 = scmp.eq.s32.totalorder %s18, 1
      %p67 = por %p65, %p66
      %p69 = scmp.ne.s32.totalorder %s52, %s68
      %p70 = scmp.eq.s32.totalorder %s18, 0
      %p71 = por %p69, %p70
      %s73 = sadd.s32 %s72, 1
      %p76 = scmp.eq.s32.totalorder %s12, 1
      %p77 = scmp.ne.s32.totalorder %s72, %s74
      %p78 = scmp.eq.s32.totalorder %s12, 0
      %p79 = por %p77, %p78
      %p80 = scmp.ne.s32.totalorder %s72, %s74
      %p81 = scmp.eq.s32.totalorder %s17, 1
      %p82 = por %p80, %p81
      %p83 = scmp.ne.s32.totalorder %s74, %s75
      %p84 = scmp.eq.s32.totalorder %s17, 0
      %p85 = por %p83, %p84
      %p86 = scmp.ne.s32.totalorder %s74, %s75
      %p87 = scmp.eq.s32.totalorder %s18, 1
      %p88 = por %p86, %p87
      %p90 = scmp.ne.s32.totalorder %s75, %s89
      %p91 = scmp.eq.s32.totalorder %s18, 0
      %p92 = por %p90, %p91
      %s93 = ssub.s32 %s12, %s19
      %p94 = scmp.eq.s32.totalorder %s93, 0
      %s96 = sadd.s32 %s95, 1
      %s97 = scalar_select %p94, %s95, %s96
      %p100 = pneg %p94
      %p101 = scmp.eq.s32.totalorder %s12, 1
      %p102 = por %p100, %p101
      %p103 = scmp.ne.s32.totalorder %s95, %s98
      %p104 = scmp.eq.s32.totalorder %s12, 0
      %p105 = por %p103, %p104
      %p106 = scmp.ne.s32.totalorder %s95, %s98
      %p107 = scmp.eq.s32.totalorder %s17, 1
      %p108 = por %p106, %p107
      %p109 = scmp.ne.s32.totalorder %s98, %s99
      %p110 = scmp.eq.s32.totalorder %s17, 0
      %p111 = por %p109, %p110
      %p112 = scmp.ne.s32.totalorder %s98, %s99
      %p113 = scmp.eq.s32.totalorder %s18, 1
      %p114 = por %p112, %p113
      %p116 = scmp.ne.s32.totalorder %s99, %s115
      %p117 = scmp.eq.s32.totalorder %s18, 0
      %p118 = por %p116, %p117
      %p119 = scmp.le.s32.totalorder 1, %s12
      %p120 = scmp.lt.s32.totalorder %s12, 3
      %p121 = pnand %p119, %p120
      %p122 = pneg %p121
      // Predicated region
      $region9: #{tpu_custom_call.1} parent=5 // pred_check
        _
      $region10: #{tpu_custom_call.1} parent=5 // pred_check_branch
        %124 = sbr.rel (%p121) target = $region12
      $region11: #{tpu_custom_call.1} parent=5 // pred_region
        %s125 = ssub.s32 %s12, 1
        // Predicated region
        $region13: #{tpu_custom_call.1} parent=11 // pred_check
          %p126 = pneg %p85
        $region14: #{tpu_custom_call.1} parent=11 // pred_check_branch
          %128 = sbr.rel (%p126) target = $region16
        $region15: #{tpu_custom_call.1} parent=11 // pred_region
          _
        $region16: #{tpu_custom_call.1} parent=11 // pred_fallthru
          _
      $region12: #{tpu_custom_call.1} parent=5 // pred_fallthru
        _
      %p129 = scmp.lt.s32.totalorder %s12, 2
      // Predicated region
      $region17: #{tpu_custom_call.1} parent=5 // pred_check
        %p130 = pneg %p129
      $region18: #{tpu_custom_call.1} parent=5 // pred_check_branch
        %132 = sbr.rel (%p130) target = $region20
      $region19: #{tpu_custom_call.1} parent=5 // pred_region
        // Predicated region
        $region21: #{tpu_custom_call.1} parent=19 // pred_check
          %p133 = pneg %p32
        $region22: #{tpu_custom_call.1} parent=19 // pred_check_branch
          %135 = sbr.rel (%p133) target = $region24
        $region23: #{tpu_custom_call.1} parent=19 // pred_region
          %s136 = smul.u32 8, %s12
          %p137 = scmp.lt.s32.totalorder %s136, 15
          %s138 = scalar_select %p137, %s136, 15
          %s139 = smul.addr %s138, 4
          %s140 = smul.addr %s139, 8
          %s141 = scalar_lea.vmem %s0, %s140
          %s142 = smul.u32 8, %s12
        $region24: #{tpu_custom_call.1} parent=19 // pred_fallthru
          _
        // Predicated region
        $region25: #{tpu_custom_call.1} parent=19 // pred_check
          %p143 = pneg %p58
        $region26: #{tpu_custom_call.1} parent=19 // pred_check_branch
          %145 = sbr.rel (%p143) target = $region28
        $region27: #{tpu_custom_call.1} parent=19 // pred_region
          %s146 = smul.u32 8, %s12
          %p147 = scmp.lt.s32.totalorder %s146, 15
          %s148 = scalar_select %p147, %s146, 15
          %s149 = smul.addr %s148, 5
          %s150 = smul.addr %s149, 8
          %s151 = scalar_lea.vmem %s1, %s150
          %s152 = smul.u32 8, %s12
        $region28: #{tpu_custom_call.1} parent=19 // pred_fallthru
          _
      $region20: #{tpu_custom_call.1} parent=5 // pred_fallthru
        _
      %p153 = scmp.le.s32.totalorder 1, %s12
      %p154 = scmp.lt.s32.totalorder %s12, 3
      %p155 = pnand %p153, %p154
      %p156 = pneg %p155
      // Predicated region
      $region29: #{tpu_custom_call.1} parent=5 // pred_check
        _
      $region30: #{tpu_custom_call.1} parent=5 // pred_check_branch
        %158 = sbr.rel (%p155) target = $region32
      $region31: #{tpu_custom_call.1} parent=5 // pred_region
        %s159 = ssub.s32 %s12, 1
        %s160 = smul.u32 8, %s17
        %p161 = scmp.lt.s32.totalorder %s160, 15
        %s162 = scalar_select %p161, %s160, 15
        %s163 = smul.addr %s162, 4
        %s164 = smul.addr %s163, 8
        %s165 = scalar_lea.vmem %s0, %s164
        %p166 = pneg %p38
        %p167 = pneg %p35
        %s168 = smul.u32 8, %s17
        %p169 = scmp.lt.s32.totalorder %s168, 15
        %s170 = scalar_select %p169, %s168, 15
        %s171 = smul.addr %s170, 5
        %s172 = smul.addr %s171, 8
        %s173 = scalar_lea.vmem %s1, %s172
        %p174 = pneg %p64
        %p175 = pneg %p61
        %p176 = pneg %p85
        %p177 = pneg %p82
        %p178 = pneg %p111
        %p179 = pneg %p108
        %s180 = sand.u32 %s98, 1
        %s181 = scalar_lea.sflag [#allocation3], %s180
        %s182 = sand.u32 %s98, 1
        %s183 = smul.addr %s182, 4
        %s184 = scalar_lea.vmem [#allocation2], %s183
        %s185 = smul.u32 8, %s17
        %p186 = scmp.lt.s32.totalorder %s185, 15
        %s187 = scalar_select %p186, %s185, 15
        %s188 = smul.addr %s187, 4
        %s189 = smul.addr %s188, 8
        %s190 = scalar_lea.vmem %s0, %s189
        %s191 = smul.u32 8, %s17
        %s192 = smul.u32 8, %s17
        %p193 = scmp.lt.s32.totalorder %s192, 15
        %s194 = scalar_select %p193, %s192, 15
        %s195 = smul.addr %s194, 5
        %s196 = smul.addr %s195, 8
        %s197 = scalar_lea.vmem %s1, %s196
        %s198 = smul.u32 8, %s17
        %v199 = vld [vmem:[%s2] sm:$0x1]
        %v200 = vld [vmem:[%s2 + $0x1] sm:$0x1]
        %v201 = vld [vmem:[%s2 + $0x2] sm:$0x1]
        %v202 = vld [vmem:[%s2 + $0x8] sm:$0x1]
        %v203 = vld [vmem:[%s2 + $0x10] sm:$0xff]
        %v204 = vld [vmem:[%s2 + $0x18] sm:$0xff]
        %v205 = vld [vmem:[%s2 + $0x20] sm:$0x1]
        %v206 = vld [vmem:[%s190] sm:$0xff]
        %v207 = vld [vmem:[%s190 + $0x8] sm:$0xff]
        %v208 = vld [vmem:[%s190 + $0x10] sm:$0xff]
        %v209 = vld [vmem:[%s190 + $0x18] sm:$0xff]
        %v210 = vld [vmem:[%s197] sm:$0xff]
        %v211 = vld [vmem:[%s197 + $0x8] sm:$0xff]
        %v212 = vld [vmem:[%s197 + $0x10] sm:$0xff]
        %v213 = vld [vmem:[%s197 + $0x18] sm:$0xff]
        %v214 = vld [vmem:[%s197 + $0x20] sm:$0xff]
        %216 = vset.pattern.permute.xlu0 1
        %217 = vperm.xlu0 %216, %v211
        %v218 = vpop.permute.xlu0 %217
        %221 = vset.pattern.permute.xlu0 1
        %222 = vperm.xlu0 %221, %v212
        %v223 = vpop.permute.xlu0 %222
        %226 = vset.pattern.permute.xlu0 1
        %227 = vperm.xlu0 %226, %v213
        %v228 = vpop.permute.xlu0 %227
        %231 = vset.pattern.permute.xlu0 1
        %232 = vperm.xlu0 %231, %v214
        %v233 = vpop.permute.xlu0 %232
        %v235 = vlaneseq
        %v236 = vshrl.u32 %v235, 7
        %v237 = vsub.s32 0, %v236
        %v238 = vrot.slane %v200, %v237
        %v239 = vmul.f32 %v218, %v238
        %v240 = vmul.f32 %v223, %v238
        %v241 = vmul.f32 %v228, %v238
        %v242 = vmul.f32 %v233, %v238
        %v243 = vlaneseq
        %v244 = vshrl.u32 %v243, 7
        %v245 = vsub.s32 0, %v244
        %v246 = vrot.slane %v199, %v245
        %v247 = vadd.f32 %v246, %v239
        %v248 = vadd.f32 %v246, %v240
        %v249 = vadd.f32 %v246, %v241
        %v250 = vadd.f32 %v246, %v242
        %251 = vset.pattern.permute.xlu0 2
        %252 = vperm.xlu0 %251, %v211
        %v253 = vpop.permute.xlu0 %252
        %255 = vset.pattern.permute.xlu0 2
        %256 = vperm.xlu0 %255, %v212
        %v257 = vpop.permute.xlu0 %256
        %259 = vset.pattern.permute.xlu0 2
        %260 = vperm.xlu0 %259, %v213
        %v261 = vpop.permute.xlu0 %260
        %263 = vset.pattern.permute.xlu0 2
        %264 = vperm.xlu0 %263, %v214
        %v265 = vpop.permute.xlu0 %264
        %v267 = vlaneseq
        %v268 = vshrl.u32 %v267, 7
        %v269 = vsub.s32 0, %v268
        %v270 = vrot.slane %v201, %v269
        %v271 = vmul.f32 %v253, %v270
        %v272 = vmul.f32 %v257, %v270
        %v273 = vmul.f32 %v261, %v270
        %v274 = vmul.f32 %v265, %v270
        %v275 = vadd.f32 %v247, %v271
        %v276 = vadd.f32 %v248, %v272
        %v277 = vadd.f32 %v249, %v273
        %v278 = vadd.f32 %v250, %v274
        %v279 = vlaneseq
        %v280 = vshrl.u32 %v279, 7
        %v281 = vsub.s32 0, %v280
        %v282 = vrot.slane %v202, %v281
        %vm283 = vcmask 261120
        %v285 = vsel %vm283, %v206, 0
        %v288 = vsel %vm283, %v207, 0
        %v291 = vsel %vm283, %v208, 0
        %v294 = vsel %vm283, %v209, 0
        %296 = vmatprep.subr.mxu0 0.0
        %297 = vmatpush1.msra.mxu0 %v275
        %298 = vmatprep.subr.mxu0 0.0
        %299 = vmatpush1.msra.mxu0 %v276
        %300 = vmatprep.subr.mxu0 0.0
        %301 = vmatpush1.msra.mxu0 %v277
        %302 = vmatprep.subr.mxu0 0.0
        %303 = vmatpush1.msra.mxu0 %v278
        %304 = vmatprep.subr.mxu0 0.0
        %305 = vmatpush1.msra.mxu0 0.0
        %306 = vmatprep.subr.mxu0 0.0
        %307 = vmatpush1.msra.mxu0 0.0
        %308 = vmatprep.subr.mxu0 0.0
        %309 = vmatpush1.msra.mxu0 0.0
        %310 = vmatprep.subr.mxu0 0.0
        %311 = vmatpush1.msra.mxu0 0.0
        %312 = vmatprep.subr.mxu0 0.0
        %313 = vmatpush1.msra.mxu0 0.0
        %314 = vmatprep.subr.mxu0 0.0
        %315 = vmatpush1.msra.mxu0 0.0
        %316 = vmatprep.subr.mxu0 0.0
        %317 = vmatpush1.msra.mxu0 0.0
        %318 = vmatprep.subr.mxu0 0.0
        %319 = vmatpush1.msra.mxu0 0.0
        %320 = vmatprep.subr.mxu0 0.0
        %321 = vmatpush1.msra.mxu0 0.0
        %322 = vmatprep.subr.mxu0 0.0
        %323 = vmatpush1.msra.mxu0 0.0
        %324 = vmatprep.subr.mxu0 0.0
        %325 = vmatpush1.msra.mxu0 0.0
        %326 = vmatprep.subr.mxu0 0.0
        %327 = vmatpush1.msra.mxu0 0.0
        %328 = vmatprep.subr.mxu0 0.0
        %329 = vmatpush1.msra.mxu0 0.0
        %330 = vmatprep.subr.mxu0 0.0
        %331 = vmatpush1.msra.mxu0 0.0
        %332 = vmatprep.subr.mxu0 0.0
        %333 = vmatpush1.msra.mxu0 0.0
        %334 = vmatprep.subr.mxu0 0.0
        %335 = vmatpush1.msra.mxu0 0.0
        %336 = vmatprep.subr.mxu0 0.0
        %337 = vmatpush1.msra.mxu0 0.0
        %338 = vmatprep.subr.mxu0 0.0
        %339 = vmatpush1.msra.mxu0 0.0
        %340 = vmatprep.subr.mxu0 0.0
        %341 = vmatpush1.msra.mxu0 0.0
        %342 = vmatprep.subr.mxu0 0.0
        %343 = vmatpush1.msra.mxu0 0.0
        %344 = vmatprep.subr.mxu0 0.0
        %345 = vmatpush1.msra.mxu0 0.0
        %346 = vmatprep.subr.mxu0 0.0
        %347 = vmatpush1.msra.mxu0 0.0
        %348 = vmatprep.subr.mxu0 0.0
        %349 = vmatpush1.msra.mxu0 0.0
        %350 = vmatprep.subr.mxu0 0.0
        %351 = vmatpush1.msra.mxu0 0.0
        %352 = vmatprep.subr.mxu0 0.0
        %353 = vmatpush1.msra.mxu0 0.0
        %354 = vmatprep.subr.mxu0 0.0
        %355 = vmatpush1.msra.mxu0 0.0
        %356 = vmatprep.subr.mxu0 0.0
        %357 = vmatpush1.msra.mxu0 0.0
        %358 = vmatprep.subr.mxu0 0.0
        %359 = vmatpush1.msra.mxu0 0.0
        %360 = vmatprep.mubr.f32.mxu0 0.0
        %361 = vmatmul.mubr.f32.gmra.mrb[0].mxu0 %v285
        %v362 = vpop.f32.mrb[0].mxu0
        %v363 = vadd.f32 %v282, %v362
        %v364 = vpop.f32.mrb[0].mxu0
        %365 = vmatprep.mubr.f32.mxu0 0.0
        %366 = vmatmul.mubr.f32.gmra.mrb[0].mxu0 %v288
        %v367 = vpop.f32.mrb[0].mxu0
        %v368 = vadd.f32 %v282, %v367
        %v369 = vpop.f32.mrb[0].mxu0
        %370 = vmatprep.mubr.f32.mxu0 0.0
        %371 = vmatmul.mubr.f32.gmra.mrb[0].mxu0 %v291
        %v372 = vpop.f32.mrb[0].mxu0
        %v373 = vadd.f32 %v282, %v372
        %v374 = vpop.f32.mrb[0].mxu0
        %375 = vmatprep.mubr.f32.mxu0 0.0
        %376 = vmatmul.mubr.f32.gmra.mrb[0].mxu0 %v294
        %v377 = vpop.f32.mrb[0].mxu0
        %v378 = vadd.f32 %v282, %v377
        %v379 = vpop.f32.mrb[0].mxu0
        %380 = vdwg.mxu0
        %v381 = vmax.f32 %v363, 0.0
        %v382 = vmax.f32 %v368, 0.0
        %v383 = vmax.f32 %v373, 0.0
        %v384 = vmax.f32 %v378, 0.0
        %v386 = vsel %vm283, %v210, 0
        %388 = vmatprep.subr.mxu0 0.0
        %389 = vmatpush1.msra.mxu0 %v381
        %390 = vmatprep.subr.mxu0 0.0
        %391 = vmatpush1.msra.mxu0 %v382
        %392 = vmatprep.subr.mxu0 0.0
        %393 = vmatpush1.msra.mxu0 %v383
        %394 = vmatprep.subr.mxu0 0.0
        %395 = vmatpush1.msra.mxu0 %v384
        %396 = vmatprep.subr.mxu0 0.0
        %397 = vmatpush1.msra.mxu0 0.0
        %398 = vmatprep.subr.mxu0 0.0
        %399 = vmatpush1.msra.mxu0 0.0
        %400 = vmatprep.subr.mxu0 0.0
        %401 = vmatpush1.msra.mxu0 0.0
        %402 = vmatprep.subr.mxu0 0.0
        %403 = vmatpush1.msra.mxu0 0.0
        %404 = vmatprep.subr.mxu0 0.0
        %405 = vmatpush1.msra.mxu0 0.0
        %406 = vmatprep.subr.mxu0 0.0
        %407 = vmatpush1.msra.mxu0 0.0
        %408 = vmatprep.subr.mxu0 0.0
        %409 = vmatpush1.msra.mxu0 0.0
        %410 = vmatprep.subr.mxu0 0.0
        %411 = vmatpush1.msra.mxu0 0.0
        %412 = vmatprep.subr.mxu0 0.0
        %413 = vmatpush1.msra.mxu0 0.0
        %414 = vmatprep.subr.mxu0 0.0
        %415 = vmatpush1.msra.mxu0 0.0
        %416 = vmatprep.subr.mxu0 0.0
        %417 = vmatpush1.msra.mxu0 0.0
        %418 = vmatprep.subr.mxu0 0.0
        %419 = vmatpush1.msra.mxu0 0.0
        %420 = vmatprep.subr.mxu0 0.0
        %421 = vmatpush1.msra.mxu0 0.0
        %422 = vmatprep.subr.mxu0 0.0
        %423 = vmatpush1.msra.mxu0 0.0
        %424 = vmatprep.subr.mxu0 0.0
        %425 = vmatpush1.msra.mxu0 0.0
        %426 = vmatprep.subr.mxu0 0.0
        %427 = vmatpush1.msra.mxu0 0.0
        %428 = vmatprep.subr.mxu0 0.0
        %429 = vmatpush1.msra.mxu0 0.0
        %430 = vmatprep.subr.mxu0 0.0
        %431 = vmatpush1.msra.mxu0 0.0
        %432 = vmatprep.subr.mxu0 0.0
        %433 = vmatpush1.msra.mxu0 0.0
        %434 = vmatprep.subr.mxu0 0.0
        %435 = vmatpush1.msra.mxu0 0.0
        %436 = vmatprep.subr.mxu0 0.0
        %437 = vmatpush1.msra.mxu0 0.0
        %438 = vmatprep.subr.mxu0 0.0
        %439 = vmatpush1.msra.mxu0 0.0
        %440 = vmatprep.subr.mxu0 0.0
        %441 = vmatpush1.msra.mxu0 0.0
        %442 = vmatprep.subr.mxu0 0.0
        %443 = vmatpush1.msra.mxu0 0.0
        %444 = vmatprep.subr.mxu0 0.0
        %445 = vmatpush1.msra.mxu0 0.0
        %446 = vmatprep.subr.mxu0 0.0
        %447 = vmatpush1.msra.mxu0 0.0
        %448 = vmatprep.subr.mxu0 0.0
        %449 = vmatpush1.msra.mxu0 0.0
        %450 = vmatprep.subr.mxu0 0.0
        %451 = vmatpush1.msra.mxu0 0.0
        %452 = vmatprep.mubr.f32.mxu0 0.0
        %453 = vmatmul.mubr.f32.gmra.mrb[0].mxu0 %v386
        %v454 = vpop.f32.mrb[0].mxu0
        %v455 = vadd.f32 0.0, %v454
        %v456 = vpop.f32.mrb[0].mxu0
        %457 = vdwg.mxu0
        %459 = vset.pattern.permute.xlu0 0
        %460 = vperm.xlu0 %459, %v455
        %v461 = vpop.permute.xlu0 %460
        %v463 = vlaneseq
        %v464 = vshrl.u32 %v463, 7
        %v465 = vsub.s32 0, %v464
        %v466 = vrot.slane %v203, %v465
        %v467 = vmul.f32 %v461, %v466
        %v468 = vlaneseq
        %v469 = vshrl.u32 %v468, 7
        %v470 = vsub.s32 0, %v469
        %v471 = vrot.slane %v205, %v470
        %v472 = vadd.f32 %v471, %v467
        %473 = vset.pattern.permute.xlu0 1
        %474 = vperm.xlu0 %473, %v455
        %v475 = vpop.permute.xlu0 %474
        %v477 = vlaneseq
        %v478 = vshrl.u32 %v477, 7
        %v479 = vsub.s32 1, %v478
        %v480 = vrot.slane %v203, %v479
        %v481 = vmul.f32 %v475, %v480
        %v482 = vadd.f32 %v472, %v481
        %483 = vset.pattern.permute.xlu0 2
        %484 = vperm.xlu0 %483, %v455
        %v485 = vpop.permute.xlu0 %484
        %v487 = vlaneseq
        %v488 = vshrl.u32 %v487, 7
        %v489 = vsub.s32 2, %v488
        %v490 = vrot.slane %v203, %v489
        %v491 = vmul.f32 %v485, %v490
        %v492 = vadd.f32 %v482, %v491
        %493 = vset.pattern.permute.xlu0 3
        %494 = vperm.xlu0 %493, %v455
        %v495 = vpop.permute.xlu0 %494
        %v497 = vlaneseq
        %v498 = vshrl.u32 %v497, 7
        %v499 = vsub.s32 3, %v498
        %v500 = vrot.slane %v203, %v499
        %v501 = vmul.f32 %v495, %v500
        %v502 = vadd.f32 %v492, %v501
        %503 = vset.pattern.permute.xlu0 4
        %504 = vperm.xlu0 %503, %v455
        %v505 = vpop.permute.xlu0 %504
        %v507 = vlaneseq
        %v508 = vshrl.u32 %v507, 7
        %v509 = vsub.s32 4, %v508
        %v510 = vrot.slane %v203, %v509
        %v511 = vmul.f32 %v505, %v510
        %v512 = vadd.f32 %v502, %v511
        %513 = vset.pattern.permute.xlu0 5
        %514 = vperm.xlu0 %513, %v455
        %v515 = vpop.permute.xlu0 %514
        %v517 = vlaneseq
        %v518 = vshrl.u32 %v517, 7
        %v519 = vsub.s32 5, %v518
        %v520 = vrot.slane %v203, %v519
        %v521 = vmul.f32 %v515, %v520
        %v522 = vadd.f32 %v512, %v521
        %523 = vset.pattern.permute.xlu0 6
        %524 = vperm.xlu0 %523, %v455
        %v525 = vpop.permute.xlu0 %524
        %v527 = vlaneseq
        %v528 = vshrl.u32 %v527, 7
        %v529 = vsub.s32 6, %v528
        %v530 = vrot.slane %v203, %v529
        %v531 = vmul.f32 %v525, %v530
        %v532 = vadd.f32 %v522, %v531
        %533 = vset.pattern.permute.xlu0 7
        %534 = vperm.xlu0 %533, %v455
        %v535 = vpop.permute.xlu0 %534
        %v537 = vlaneseq
        %v538 = vshrl.u32 %v537, 7
        %v539 = vsub.s32 7, %v538
        %v540 = vrot.slane %v203, %v539
        %v541 = vmul.f32 %v535, %v540
        %v542 = vadd.f32 %v532, %v541
        %543 = vset.pattern.permute.xlu0 8
        %544 = vperm.xlu0 %543, %v455
        %v545 = vpop.permute.xlu0 %544
        %v547 = vlaneseq
        %v548 = vshrl.u32 %v547, 7
        %v549 = vsub.s32 0, %v548
        %v550 = vrot.slane %v204, %v549
        %v551 = vmul.f32 %v545, %v550
        %v552 = vadd.f32 %v542, %v551
        %553 = vset.pattern.permute.xlu0 9
        %554 = vperm.xlu0 %553, %v455
        %v555 = vpop.permute.xlu0 %554
        %v557 = vlaneseq
        %v558 = vshrl.u32 %v557, 7
        %v559 = vsub.s32 1, %v558
        %v560 = vrot.slane %v204, %v559
        %v561 = vmul.f32 %v555, %v560
        %v562 = vadd.f32 %v552, %v561
        %563 = vset.pattern.permute.xlu0 10
        %564 = vperm.xlu0 %563, %v455
        %v565 = vpop.permute.xlu0 %564
        %v567 = vlaneseq
        %v568 = vshrl.u32 %v567, 7
        %v569 = vsub.s32 2, %v568
        %v570 = vrot.slane %v204, %v569
        %v571 = vmul.f32 %v565, %v570
        %v572 = vadd.f32 %v562, %v571
        %573 = vset.pattern.permute.xlu0 11
        %574 = vperm.xlu0 %573, %v455
        %v575 = vpop.permute.xlu0 %574
        %v577 = vlaneseq
        %v578 = vshrl.u32 %v577, 7
        %v579 = vsub.s32 3, %v578
        %v580 = vrot.slane %v204, %v579
        %v581 = vmul.f32 %v575, %v580
        %v582 = vadd.f32 %v572, %v581
        %583 = vset.pattern.permute.xlu0 12
        %584 = vperm.xlu0 %583, %v455
        %v585 = vpop.permute.xlu0 %584
        %v587 = vlaneseq
        %v588 = vshrl.u32 %v587, 7
        %v589 = vsub.s32 4, %v588
        %v590 = vrot.slane %v204, %v589
        %v591 = vmul.f32 %v585, %v590
        %v592 = vadd.f32 %v582, %v591
        %593 = vset.pattern.permute.xlu0 13
        %594 = vperm.xlu0 %593, %v455
        %v595 = vpop.permute.xlu0 %594
        %v597 = vlaneseq
        %v598 = vshrl.u32 %v597, 7
        %v599 = vsub.s32 5, %v598
        %v600 = vrot.slane %v204, %v599
        %v601 = vmul.f32 %v595, %v600
        %v602 = vadd.f32 %v592, %v601
        %603 = vset.pattern.permute.xlu0 14
        %604 = vperm.xlu0 %603, %v455
        %v605 = vpop.permute.xlu0 %604
        %v607 = vlaneseq
        %v608 = vshrl.u32 %v607, 7
        %v609 = vsub.s32 6, %v608
        %v610 = vrot.slane %v204, %v609
        %v611 = vmul.f32 %v605, %v610
        %v612 = vadd.f32 %v602, %v611
        %613 = vset.pattern.permute.xlu0 15
        %614 = vperm.xlu0 %613, %v455
        %v615 = vpop.permute.xlu0 %614
        %v617 = vlaneseq
        %v618 = vshrl.u32 %v617, 7
        %v619 = vsub.s32 7, %v618
        %v620 = vrot.slane %v204, %v619
        %v621 = vmul.f32 %v615, %v620
        %v622 = vadd.f32 %v612, %v621
        %vm623 = vcmask 125952
        %v624 = vsel %vm623, %v622, -inf
        %625 = vmax.xlane.f32.xlu0 %v624
        %v626 = vpop.xlane.xlu0 %625
        %v627 = vsub.f32 %v622, %v626
        %v628 = vmul.f32 %v627, 1.442695
        %v629 = vpow.pop %v628
        %v630 = vsel %vm623, %v629, 0.0
        %631 = vadd.xlane.f32.xlu0 %v630
        %v632 = vpop.xlane.xlu0 %631
        %v633 = vlog2.pop %v632
        %v634 = vmul.f32 %v633, 0.6931472
        %v635 = vsub.f32 %v627, %v634
        %s636 = scalar_lea.vmem %s190, 32
        %v637 = vld [vmem:[%s636] sm:$0xff]
        %v638 = vld [vmem:[%s636 + $0x8] sm:$0xff]
        %v639 = vld [vmem:[%s636 + $0x10] sm:$0xff]
        %v640 = vld [vmem:[%s636 + $0x18] sm:$0xff]
        %s641 = scalar_lea.vmem %s197, 40
        %v642 = vld [vmem:[%s641] sm:$0xff]
        %v643 = vld [vmem:[%s641 + $0x8] sm:$0xff]
        %v644 = vld [vmem:[%s641 + $0x10] sm:$0xff]
        %v645 = vld [vmem:[%s641 + $0x18] sm:$0xff]
        %v646 = vld [vmem:[%s641 + $0x20] sm:$0xff]
        %648 = vset.pattern.permute.xlu0 1
        %649 = vperm.xlu0 %648, %v643
        %v650 = vpop.permute.xlu0 %649
        %653 = vset.pattern.permute.xlu0 1
        %654 = vperm.xlu0 %653, %v644
        %v655 = vpop.permute.xlu0 %654
        %658 = vset.pattern.permute.xlu0 1
        %659 = vperm.xlu0 %658, %v645
        %v660 = vpop.permute.xlu0 %659
        %663 = vset.pattern.permute.xlu0 1
        %664 = vperm.xlu0 %663, %v646
        %v665 = vpop.permute.xlu0 %664
        %v667 = vmul.f32 %v650, %v238
        %v668 = vmul.f32 %v655, %v238
        %v669 = vmul.f32 %v660, %v238
        %v670 = vmul.f32 %v665, %v238
        %v671 = vadd.f32 %v246, %v667
        %v672 = vadd.f32 %v246, %v668
        %v673 = vadd.f32 %v246, %v669
        %v674 = vadd.f32 %v246, %v670
        %675 = vset.pattern.permute.xlu0 2
        %676 = vperm.xlu0 %675, %v643
        %v677 = vpop.permute.xlu0 %676
        %679 = vset.pattern.permute.xlu0 2
        %680 = vperm.xlu0 %679, %v644
        %v681 = vpop.permute.xlu0 %680
        %683 = vset.pattern.permute.xlu0 2
        %684 = vperm.xlu0 %683, %v645
        %v685 = vpop.permute.xlu0 %684
        %687 = vset.pattern.permute.xlu0 2
        %688 = vperm.xlu0 %687, %v646
        %v689 = vpop.permute.xlu0 %688
        %v691 = vmul.f32 %v677, %v270
        %v692 = vmul.f32 %v681, %v270
        %v693 = vmul.f32 %v685, %v270
        %v694 = vmul.f32 %v689, %v270
        %v695 = vadd.f32 %v671, %v691
        %v696 = vadd.f32 %v672, %v692
        %v697 = vadd.f32 %v673, %v693
        %v698 = vadd.f32 %v674, %v694
        %v700 = vsel %vm283, %v637, 0
        %v703 = vsel %vm283, %v638, 0
        %v706 = vsel %vm283, %v639, 0
        %v709 = vsel %vm283, %v640, 0
        %711 = vmatprep.subr.mxu0 0.0
        %712 = vmatpush1.msra.mxu0 %v695
        %713 = vmatprep.subr.mxu0 0.0
        %714 = vmatpush1.msra.mxu0 %v696
        %715 = vmatprep.subr.mxu0 0.0
        %716 = vmatpush1.msra.mxu0 %v697
        %717 = vmatprep.subr.mxu0 0.0
        %718 = vmatpush1.msra.mxu0 %v698
        %719 = vmatprep.subr.mxu0 0.0
        %720 = vmatpush1.msra.mxu0 0.0
        %721 = vmatprep.subr.mxu0 0.0
        %722 = vmatpush1.msra.mxu0 0.0
        %723 = vmatprep.subr.mxu0 0.0
        %724 = vmatpush1.msra.mxu0 0.0
        %725 = vmatprep.subr.mxu0 0.0
        %726 = vmatpush1.msra.mxu0 0.0
        %727 = vmatprep.subr.mxu0 0.0
        %728 = vmatpush1.msra.mxu0 0.0
        %729 = vmatprep.subr.mxu0 0.0
        %730 = vmatpush1.msra.mxu0 0.0
        %731 = vmatprep.subr.mxu0 0.0
        %732 = vmatpush1.msra.mxu0 0.0
        %733 = vmatprep.subr.mxu0 0.0
        %734 = vmatpush1.msra.mxu0 0.0
        %735 = vmatprep.subr.mxu0 0.0
        %736 = vmatpush1.msra.mxu0 0.0
        %737 = vmatprep.subr.mxu0 0.0
        %738 = vmatpush1.msra.mxu0 0.0
        %739 = vmatprep.subr.mxu0 0.0
        %740 = vmatpush1.msra.mxu0 0.0
        %741 = vmatprep.subr.mxu0 0.0
        %742 = vmatpush1.msra.mxu0 0.0
        %743 = vmatprep.subr.mxu0 0.0
        %744 = vmatpush1.msra.mxu0 0.0
        %745 = vmatprep.subr.mxu0 0.0
        %746 = vmatpush1.msra.mxu0 0.0
        %747 = vmatprep.subr.mxu0 0.0
        %748 = vmatpush1.msra.mxu0 0.0
        %749 = vmatprep.subr.mxu0 0.0
        %750 = vmatpush1.msra.mxu0 0.0
        %751 = vmatprep.subr.mxu0 0.0
        %752 = vmatpush1.msra.mxu0 0.0
        %753 = vmatprep.subr.mxu0 0.0
        %754 = vmatpush1.msra.mxu0 0.0
        %755 = vmatprep.subr.mxu0 0.0
        %756 = vmatpush1.msra.mxu0 0.0
        %757 = vmatprep.subr.mxu0 0.0
        %758 = vmatpush1.msra.mxu0 0.0
        %759 = vmatprep.subr.mxu0 0.0
        %760 = vmatpush1.msra.mxu0 0.0
        %761 = vmatprep.subr.mxu0 0.0
        %762 = vmatpush1.msra.mxu0 0.0
        %763 = vmatprep.subr.mxu0 0.0
        %764 = vmatpush1.msra.mxu0 0.0
        %765 = vmatprep.subr.mxu0 0.0
        %766 = vmatpush1.msra.mxu0 0.0
        %767 = vmatprep.subr.mxu0 0.0
        %768 = vmatpush1.msra.mxu0 0.0
        %769 = vmatprep.subr.mxu0 0.0
        %770 = vmatpush1.msra.mxu0 0.0
        %771 = vmatprep.subr.mxu0 0.0
        %772 = vmatpush1.msra.mxu0 0.0
        %773 = vmatprep.subr.mxu0 0.0
        %774 = vmatpush1.msra.mxu0 0.0
        %775 = vmatprep.mubr.f32.mxu0 0.0
        %776 = vmatmul.mubr.f32.gmra.mrb[0].mxu0 %v700
        %v777 = vpop.f32.mrb[0].mxu0
        %v778 = vadd.f32 %v282, %v777
        %v779 = vpop.f32.mrb[0].mxu0
        %780 = vmatprep.mubr.f32.mxu0 0.0
        %781 = vmatmul.mubr.f32.gmra.mrb[0].mxu0 %v703
        %v782 = vpop.f32.mrb[0].mxu0
        %v783 = vadd.f32 %v282, %v782
        %v784 = vpop.f32.mrb[0].mxu0
        %785 = vmatprep.mubr.f32.mxu0 0.0
        %786 = vmatmul.mubr.f32.gmra.mrb[0].mxu0 %v706
        %v787 = vpop.f32.mrb[0].mxu0
        %v788 = vadd.f32 %v282, %v787
        %v789 = vpop.f32.mrb[0].mxu0
        %790 = vmatprep.mubr.f32.mxu0 0.0
        %791 = vmatmul.mubr.f32.gmra.mrb[0].mxu0 %v709
        %v792 = vpop.f32.mrb[0].mxu0
        %v793 = vadd.f32 %v282, %v792
        %v794 = vpop.f32.mrb[0].mxu0
        %795 = vdwg.mxu0
        %v796 = vmax.f32 %v778, 0.0
        %v797 = vmax.f32 %v783, 0.0
        %v798 = vmax.f32 %v788, 0.0
        %v799 = vmax.f32 %v793, 0.0
        %v801 = vsel %vm283, %v642, 0
        %803 = vmatprep.subr.mxu0 0.0
        %804 = vmatpush1.msra.mxu0 %v796
        %805 = vmatprep.subr.mxu0 0.0
        %806 = vmatpush1.msra.mxu0 %v797
        %807 = vmatprep.subr.mxu0 0.0
        %808 = vmatpush1.msra.mxu0 %v798
        %809 = vmatprep.subr.mxu0 0.0
        %810 = vmatpush1.msra.mxu0 %v799
        %811 = vmatprep.subr.mxu0 0.0
        %812 = vmatpush1.msra.mxu0 0.0
        %813 = vmatprep.subr.mxu0 0.0
        %814 = vmatpush1.msra.mxu0 0.0
        %815 = vmatprep.subr.mxu0 0.0
        %816 = vmatpush1.msra.mxu0 0.0
        %817 = vmatprep.subr.mxu0 0.0
        %818 = vmatpush1.msra.mxu0 0.0
        %819 = vmatprep.subr.mxu0 0.0
        %820 = vmatpush1.msra.mxu0 0.0
        %821 = vmatprep.subr.mxu0 0.0
        %822 = vmatpush1.msra.mxu0 0.0
        %823 = vmatprep.subr.mxu0 0.0
        %824 = vmatpush1.msra.mxu0 0.0
        %825 = vmatprep.subr.mxu0 0.0
        %826 = vmatpush1.msra.mxu0 0.0
        %827 = vmatprep.subr.mxu0 0.0
        %828 = vmatpush1.msra.mxu0 0.0
        %829 = vmatprep.subr.mxu0 0.0
        %830 = vmatpush1.msra.mxu0 0.0
        %831 = vmatprep.subr.mxu0 0.0
        %832 = vmatpush1.msra.mxu0 0.0
        %833 = vmatprep.subr.mxu0 0.0
        %834 = vmatpush1.msra.mxu0 0.0
        %835 = vmatprep.subr.mxu0 0.0
        %836 = vmatpush1.msra.mxu0 0.0
        %837 = vmatprep.subr.mxu0 0.0
        %838 = vmatpush1.msra.mxu0 0.0
        %839 = vmatprep.subr.mxu0 0.0
        %840 = vmatpush1.msra.mxu0 0.0
        %841 = vmatprep.subr.mxu0 0.0
        %842 = vmatpush1.msra.mxu0 0.0
        %843 = vmatprep.subr.mxu0 0.0
        %844 = vmatpush1.msra.mxu0 0.0
        %845 = vmatprep.subr.mxu0 0.0
        %846 = vmatpush1.msra.mxu0 0.0
        %847 = vmatprep.subr.mxu0 0.0
        %848 = vmatpush1.msra.mxu0 0.0
        %849 = vmatprep.subr.mxu0 0.0
        %850 = vmatpush1.msra.mxu0 0.0
        %851 = vmatprep.subr.mxu0 0.0
        %852 = vmatpush1.msra.mxu0 0.0
        %853 = vmatprep.subr.mxu0 0.0
        %854 = vmatpush1.msra.mxu0 0.0
        %855 = vmatprep.subr.mxu0 0.0
        %856 = vmatpush1.msra.mxu0 0.0
        %857 = vmatprep.subr.mxu0 0.0
        %858 = vmatpush1.msra.mxu0 0.0
        %859 = vmatprep.subr.mxu0 0.0
        %860 = vmatpush1.msra.mxu0 0.0
        %861 = vmatprep.subr.mxu0 0.0
        %862 = vmatpush1.msra.mxu0 0.0
        %863 = vmatprep.subr.mxu0 0.0
        %864 = vmatpush1.msra.mxu0 0.0
        %865 = vmatprep.subr.mxu0 0.0
        %866 = vmatpush1.msra.mxu0 0.0
        %867 = vmatprep.mubr.f32.mxu0 0.0
        %868 = vmatmul.mubr.f32.gmra.mrb[0].mxu0 %v801
        %v869 = vpop.f32.mrb[0].mxu0
        %v870 = vadd.f32 0.0, %v869
        %v871 = vpop.f32.mrb[0].mxu0
        %872 = vdwg.mxu0
        %874 = vset.pattern.permute.xlu0 0
        %875 = vperm.xlu0 %874, %v870
        %v876 = vpop.permute.xlu0 %875
        %v878 = vmul.f32 %v876, %v466
        %v879 = vadd.f32 %v471, %v878
        %880 = vset.pattern.permute.xlu0 1
        %881 = vperm.xlu0 %880, %v870
        %v882 = vpop.permute.xlu0 %881
        %v884 = vmul.f32 %v882, %v480
        %v885 = vadd.f32 %v879, %v884
        %886 = vset.pattern.permute.xlu0 2
        %887 = vperm.xlu0 %886, %v870
        %v888 = vpop.permute.xlu0 %887
        %v890 = vmul.f32 %v888, %v490
        %v891 = vadd.f32 %v885, %v890
        %892 = vset.pattern.permute.xlu0 3
        %893 = vperm.xlu0 %892, %v870
        %v894 = vpop.permute.xlu0 %893
        %v896 = vmul.f32 %v894, %v500
        %v897 = vadd.f32 %v891, %v896
        %898 = vset.pattern.permute.xlu0 4
        %899 = vperm.xlu0 %898, %v870
        %v900 = vpop.permute.xlu0 %899
        %v902 = vmul.f32 %v900, %v510
        %v903 = vadd.f32 %v897, %v902
        %904 = vset.pattern.permute.xlu0 5
        %905 = vperm.xlu0 %904, %v870
        %v906 = vpop.permute.xlu0 %905
        %v908 = vmul.f32 %v906, %v520
        %v909 = vadd.f32 %v903, %v908
        %910 = vset.pattern.permute.xlu0 6
        %911 = vperm.xlu0 %910, %v870
        %v912 = vpop.permute.xlu0 %911
        %v914 = vmul.f32 %v912, %v530
        %v915 = vadd.f32 %v909, %v914
        %916 = vset.pattern.permute.xlu0 7
        %917 = vperm.xlu0 %916, %v870
        %v918 = vpop.permute.xlu0 %917
        %v920 = vmul.f32 %v918, %v540
        %v921 = vadd.f32 %v915, %v920
        %922 = vset.pattern.permute.xlu0 8
        %923 = vperm.xlu0 %922, %v870
        %v924 = vpop.permute.xlu0 %923
        %v926 = vmul.f32 %v924, %v550
        %v927 = vadd.f32 %v921, %v926
        %928 = vset.pattern.permute.xlu0 9
        %929 = vperm.xlu0 %928, %v870
        %v930 = vpop.permute.xlu0 %929
        %v932 = vmul.f32 %v930, %v560
        %v933 = vadd.f32 %v927, %v932
        %934 = vset.pattern.permute.xlu0 10
        %935 = vperm.xlu0 %934, %v870
        %v936 = vpop.permute.xlu0 %935
        %v938 = vmul.f32 %v936, %v570
        %v939 = vadd.f32 %v933, %v938
        %940 = vset.pattern.permute.xlu0 11
        %941 = vperm.xlu0 %940, %v870
        %v942 = vpop.permute.xlu0 %941
        %v944 = vmul.f32 %v942, %v580
        %v945 = vadd.f32 %v939, %v944
        %946 = vset.pattern.permute.xlu0 12
        %947 = vperm.xlu0 %946, %v870
        %v948 = vpop.permute.xlu0 %947
        %v950 = vmul.f32 %v948, %v590
        %v951 = vadd.f32 %v945, %v950
        %952 = vset.pattern.permute.xlu0 13
        %953 = vperm.xlu0 %952, %v870
        %v954 = vpop.permute.xlu0 %953
        %v956 = vmul.f32 %v954, %v600
        %v957 = vadd.f32 %v951, %v956
        %958 = vset.pattern.permute.xlu0 14
        %959 = vperm.xlu0 %958, %v870
        %v960 = vpop.permute.xlu0 %959
        %v962 = vmul.f32 %v960, %v610
        %v963 = vadd.f32 %v957, %v962
        %964 = vset.pattern.permute.xlu0 15
        %965 = vperm.xlu0 %964, %v870
        %v966 = vpop.permute.xlu0 %965
        %v968 = vmul.f32 %v966, %v620
        %v969 = vadd.f32 %v963, %v968
        %v970 = vsel %vm623, %v969, -inf
        %971 = vmax.xlane.f32.xlu0 %v970
        %v972 = vpop.xlane.xlu0 %971
        %v973 = vsub.f32 %v969, %v972
        %v974 = vmul.f32 %v973, 1.442695
        %v975 = vpow.pop %v974
        %v976 = vsel %vm623, %v975, 0.0
        %977 = vadd.xlane.f32.xlu0 %v976
        %v978 = vpop.xlane.xlu0 %977
        %v979 = vlog2.pop %v978
        %v980 = vmul.f32 %v979, 0.6931472
        %v981 = vsub.f32 %v973, %v980
        %s982 = scalar_lea.vmem %s190, 64
        %v983 = vld [vmem:[%s982] sm:$0xff]
        %v984 = vld [vmem:[%s982 + $0x8] sm:$0xff]
        %v985 = vld [vmem:[%s982 + $0x10] sm:$0xff]
        %v986 = vld [vmem:[%s982 + $0x18] sm:$0xff]
        %s987 = scalar_lea.vmem %s197, 80
        %v988 = vld [vmem:[%s987] sm:$0xff]
        %v989 = vld [vmem:[%s987 + $0x8] sm:$0xff]
        %v990 = vld [vmem:[%s987 + $0x10] sm:$0xff]
        %v991 = vld [vmem:[%s987 + $0x18] sm:$0xff]
        %v992 = vld [vmem:[%s987 + $0x20] sm:$0xff]
        %994 = vset.pattern.permute.xlu0 1
        %995 = vperm.xlu0 %994, %v989
        %v996 = vpop.permute.xlu0 %995
        %999 = vset.pattern.permute.xlu0 1
        %1000 = vperm.xlu0 %999, %v990
        %v1001 = vpop.permute.xlu0 %1000
        %1004 = vset.pattern.permute.xlu0 1
        %1005 = vperm.xlu0 %1004, %v991
        %v1006 = vpop.permute.xlu0 %1005
        %1009 = vset.pattern.permute.xlu0 1
        %1010 = vperm.xlu0 %1009, %v992
        %v1011 = vpop.permute.xlu0 %1010
        %v1013 = vmul.f32 %v996, %v238
        %v1014 = vmul.f32 %v1001, %v238
        %v1015 = vmul.f32 %v1006, %v238
        %v1016 = vmul.f32 %v1011, %v238
        %v1017 = vadd.f32 %v246, %v1013
        %v1018 = vadd.f32 %v246, %v1014
        %v1019 = vadd.f32 %v246, %v1015
        %v1020 = vadd.f32 %v246, %v1016
        %1021 = vset.pattern.permute.xlu0 2
        %1022 = vperm.xlu0 %1021, %v989
        %v1023 = vpop.permute.xlu0 %1022
        %1025 = vset.pattern.permute.xlu0 2
        %1026 = vperm.xlu0 %1025, %v990
        %v1027 = vpop.permute.xlu0 %1026
        %1029 = vset.pattern.permute.xlu0 2
        %1030 = vperm.xlu0 %1029, %v991
        %v1031 = vpop.permute.xlu0 %1030
        %1033 = vset.pattern.permute.xlu0 2
        %1034 = vperm.xlu0 %1033, %v992
        %v1035 = vpop.permute.xlu0 %1034
        %v1037 = vmul.f32 %v1023, %v270
        %v1038 = vmul.f32 %v1027, %v270
        %v1039 = vmul.f32 %v1031, %v270
        %v1040 = vmul.f32 %v1035, %v270
        %v1041 = vadd.f32 %v1017, %v1037
        %v1042 = vadd.f32 %v1018, %v1038
        %v1043 = vadd.f32 %v1019, %v1039
        %v1044 = vadd.f32 %v1020, %v1040
        %v1046 = vsel %vm283, %v983, 0
        %v1049 = vsel %vm283, %v984, 0
        %v1052 = vsel %vm283, %v985, 0
        %v1055 = vsel %vm283, %v986, 0
        %1057 = vmatprep.subr.mxu0 0.0
        %1058 = vmatpush1.msra.mxu0 %v1041
        %1059 = vmatprep.subr.mxu0 0.0
        %1060 = vmatpush1.msra.mxu0 %v1042
        %1061 = vmatprep.subr.mxu0 0.0
        %1062 = vmatpush1.msra.mxu0 %v1043
        %1063 = vmatprep.subr.mxu0 0.0
        %1064 = vmatpush1.msra.mxu0 %v1044
        %1065 = vmatprep.subr.mxu0 0.0
        %1066 = vmatpush1.msra.mxu0 0.0
        %1067 = vmatprep.subr.mxu0 0.0
        %1068 = vmatpush1.msra.mxu0 0.0
        %1069 = vmatprep.subr.mxu0 0.0
        %1070 = vmatpush1.msra.mxu0 0.0
        %1071 = vmatprep.subr.mxu0 0.0
        %1072 = vmatpush1.msra.mxu0 0.0
        %1073 = vmatprep.subr.mxu0 0.0
        %1074 = vmatpush1.msra.mxu0 0.0
        %1075 = vmatprep.subr.mxu0 0.0
        %1076 = vmatpush1.msra.mxu0 0.0
        %1077 = vmatprep.subr.mxu0 0.0
        %1078 = vmatpush1.msra.mxu0 0.0
        %1079 = vmatprep.subr.mxu0 0.0
        %1080 = vmatpush1.msra.mxu0 0.0
        %1081 = vmatprep.subr.mxu0 0.0
        %1082 = vmatpush1.msra.mxu0 0.0
        %1083 = vmatprep.subr.mxu0 0.0
        %1084 = vmatpush1.msra.mxu0 0.0
        %1085 = vmatprep.subr.mxu0 0.0
        %1086 = vmatpush1.msra.mxu0 0.0
        %1087 = vmatprep.subr.mxu0 0.0
        %1088 = vmatpush1.msra.mxu0 0.0
        %1089 = vmatprep.subr.mxu0 0.0
        %1090 = vmatpush1.msra.mxu0 0.0
        %1091 = vmatprep.subr.mxu0 0.0
        %1092 = vmatpush1.msra.mxu0 0.0
        %1093 = vmatprep.subr.mxu0 0.0
        %1094 = vmatpush1.msra.mxu0 0.0
        %1095 = vmatprep.subr.mxu0 0.0
        %1096 = vmatpush1.msra.mxu0 0.0
        %1097 = vmatprep.subr.mxu0 0.0
        %1098 = vmatpush1.msra.mxu0 0.0
        %1099 = vmatprep.subr.mxu0 0.0
        %1100 = vmatpush1.msra.mxu0 0.0
        %1101 = vmatprep.subr.mxu0 0.0
        %1102 = vmatpush1.msra.mxu0 0.0
        %1103 = vmatprep.subr.mxu0 0.0
        %1104 = vmatpush1.msra.mxu0 0.0
        %1105 = vmatprep.subr.mxu0 0.0
        %1106 = vmatpush1.msra.mxu0 0.0
        %1107 = vmatprep.subr.mxu0 0.0
        %1108 = vmatpush1.msra.mxu0 0.0
        %1109 = vmatprep.subr.mxu0 0.0
        %1110 = vmatpush1.msra.mxu0 0.0
        %1111 = vmatprep.subr.mxu0 0.0
        %1112 = vmatpush1.msra.mxu0 0.0
        %1113 = vmatprep.subr.mxu0 0.0
        %1114 = vmatpush1.msra.mxu0 0.0
        %1115 = vmatprep.subr.mxu0 0.0
        %1116 = vmatpush1.msra.mxu0 0.0
        %1117 = vmatprep.subr.mxu0 0.0
        %1118 = vmatpush1.msra.mxu0 0.0
        %1119 = vmatprep.subr.mxu0 0.0
        %1120 = vmatpush1.msra.mxu0 0.0
        %1121 = vmatprep.mubr.f32.mxu0 0.0
        %1122 = vmatmul.mubr.f32.gmra.mrb[0].mxu0 %v1046
        %v1123 = vpop.f32.mrb[0].mxu0
        %v1124 = vadd.f32 %v282, %v1123
        %v1125 = vpop.f32.mrb[0].mxu0
        %1126 = vmatprep.mubr.f32.mxu0 0.0
        %1127 = vmatmul.mubr.f32.gmra.mrb[0].mxu0 %v1049
        %v1128 = vpop.f32.mrb[0].mxu0
        %v1129 = vadd.f32 %v282, %v1128
        %v1130 = vpop.f32.mrb[0].mxu0
        %1131 = vmatprep.mubr.f32.mxu0 0.0
        %1132 = vmatmul.mubr.f32.gmra.mrb[0].mxu0 %v1052
        %v1133 = vpop.f32.mrb[0].mxu0
        %v1134 = vadd.f32 %v282, %v1133
        %v1135 = vpop.f32.mrb[0].mxu0
        %1136 = vmatprep.mubr.f32.mxu0 0.0
        %1137 = vmatmul.mubr.f32.gmra.mrb[0].mxu0 %v1055
        %v1138 = vpop.f32.mrb[0].mxu0
        %v1139 = vadd.f32 %v282, %v1138
        %v1140 = vpop.f32.mrb[0].mxu0
        %1141 = vdwg.mxu0
        %v1142 = vmax.f32 %v1124, 0.0
        %v1143 = vmax.f32 %v1129, 0.0
        %v1144 = vmax.f32 %v1134, 0.0
        %v1145 = vmax.f32 %v1139, 0.0
        %v1147 = vsel %vm283, %v988, 0
        %1149 = vmatprep.subr.mxu0 0.0
        %1150 = vmatpush1.msra.mxu0 %v1142
        %1151 = vmatprep.subr.mxu0 0.0
        %1152 = vmatpush1.msra.mxu0 %v1143
        %1153 = vmatprep.subr.mxu0 0.0
        %1154 = vmatpush1.msra.mxu0 %v1144
        %1155 = vmatprep.subr.mxu0 0.0
        %1156 = vmatpush1.msra.mxu0 %v1145
        %1157 = vmatprep.subr.mxu0 0.0
        %1158 = vmatpush1.msra.mxu0 0.0
        %1159 = vmatprep.subr.mxu0 0.0
        %1160 = vmatpush1.msra.mxu0 0.0
        %1161 = vmatprep.subr.mxu0 0.0
        %1162 = vmatpush1.msra.mxu0 0.0
        %1163 = vmatprep.subr.mxu0 0.0
        %1164 = vmatpush1.msra.mxu0 0.0
        %1165 = vmatprep.subr.mxu0 0.0
        %1166 = vmatpush1.msra.mxu0 0.0
        %1167 = vmatprep.subr.mxu0 0.0
        %1168 = vmatpush1.msra.mxu0 0.0
        %1169 = vmatprep.subr.mxu0 0.0
        %1170 = vmatpush1.msra.mxu0 0.0
        %1171 = vmatprep.subr.mxu0 0.0
        %1172 = vmatpush1.msra.mxu0 0.0
        %1173 = vmatprep.subr.mxu0 0.0
        %1174 = vmatpush1.msra.mxu0 0.0
        %1175 = vmatprep.subr.mxu0 0.0
        %1176 = vmatpush1.msra.mxu0 0.0
        %1177 = vmatprep.subr.mxu0 0.0
        %1178 = vmatpush1.msra.mxu0 0.0
        %1179 = vmatprep.subr.mxu0 0.0
        %1180 = vmatpush1.msra.mxu0 0.0
        %1181 = vmatprep.subr.mxu0 0.0
        %1182 = vmatpush1.msra.mxu0 0.0
        %1183 = vmatprep.subr.mxu0 0.0
        %1184 = vmatpush1.msra.mxu0 0.0
        %1185 = vmatprep.subr.mxu0 0.0
        %1186 = vmatpush1.msra.mxu0 0.0
        %1187 = vmatprep.subr.mxu0 0.0
        %1188 = vmatpush1.msra.mxu0 0.0
        %1189 = vmatprep.subr.mxu0 0.0
        %1190 = vmatpush1.msra.mxu0 0.0
        %1191 = vmatprep.subr.mxu0 0.0
        %1192 = vmatpush1.msra.mxu0 0.0
        %1193 = vmatprep.subr.mxu0 0.0
        %1194 = vmatpush1.msra.mxu0 0.0
        %1195 = vmatprep.subr.mxu0 0.0
        %1196 = vmatpush1.msra.mxu0 0.0
        %1197 = vmatprep.subr.mxu0 0.0
        %1198 = vmatpush1.msra.mxu0 0.0
        %1199 = vmatprep.subr.mxu0 0.0
        %1200 = vmatpush1.msra.mxu0 0.0
        %1201 = vmatprep.subr.mxu0 0.0
        %1202 = vmatpush1.msra.mxu0 0.0
        %1203 = vmatprep.subr.mxu0 0.0
        %1204 = vmatpush1.msra.mxu0 0.0
        %1205 = vmatprep.subr.mxu0 0.0
        %1206 = vmatpush1.msra.mxu0 0.0
        %1207 = vmatprep.subr.mxu0 0.0
        %1208 = vmatpush1.msra.mxu0 0.0
        %1209 = vmatprep.subr.mxu0 0.0
        %1210 = vmatpush1.msra.mxu0 0.0
        %1211 = vmatprep.subr.mxu0 0.0
        %1212 = vmatpush1.msra.mxu0 0.0
        %1213 = vmatprep.mubr.f32.mxu0 0.0
        %1214 = vmatmul.mubr.f32.gmra.mrb[0].mxu0 %v1147
        %v1215 = vpop.f32.mrb[0].mxu0
        %v1216 = vadd.f32 0.0, %v1215
        %v1217 = vpop.f32.mrb[0].mxu0
        %1218 = vdwg.mxu0
        %1220 = vset.pattern.permute.xlu0 0
        %1221 = vperm.xlu0 %1220, %v1216
        %v1222 = vpop.permute.xlu0 %1221
        %v1224 = vmul.f32 %v1222, %v466
        %v1225 = vadd.f32 %v471, %v1224
        %1226 = vset.pattern.permute.xlu0 1
        %1227 = vperm.xlu0 %1226, %v1216
        %v1228 = vpop.permute.xlu0 %1227
        %v1230 = vmul.f32 %v1228, %v480
        %v1231 = vadd.f32 %v1225, %v1230
        %1232 = vset.pattern.permute.xlu0 2
        %1233 = vperm.xlu0 %1232, %v1216
        %v1234 = vpop.permute.xlu0 %1233
        %v1236 = vmul.f32 %v1234, %v490
        %v1237 = vadd.f32 %v1231, %v1236
        %1238 = vset.pattern.permute.xlu0 3
        %1239 = vperm.xlu0 %1238, %v1216
        %v1240 = vpop.permute.xlu0 %1239
        %v1242 = vmul.f32 %v1240, %v500
        %v1243 = vadd.f32 %v1237, %v1242
        %1244 = vset.pattern.permute.xlu0 4
        %1245 = vperm.xlu0 %1244, %v1216
        %v1246 = vpop.permute.xlu0 %1245
        %v1248 = vmul.f32 %v1246, %v510
        %v1249 = vadd.f32 %v1243, %v1248
        %1250 = vset.pattern.permute.xlu0 5
        %1251 = vperm.xlu0 %1250, %v1216
        %v1252 = vpop.permute.xlu0 %1251
        %v1254 = vmul.f32 %v1252, %v520
        %v1255 = vadd.f32 %v1249, %v1254
        %1256 = vset.pattern.permute.xlu0 6
        %1257 = vperm.xlu0 %1256, %v1216
        %v1258 = vpop.permute.xlu0 %1257
        %v1260 = vmul.f32 %v1258, %v530
        %v1261 = vadd.f32 %v1255, %v1260
        %1262 = vset.pattern.permute.xlu0 7
        %1263 = vperm.xlu0 %1262, %v1216
        %v1264 = vpop.permute.xlu0 %1263
        %v1266 = vmul.f32 %v1264, %v540
        %v1267 = vadd.f32 %v1261, %v1266
        %1268 = vset.pattern.permute.xlu0 8
        %1269 = vperm.xlu0 %1268, %v1216
        %v1270 = vpop.permute.xlu0 %1269
        %v1272 = vmul.f32 %v1270, %v550
        %v1273 = vadd.f32 %v1267, %v1272
        %1274 = vset.pattern.permute.xlu0 9
        %1275 = vperm.xlu0 %1274, %v1216
        %v1276 = vpop.permute.xlu0 %1275
        %v1278 = vmul.f32 %v1276, %v560
        %v1279 = vadd.f32 %v1273, %v1278
        %1280 = vset.pattern.permute.xlu0 10
        %1281 = vperm.xlu0 %1280, %v1216
        %v1282 = vpop.permute.xlu0 %1281
        %v1284 = vmul.f32 %v1282, %v570
        %v1285 = vadd.f32 %v1279, %v1284
        %1286 = vset.pattern.permute.xlu0 11
        %1287 = vperm.xlu0 %1286, %v1216
        %v1288 = vpop.permute.xlu0 %1287
        %v1290 = vmul.f32 %v1288, %v580
        %v1291 = vadd.f32 %v1285, %v1290
        %1292 = vset.pattern.permute.xlu0 12
        %1293 = vperm.xlu0 %1292, %v1216
        %v1294 = vpop.permute.xlu0 %1293
        %v1296 = vmul.f32 %v1294, %v590
        %v1297 = vadd.f32 %v1291, %v1296
        %1298 = vset.pattern.permute.xlu0 13
        %1299 = vperm.xlu0 %1298, %v1216
        %v1300 = vpop.permute.xlu0 %1299
        %v1302 = vmul.f32 %v1300, %v600
        %v1303 = vadd.f32 %v1297, %v1302
        %1304 = vset.pattern.permute.xlu0 14
        %1305 = vperm.xlu0 %1304, %v1216
        %v1306 = vpop.permute.xlu0 %1305
        %v1308 = vmul.f32 %v1306, %v610
        %v1309 = vadd.f32 %v1303, %v1308
        %1310 = vset.pattern.permute.xlu0 15
        %1311 = vperm.xlu0 %1310, %v1216
        %v1312 = vpop.permute.xlu0 %1311
        %v1314 = vmul.f32 %v1312, %v620
        %v1315 = vadd.f32 %v1309, %v1314
        %v1316 = vsel %vm623, %v1315, -inf
        %1317 = vmax.xlane.f32.xlu0 %v1316
        %v1318 = vpop.xlane.xlu0 %1317
        %v1319 = vsub.f32 %v1315, %v1318
        %v1320 = vmul.f32 %v1319, 1.442695
        %v1321 = vpow.pop %v1320
        %v1322 = vsel %vm623, %v1321, 0.0
        %1323 = vadd.xlane.f32.xlu0 %v1322
        %v1324 = vpop.xlane.xlu0 %1323
        %v1325 = vlog2.pop %v1324
        %v1326 = vmul.f32 %v1325, 0.6931472
        %v1327 = vsub.f32 %v1319, %v1326
        %s1328 = scalar_lea.vmem %s190, 96
        %v1329 = vld [vmem:[%s1328] sm:$0xff]
        %v1330 = vld [vmem:[%s1328 + $0x8] sm:$0xff]
        %v1331 = vld [vmem:[%s1328 + $0x10] sm:$0xff]
        %v1332 = vld [vmem:[%s1328 + $0x18] sm:$0xff]
        %s1333 = scalar_lea.vmem %s197, 120
        %v1334 = vld [vmem:[%s1333] sm:$0xff]
        %v1335 = vld [vmem:[%s1333 + $0x8] sm:$0xff]
        %v1336 = vld [vmem:[%s1333 + $0x10] sm:$0xff]
        %v1337 = vld [vmem:[%s1333 + $0x18] sm:$0xff]
        %v1338 = vld [vmem:[%s1333 + $0x20] sm:$0xff]
        %1340 = vset.pattern.permute.xlu0 1
        %1341 = vperm.xlu0 %1340, %v1335
        %v1342 = vpop.permute.xlu0 %1341
        %1345 = vset.pattern.permute.xlu0 1
        %1346 = vperm.xlu0 %1345, %v1336
        %v1347 = vpop.permute.xlu0 %1346
        %1350 = vset.pattern.permute.xlu0 1
        %1351 = vperm.xlu0 %1350, %v1337
        %v1352 = vpop.permute.xlu0 %1351
        %1355 = vset.pattern.permute.xlu0 1
        %1356 = vperm.xlu0 %1355, %v1338
        %v1357 = vpop.permute.xlu0 %1356
        %v1359 = vmul.f32 %v1342, %v238
        %v1360 = vmul.f32 %v1347, %v238
        %v1361 = vmul.f32 %v1352, %v238
        %v1362 = vmul.f32 %v1357, %v238
        %v1363 = vadd.f32 %v246, %v1359
        %v1364 = vadd.f32 %v246, %v1360
        %v1365 = vadd.f32 %v246, %v1361
        %v1366 = vadd.f32 %v246, %v1362
        %1367 = vset.pattern.permute.xlu0 2
        %1368 = vperm.xlu0 %1367, %v1335
        %v1369 = vpop.permute.xlu0 %1368
        %1371 = vset.pattern.permute.xlu0 2
        %1372 = vperm.xlu0 %1371, %v1336
        %v1373 = vpop.permute.xlu0 %1372
        %1375 = vset.pattern.permute.xlu0 2
        %1376 = vperm.xlu0 %1375, %v1337
        %v1377 = vpop.permute.xlu0 %1376
        %1379 = vset.pattern.permute.xlu0 2
        %1380 = vperm.xlu0 %1379, %v1338
        %v1381 = vpop.permute.xlu0 %1380
        %v1383 = vmul.f32 %v1369, %v270
        %v1384 = vmul.f32 %v1373, %v270
        %v1385 = vmul.f32 %v1377, %v270
        %v1386 = vmul.f32 %v1381, %v270
        %v1387 = vadd.f32 %v1363, %v1383
        %v1388 = vadd.f32 %v1364, %v1384
        %v1389 = vadd.f32 %v1365, %v1385
        %v1390 = vadd.f32 %v1366, %v1386
        %v1392 = vsel %vm283, %v1329, 0
        %v1395 = vsel %vm283, %v1330, 0
        %v1398 = vsel %vm283, %v1331, 0
        %v1401 = vsel %vm283, %v1332, 0
        %1403 = vmatprep.subr.mxu0 0.0
        %1404 = vmatpush1.msra.mxu0 %v1387
        %1405 = vmatprep.subr.mxu0 0.0
        %1406 = vmatpush1.msra.mxu0 %v1388
        %1407 = vmatprep.subr.mxu0 0.0
        %1408 = vmatpush1.msra.mxu0 %v1389
        %1409 = vmatprep.subr.mxu0 0.0
        %1410 = vmatpush1.msra.mxu0 %v1390
        %1411 = vmatprep.subr.mxu0 0.0
        %1412 = vmatpush1.msra.mxu0 0.0
        %1413 = vmatprep.subr.mxu0 0.0
        %1414 = vmatpush1.msra.mxu0 0.0
        %1415 = vmatprep.subr.mxu0 0.0
        %1416 = vmatpush1.msra.mxu0 0.0
        %1417 = vmatprep.subr.mxu0 0.0
        %1418 = vmatpush1.msra.mxu0 0.0
        %1419 = vmatprep.subr.mxu0 0.0
        %1420 = vmatpush1.msra.mxu0 0.0
        %1421 = vmatprep.subr.mxu0 0.0
        %1422 = vmatpush1.msra.mxu0 0.0
        %1423 = vmatprep.subr.mxu0 0.0
        %1424 = vmatpush1.msra.mxu0 0.0
        %1425 = vmatprep.subr.mxu0 0.0
        %1426 = vmatpush1.msra.mxu0 0.0
        %1427 = vmatprep.subr.mxu0 0.0
        %1428 = vmatpush1.msra.mxu0 0.0
        %1429 = vmatprep.subr.mxu0 0.0
        %1430 = vmatpush1.msra.mxu0 0.0
        %1431 = vmatprep.subr.mxu0 0.0
        %1432 = vmatpush1.msra.mxu0 0.0
        %1433 = vmatprep.subr.mxu0 0.0
        %1434 = vmatpush1.msra.mxu0 0.0
        %1435 = vmatprep.subr.mxu0 0.0
        %1436 = vmatpush1.msra.mxu0 0.0
        %1437 = vmatprep.subr.mxu0 0.0
        %1438 = vmatpush1.msra.mxu0 0.0
        %1439 = vmatprep.subr.mxu0 0.0
        %1440 = vmatpush1.msra.mxu0 0.0
        %1441 = vmatprep.subr.mxu0 0.0
        %1442 = vmatpush1.msra.mxu0 0.0
        %1443 = vmatprep.subr.mxu0 0.0
        %1444 = vmatpush1.msra.mxu0 0.0
        %1445 = vmatprep.subr.mxu0 0.0
        %1446 = vmatpush1.msra.mxu0 0.0
        %1447 = vmatprep.subr.mxu0 0.0
        %1448 = vmatpush1.msra.mxu0 0.0
        %1449 = vmatprep.subr.mxu0 0.0
        %1450 = vmatpush1.msra.mxu0 0.0
        %1451 = vmatprep.subr.mxu0 0.0
        %1452 = vmatpush1.msra.mxu0 0.0
        %1453 = vmatprep.subr.mxu0 0.0
        %1454 = vmatpush1.msra.mxu0 0.0
        %1455 = vmatprep.subr.mxu0 0.0
        %1456 = vmatpush1.msra.mxu0 0.0
        %1457 = vmatprep.subr.mxu0 0.0
        %1458 = vmatpush1.msra.mxu0 0.0
        %1459 = vmatprep.subr.mxu0 0.0
        %1460 = vmatpush1.msra.mxu0 0.0
        %1461 = vmatprep.subr.mxu0 0.0
        %1462 = vmatpush1.msra.mxu0 0.0
        %1463 = vmatprep.subr.mxu0 0.0
        %1464 = vmatpush1.msra.mxu0 0.0
        %1465 = vmatprep.subr.mxu0 0.0
        %1466 = vmatpush1.msra.mxu0 0.0
        %1467 = vmatprep.mubr.f32.mxu0 0.0
        %1468 = vmatmul.mubr.f32.gmra.mrb[0].mxu0 %v1392
        %v1469 = vpop.f32.mrb[0].mxu0
        %v1470 = vadd.f32 %v282, %v1469
        %v1471 = vpop.f32.mrb[0].mxu0
        %1472 = vmatprep.mubr.f32.mxu0 0.0
        %1473 = vmatmul.mubr.f32.gmra.mrb[0].mxu0 %v1395
        %v1474 = vpop.f32.mrb[0].mxu0
        %v1475 = vadd.f32 %v282, %v1474
        %v1476 = vpop.f32.mrb[0].mxu0
        %1477 = vmatprep.mubr.f32.mxu0 0.0
        %1478 = vmatmul.mubr.f32.gmra.mrb[0].mxu0 %v1398
        %v1479 = vpop.f32.mrb[0].mxu0
        %v1480 = vadd.f32 %v282, %v1479
        %v1481 = vpop.f32.mrb[0].mxu0
        %1482 = vmatprep.mubr.f32.mxu0 0.0
        %1483 = vmatmul.mubr.f32.gmra.mrb[0].mxu0 %v1401
        %v1484 = vpop.f32.mrb[0].mxu0
        %v1485 = vadd.f32 %v282, %v1484
        %v1486 = vpop.f32.mrb[0].mxu0
        %1487 = vdwg.mxu0
        %v1488 = vmax.f32 %v1470, 0.0
        %v1489 = vmax.f32 %v1475, 0.0
        %v1490 = vmax.f32 %v1480, 0.0
        %v1491 = vmax.f32 %v1485, 0.0
        %v1493 = vsel %vm283, %v1334, 0
        %1495 = vmatprep.subr.mxu0 0.0
        %1496 = vmatpush1.msra.mxu0 %v1488
        %1497 = vmatprep.subr.mxu0 0.0
        %1498 = vmatpush1.msra.mxu0 %v1489
        %1499 = vmatprep.subr.mxu0 0.0
        %1500 = vmatpush1.msra.mxu0 %v1490
        %1501 = vmatprep.subr.mxu0 0.0
        %1502 = vmatpush1.msra.mxu0 %v1491
        %1503 = vmatprep.subr.mxu0 0.0
        %1504 = vmatpush1.msra.mxu0 0.0
        %1505 = vmatprep.subr.mxu0 0.0
        %1506 = vmatpush1.msra.mxu0 0.0
        %1507 = vmatprep.subr.mxu0 0.0
        %1508 = vmatpush1.msra.mxu0 0.0
        %1509 = vmatprep.subr.mxu0 0.0
        %1510 = vmatpush1.msra.mxu0 0.0
        %1511 = vmatprep.subr.mxu0 0.0
        %1512 = vmatpush1.msra.mxu0 0.0
        %1513 = vmatprep.subr.mxu0 0.0
        %1514 = vmatpush1.msra.mxu0 0.0
        %1515 = vmatprep.subr.mxu0 0.0
        %1516 = vmatpush1.msra.mxu0 0.0
        %1517 = vmatprep.subr.mxu0 0.0
        %1518 = vmatpush1.msra.mxu0 0.0
        %1519 = vmatprep.subr.mxu0 0.0
        %1520 = vmatpush1.msra.mxu0 0.0
        %1521 = vmatprep.subr.mxu0 0.0
        %1522 = vmatpush1.msra.mxu0 0.0
        %1523 = vmatprep.subr.mxu0 0.0
        %1524 = vmatpush1.msra.mxu0 0.0
        %1525 = vmatprep.subr.mxu0 0.0
        %1526 = vmatpush1.msra.mxu0 0.0
        %1527 = vmatprep.subr.mxu0 0.0
        %1528 = vmatpush1.msra.mxu0 0.0
        %1529 = vmatprep.subr.mxu0 0.0
        %1530 = vmatpush1.msra.mxu0 0.0
        %1531 = vmatprep.subr.mxu0 0.0
        %1532 = vmatpush1.msra.mxu0 0.0
        %1533 = vmatprep.subr.mxu0 0.0
        %1534 = vmatpush1.msra.mxu0 0.0
        %1535 = vmatprep.subr.mxu0 0.0
        %1536 = vmatpush1.msra.mxu0 0.0
        %1537 = vmatprep.subr.mxu0 0.0
        %1538 = vmatpush1.msra.mxu0 0.0
        %1539 = vmatprep.subr.mxu0 0.0
        %1540 = vmatpush1.msra.mxu0 0.0
        %1541 = vmatprep.subr.mxu0 0.0
        %1542 = vmatpush1.msra.mxu0 0.0
        %1543 = vmatprep.subr.mxu0 0.0
        %1544 = vmatpush1.msra.mxu0 0.0
        %1545 = vmatprep.subr.mxu0 0.0
        %1546 = vmatpush1.msra.mxu0 0.0
        %1547 = vmatprep.subr.mxu0 0.0
        %1548 = vmatpush1.msra.mxu0 0.0
        %1549 = vmatprep.subr.mxu0 0.0
        %1550 = vmatpush1.msra.mxu0 0.0
        %1551 = vmatprep.subr.mxu0 0.0
        %1552 = vmatpush1.msra.mxu0 0.0
        %1553 = vmatprep.subr.mxu0 0.0
        %1554 = vmatpush1.msra.mxu0 0.0
        %1555 = vmatprep.subr.mxu0 0.0
        %1556 = vmatpush1.msra.mxu0 0.0
        %1557 = vmatprep.subr.mxu0 0.0
        %1558 = vmatpush1.msra.mxu0 0.0
        %1559 = vmatprep.mubr.f32.mxu0 0.0
        %1560 = vmatmul.mubr.f32.gmra.mrb[0].mxu0 %v1493
        %v1561 = vpop.f32.mrb[0].mxu0
        %v1562 = vadd.f32 0.0, %v1561
        %v1563 = vpop.f32.mrb[0].mxu0
        %1564 = vdwg.mxu0
        %1566 = vset.pattern.permute.xlu0 0
        %1567 = vperm.xlu0 %1566, %v1562
        %v1568 = vpop.permute.xlu0 %1567
        %v1570 = vmul.f32 %v1568, %v466
        %v1571 = vadd.f32 %v471, %v1570
        %1572 = vset.pattern.permute.xlu0 1
        %1573 = vperm.xlu0 %1572, %v1562
        %v1574 = vpop.permute.xlu0 %1573
        %v1576 = vmul.f32 %v1574, %v480
        %v1577 = vadd.f32 %v1571, %v1576
        %1578 = vset.pattern.permute.xlu0 2
        %1579 = vperm.xlu0 %1578, %v1562
        %v1580 = vpop.permute.xlu0 %1579
        %v1582 = vmul.f32 %v1580, %v490
        %v1583 = vadd.f32 %v1577, %v1582
        %1584 = vset.pattern.permute.xlu0 3
        %1585 = vperm.xlu0 %1584, %v1562
        %v1586 = vpop.permute.xlu0 %1585
        %v1588 = vmul.f32 %v1586, %v500
        %v1589 = vadd.f32 %v1583, %v1588
        %1590 = vset.pattern.permute.xlu0 4
        %1591 = vperm.xlu0 %1590, %v1562
        %v1592 = vpop.permute.xlu0 %1591
        %v1594 = vmul.f32 %v1592, %v510
        %v1595 = vadd.f32 %v1589, %v1594
        %1596 = vset.pattern.permute.xlu0 5
        %1597 = vperm.xlu0 %1596, %v1562
        %v1598 = vpop.permute.xlu0 %1597
        %v1600 = vmul.f32 %v1598, %v520
        %v1601 = vadd.f32 %v1595, %v1600
        %1602 = vset.pattern.permute.xlu0 6
        %1603 = vperm.xlu0 %1602, %v1562
        %v1604 = vpop.permute.xlu0 %1603
        %v1606 = vmul.f32 %v1604, %v530
        %v1607 = vadd.f32 %v1601, %v1606
        %1608 = vset.pattern.permute.xlu0 7
        %1609 = vperm.xlu0 %1608, %v1562
        %v1610 = vpop.permute.xlu0 %1609
        %v1612 = vmul.f32 %v1610, %v540
        %v1613 = vadd.f32 %v1607, %v1612
        %1614 = vset.pattern.permute.xlu0 8
        %1615 = vperm.xlu0 %1614, %v1562
        %v1616 = vpop.permute.xlu0 %1615
        %v1618 = vmul.f32 %v1616, %v550
        %v1619 = vadd.f32 %v1613, %v1618
        %1620 = vset.pattern.permute.xlu0 9
        %1621 = vperm.xlu0 %1620, %v1562
        %v1622 = vpop.permute.xlu0 %1621
        %v1624 = vmul.f32 %v1622, %v560
        %v1625 = vadd.f32 %v1619, %v1624
        %1626 = vset.pattern.permute.xlu0 10
        %1627 = vperm.xlu0 %1626, %v1562
        %v1628 = vpop.permute.xlu0 %1627
        %v1630 = vmul.f32 %v1628, %v570
        %v1631 = vadd.f32 %v1625, %v1630
        %1632 = vset.pattern.permute.xlu0 11
        %1633 = vperm.xlu0 %1632, %v1562
        %v1634 = vpop.permute.xlu0 %1633
        %v1636 = vmul.f32 %v1634, %v580
        %v1637 = vadd.f32 %v1631, %v1636
        %1638 = vset.pattern.permute.xlu0 12
        %1639 = vperm.xlu0 %1638, %v1562
        %v1640 = vpop.permute.xlu0 %1639
        %v1642 = vmul.f32 %v1640, %v590
        %v1643 = vadd.f32 %v1637, %v1642
        %1644 = vset.pattern.permute.xlu0 13
        %1645 = vperm.xlu0 %1644, %v1562
        %v1646 = vpop.permute.xlu0 %1645
        %v1648 = vmul.f32 %v1646, %v600
        %v1649 = vadd.f32 %v1643, %v1648
        %1650 = vset.pattern.permute.xlu0 14
        %1651 = vperm.xlu0 %1650, %v1562
        %v1652 = vpop.permute.xlu0 %1651
        %v1654 = vmul.f32 %v1652, %v610
        %v1655 = vadd.f32 %v1649, %v1654
        %1656 = vset.pattern.permute.xlu0 15
        %1657 = vperm.xlu0 %1656, %v1562
        %v1658 = vpop.permute.xlu0 %1657
        %v1660 = vmul.f32 %v1658, %v620
        %v1661 = vadd.f32 %v1655, %v1660
        %v1662 = vsel %vm623, %v1661, -inf
        %1663 = vmax.xlane.f32.xlu0 %v1662
        %v1664 = vpop.xlane.xlu0 %1663
        %v1665 = vsub.f32 %v1661, %v1664
        %v1666 = vmul.f32 %v1665, 1.442695
        %v1667 = vpow.pop %v1666
        %v1668 = vsel %vm623, %v1667, 0.0
        %1669 = vadd.xlane.f32.xlu0 %v1668
        %v1670 = vpop.xlane.xlu0 %1669
        %v1671 = vlog2.pop %v1670
        %v1672 = vmul.f32 %v1671, 0.6931472
        %v1673 = vsub.f32 %v1665, %v1672
        %s1674 = scalar_lea.vmem %s190, 128
        %v1675 = vld [vmem:[%s1674] sm:$0xff]
        %v1676 = vld [vmem:[%s1674 + $0x8] sm:$0xff]
        %v1677 = vld [vmem:[%s1674 + $0x10] sm:$0xff]
        %v1678 = vld [vmem:[%s1674 + $0x18] sm:$0xff]
        %s1679 = scalar_lea.vmem %s197, 160
        %v1680 = vld [vmem:[%s1679] sm:$0xff]
        %v1681 = vld [vmem:[%s1679 + $0x8] sm:$0xff]
        %v1682 = vld [vmem:[%s1679 + $0x10] sm:$0xff]
        %v1683 = vld [vmem:[%s1679 + $0x18] sm:$0xff]
        %v1684 = vld [vmem:[%s1679 + $0x20] sm:$0xff]
        %1686 = vset.pattern.permute.xlu0 1
        %1687 = vperm.xlu0 %1686, %v1681
        %v1688 = vpop.permute.xlu0 %1687
        %1691 = vset.pattern.permute.xlu0 1
        %1692 = vperm.xlu0 %1691, %v1682
        %v1693 = vpop.permute.xlu0 %1692
        %1696 = vset.pattern.permute.xlu0 1
        %1697 = vperm.xlu0 %1696, %v1683
        %v1698 = vpop.permute.xlu0 %1697
        %1701 = vset.pattern.permute.xlu0 1
        %1702 = vperm.xlu0 %1701, %v1684
        %v1703 = vpop.permute.xlu0 %1702
        %v1705 = vmul.f32 %v1688, %v238
        %v1706 = vmul.f32 %v1693, %v238
        %v1707 = vmul.f32 %v1698, %v238
        %v1708 = vmul.f32 %v1703, %v238
        %v1709 = vadd.f32 %v246, %v1705
        %v1710 = vadd.f32 %v246, %v1706
        %v1711 = vadd.f32 %v246, %v1707
        %v1712 = vadd.f32 %v246, %v1708
        %1713 = vset.pattern.permute.xlu0 2
        %1714 = vperm.xlu0 %1713, %v1681
        %v1715 = vpop.permute.xlu0 %1714
        %1717 = vset.pattern.permute.xlu0 2
        %1718 = vperm.xlu0 %1717, %v1682
        %v1719 = vpop.permute.xlu0 %1718
        %1721 = vset.pattern.permute.xlu0 2
        %1722 = vperm.xlu0 %1721, %v1683
        %v1723 = vpop.permute.xlu0 %1722
        %1725 = vset.pattern.permute.xlu0 2
        %1726 = vperm.xlu0 %1725, %v1684
        %v1727 = vpop.permute.xlu0 %1726
        %v1729 = vmul.f32 %v1715, %v270
        %v1730 = vmul.f32 %v1719, %v270
        %v1731 = vmul.f32 %v1723, %v270
        %v1732 = vmul.f32 %v1727, %v270
        %v1733 = vadd.f32 %v1709, %v1729
        %v1734 = vadd.f32 %v1710, %v1730
        %v1735 = vadd.f32 %v1711, %v1731
        %v1736 = vadd.f32 %v1712, %v1732
        %v1738 = vsel %vm283, %v1675, 0
        %v1741 = vsel %vm283, %v1676, 0
        %v1744 = vsel %vm283, %v1677, 0
        %v1747 = vsel %vm283, %v1678, 0
        %1749 = vmatprep.subr.mxu0 0.0
        %1750 = vmatpush1.msra.mxu0 %v1733
        %1751 = vmatprep.subr.mxu0 0.0
        %1752 = vmatpush1.msra.mxu0 %v1734
        %1753 = vmatprep.subr.mxu0 0.0
        %1754 = vmatpush1.msra.mxu0 %v1735
        %1755 = vmatprep.subr.mxu0 0.0
        %1756 = vmatpush1.msra.mxu0 %v1736
        %1757 = vmatprep.subr.mxu0 0.0
        %1758 = vmatpush1.msra.mxu0 0.0
        %1759 = vmatprep.subr.mxu0 0.0
        %1760 = vmatpush1.msra.mxu0 0.0
        %1761 = vmatprep.subr.mxu0 0.0
        %1762 = vmatpush1.msra.mxu0 0.0
        %1763 = vmatprep.subr.mxu0 0.0
        %1764 = vmatpush1.msra.mxu0 0.0
        %1765 = vmatprep.subr.mxu0 0.0
        %1766 = vmatpush1.msra.mxu0 0.0
        %1767 = vmatprep.subr.mxu0 0.0
        %1768 = vmatpush1.msra.mxu0 0.0
        %1769 = vmatprep.subr.mxu0 0.0
        %1770 = vmatpush1.msra.mxu0 0.0
        %1771 = vmatprep.subr.mxu0 0.0
        %1772 = vmatpush1.msra.mxu0 0.0
        %1773 = vmatprep.subr.mxu0 0.0
        %1774 = vmatpush1.msra.mxu0 0.0
        %1775 = vmatprep.subr.mxu0 0.0
        %1776 = vmatpush1.msra.mxu0 0.0
        %1777 = vmatprep.subr.mxu0 0.0
        %1778 = vmatpush1.msra.mxu0 0.0
        %1779 = vmatprep.subr.mxu0 0.0
        %1780 = vmatpush1.msra.mxu0 0.0
        %1781 = vmatprep.subr.mxu0 0.0
        %1782 = vmatpush1.msra.mxu0 0.0
        %1783 = vmatprep.subr.mxu0 0.0
        %1784 = vmatpush1.msra.mxu0 0.0
        %1785 = vmatprep.subr.mxu0 0.0
        %1786 = vmatpush1.msra.mxu0 0.0
        %1787 = vmatprep.subr.mxu0 0.0
        %1788 = vmatpush1.msra.mxu0 0.0
        %1789 = vmatprep.subr.mxu0 0.0
        %1790 = vmatpush1.msra.mxu0 0.0
        %1791 = vmatprep.subr.mxu0 0.0
        %1792 = vmatpush1.msra.mxu0 0.0
        %1793 = vmatprep.subr.mxu0 0.0
        %1794 = vmatpush1.msra.mxu0 0.0
        %1795 = vmatprep.subr.mxu0 0.0
        %1796 = vmatpush1.msra.mxu0 0.0
        %1797 = vmatprep.subr.mxu0 0.0
        %1798 = vmatpush1.msra.mxu0 0.0
        %1799 = vmatprep.subr.mxu0 0.0
        %1800 = vmatpush1.msra.mxu0 0.0
        %1801 = vmatprep.subr.mxu0 0.0
        %1802 = vmatpush1.msra.mxu0 0.0
        %1803 = vmatprep.subr.mxu0 0.0
        %1804 = vmatpush1.msra.mxu0 0.0
        %1805 = vmatprep.subr.mxu0 0.0
        %1806 = vmatpush1.msra.mxu0 0.0
        %1807 = vmatprep.subr.mxu0 0.0
        %1808 = vmatpush1.msra.mxu0 0.0
        %1809 = vmatprep.subr.mxu0 0.0
        %1810 = vmatpush1.msra.mxu0 0.0
        %1811 = vmatprep.subr.mxu0 0.0
        %1812 = vmatpush1.msra.mxu0 0.0
        %1813 = vmatprep.mubr.f32.mxu0 0.0
        %1814 = vmatmul.mubr.f32.gmra.mrb[0].mxu0 %v1738
        %v1815 = vpop.f32.mrb[0].mxu0
        %v1816 = vadd.f32 %v282, %v1815
        %v1817 = vpop.f32.mrb[0].mxu0
        %1818 = vmatprep.mubr.f32.mxu0 0.0
        %1819 = vmatmul.mubr.f32.gmra.mrb[0].mxu0 %v1741
        %v1820 = vpop.f32.mrb[0].mxu0
        %v1821 = vadd.f32 %v282, %v1820
        %v1822 = vpop.f32.mrb[0].mxu0
        %1823 = vmatprep.mubr.f32.mxu0 0.0
        %1824 = vmatmul.mubr.f32.gmra.mrb[0].mxu0 %v1744
        %v1825 = vpop.f32.mrb[0].mxu0
        %v1826 = vadd.f32 %v282, %v1825
        %v1827 = vpop.f32.mrb[0].mxu0
        %1828 = vmatprep.mubr.f32.mxu0 0.0
        %1829 = vmatmul.mubr.f32.gmra.mrb[0].mxu0 %v1747
        %v1830 = vpop.f32.mrb[0].mxu0
        %v1831 = vadd.f32 %v282, %v1830
        %v1832 = vpop.f32.mrb[0].mxu0
        %1833 = vdwg.mxu0
        %v1834 = vmax.f32 %v1816, 0.0
        %v1835 = vmax.f32 %v1821, 0.0
        %v1836 = vmax.f32 %v1826, 0.0
        %v1837 = vmax.f32 %v1831, 0.0
        %v1839 = vsel %vm283, %v1680, 0
        %1841 = vmatprep.subr.mxu0 0.0
        %1842 = vmatpush1.msra.mxu0 %v1834
        %1843 = vmatprep.subr.mxu0 0.0
        %1844 = vmatpush1.msra.mxu0 %v1835
        %1845 = vmatprep.subr.mxu0 0.0
        %1846 = vmatpush1.msra.mxu0 %v1836
        %1847 = vmatprep.subr.mxu0 0.0
        %1848 = vmatpush1.msra.mxu0 %v1837
        %1849 = vmatprep.subr.mxu0 0.0
        %1850 = vmatpush1.msra.mxu0 0.0
        %1851 = vmatprep.subr.mxu0 0.0
        %1852 = vmatpush1.msra.mxu0 0.0
        %1853 = vmatprep.subr.mxu0 0.0
        %1854 = vmatpush1.msra.mxu0 0.0
        %1855 = vmatprep.subr.mxu0 0.0
        %1856 = vmatpush1.msra.mxu0 0.0
        %1857 = vmatprep.subr.mxu0 0.0
        %1858 = vmatpush1.msra.mxu0 0.0
        %1859 = vmatprep.subr.mxu0 0.0
        %1860 = vmatpush1.msra.mxu0 0.0
        %1861 = vmatprep.subr.mxu0 0.0
        %1862 = vmatpush1.msra.mxu0 0.0
        %1863 = vmatprep.subr.mxu0 0.0
        %1864 = vmatpush1.msra.mxu0 0.0
        %1865 = vmatprep.subr.mxu0 0.0
        %1866 = vmatpush1.msra.mxu0 0.0
        %1867 = vmatprep.subr.mxu0 0.0
        %1868 = vmatpush1.msra.mxu0 0.0
        %1869 = vmatprep.subr.mxu0 0.0
        %1870 = vmatpush1.msra.mxu0 0.0
        %1871 = vmatprep.subr.mxu0 0.0
        %1872 = vmatpush1.msra.mxu0 0.0
        %1873 = vmatprep.subr.mxu0 0.0
        %1874 = vmatpush1.msra.mxu0 0.0
        %1875 = vmatprep.subr.mxu0 0.0
        %1876 = vmatpush1.msra.mxu0 0.0
        %1877 = vmatprep.subr.mxu0 0.0
        %1878 = vmatpush1.msra.mxu0 0.0
        %1879 = vmatprep.subr.mxu0 0.0
        %1880 = vmatpush1.msra.mxu0 0.0
        %1881 = vmatprep.subr.mxu0 0.0
        %1882 = vmatpush1.msra.mxu0 0.0
        %1883 = vmatprep.subr.mxu0 0.0
        %1884 = vmatpush1.msra.mxu0 0.0
        %1885 = vmatprep.subr.mxu0 0.0
        %1886 = vmatpush1.msra.mxu0 0.0
        %1887 = vmatprep.subr.mxu0 0.0
        %1888 = vmatpush1.msra.mxu0 0.0
        %1889 = vmatprep.subr.mxu0 0.0
        %1890 = vmatpush1.msra.mxu0 0.0
        %1891 = vmatprep.subr.mxu0 0.0
        %1892 = vmatpush1.msra.mxu0 0.0
        %1893 = vmatprep.subr.mxu0 0.0
        %1894 = vmatpush1.msra.mxu0 0.0
        %1895 = vmatprep.subr.mxu0 0.0
        %1896 = vmatpush1.msra.mxu0 0.0
        %1897 = vmatprep.subr.mxu0 0.0
        %1898 = vmatpush1.msra.mxu0 0.0
        %1899 = vmatprep.subr.mxu0 0.0
        %1900 = vmatpush1.msra.mxu0 0.0
        %1901 = vmatprep.subr.mxu0 0.0
        %1902 = vmatpush1.msra.mxu0 0.0
        %1903 = vmatprep.subr.mxu0 0.0
        %1904 = vmatpush1.msra.mxu0 0.0
        %1905 = vmatprep.mubr.f32.mxu0 0.0
        %1906 = vmatmul.mubr.f32.gmra.mrb[0].mxu0 %v1839
        %v1907 = vpop.f32.mrb[0].mxu0
        %v1908 = vadd.f32 0.0, %v1907
        %v1909 = vpop.f32.mrb[0].mxu0
        %1910 = vdwg.mxu0
        %1912 = vset.pattern.permute.xlu0 0
        %1913 = vperm.xlu0 %1912, %v1908
        %v1914 = vpop.permute.xlu0 %1913
        %v1916 = vmul.f32 %v1914, %v466
        %v1917 = vadd.f32 %v471, %v1916
        %1918 = vset.pattern.permute.xlu0 1
        %1919 = vperm.xlu0 %1918, %v1908
        %v1920 = vpop.permute.xlu0 %1919
        %v1922 = vmul.f32 %v1920, %v480
        %v1923 = vadd.f32 %v1917, %v1922
        %1924 = vset.pattern.permute.xlu0 2
        %1925 = vperm.xlu0 %1924, %v1908
        %v1926 = vpop.permute.xlu0 %1925
        %v1928 = vmul.f32 %v1926, %v490
        %v1929 = vadd.f32 %v1923, %v1928
        %1930 = vset.pattern.permute.xlu0 3
        %1931 = vperm.xlu0 %1930, %v1908
        %v1932 = vpop.permute.xlu0 %1931
        %v1934 = vmul.f32 %v1932, %v500
        %v1935 = vadd.f32 %v1929, %v1934
        %1936 = vset.pattern.permute.xlu0 4
        %1937 = vperm.xlu0 %1936, %v1908
        %v1938 = vpop.permute.xlu0 %1937
        %v1940 = vmul.f32 %v1938, %v510
        %v1941 = vadd.f32 %v1935, %v1940
        %1942 = vset.pattern.permute.xlu0 5
        %1943 = vperm.xlu0 %1942, %v1908
        %v1944 = vpop.permute.xlu0 %1943
        %v1946 = vmul.f32 %v1944, %v520
        %v1947 = vadd.f32 %v1941, %v1946
        %1948 = vset.pattern.permute.xlu0 6
        %1949 = vperm.xlu0 %1948, %v1908
        %v1950 = vpop.permute.xlu0 %1949
        %v1952 = vmul.f32 %v1950, %v530
        %v1953 = vadd.f32 %v1947, %v1952
        %1954 = vset.pattern.permute.xlu0 7
        %1955 = vperm.xlu0 %1954, %v1908
        %v1956 = vpop.permute.xlu0 %1955
        %v1958 = vmul.f32 %v1956, %v540
        %v1959 = vadd.f32 %v1953, %v1958
        %1960 = vset.pattern.permute.xlu0 8
        %1961 = vperm.xlu0 %1960, %v1908
        %v1962 = vpop.permute.xlu0 %1961
        %v1964 = vmul.f32 %v1962, %v550
        %v1965 = vadd.f32 %v1959, %v1964
        %1966 = vset.pattern.permute.xlu0 9
        %1967 = vperm.xlu0 %1966, %v1908
        %v1968 = vpop.permute.xlu0 %1967
        %v1970 = vmul.f32 %v1968, %v560
        %v1971 = vadd.f32 %v1965, %v1970
        %1972 = vset.pattern.permute.xlu0 10
        %1973 = vperm.xlu0 %1972, %v1908
        %v1974 = vpop.permute.xlu0 %1973
        %v1976 = vmul.f32 %v1974, %v570
        %v1977 = vadd.f32 %v1971, %v1976
        %1978 = vset.pattern.permute.xlu0 11
        %1979 = vperm.xlu0 %1978, %v1908
        %v1980 = vpop.permute.xlu0 %1979
        %v1982 = vmul.f32 %v1980, %v580
        %v1983 = vadd.f32 %v1977, %v1982
        %1984 = vset.pattern.permute.xlu0 12
        %1985 = vperm.xlu0 %1984, %v1908
        %v1986 = vpop.permute.xlu0 %1985
        %v1988 = vmul.f32 %v1986, %v590
        %v1989 = vadd.f32 %v1983, %v1988
        %1990 = vset.pattern.permute.xlu0 13
        %1991 = vperm.xlu0 %1990, %v1908
        %v1992 = vpop.permute.xlu0 %1991
        %v1994 = vmul.f32 %v1992, %v600
        %v1995 = vadd.f32 %v1989, %v1994
        %1996 = vset.pattern.permute.xlu0 14
        %1997 = vperm.xlu0 %1996, %v1908
        %v1998 = vpop.permute.xlu0 %1997
        %v2000 = vmul.f32 %v1998, %v610
        %v2001 = vadd.f32 %v1995, %v2000
        %2002 = vset.pattern.permute.xlu0 15
        %2003 = vperm.xlu0 %2002, %v1908
        %v2004 = vpop.permute.xlu0 %2003
        %v2006 = vmul.f32 %v2004, %v620
        %v2007 = vadd.f32 %v2001, %v2006
        %v2008 = vsel %vm623, %v2007, -inf
        %2009 = vmax.xlane.f32.xlu0 %v2008
        %v2010 = vpop.xlane.xlu0 %2009
        %v2011 = vsub.f32 %v2007, %v2010
        %v2012 = vmul.f32 %v2011, 1.442695
        %v2013 = vpow.pop %v2012
        %v2014 = vsel %vm623, %v2013, 0.0
        %2015 = vadd.xlane.f32.xlu0 %v2014
        %v2016 = vpop.xlane.xlu0 %2015
        %v2017 = vlog2.pop %v2016
        %v2018 = vmul.f32 %v2017, 0.6931472
        %v2019 = vsub.f32 %v2011, %v2018
        %s2020 = scalar_lea.vmem %s190, 160
        %v2021 = vld [vmem:[%s2020] sm:$0xff]
        %v2022 = vld [vmem:[%s2020 + $0x8] sm:$0xff]
        %v2023 = vld [vmem:[%s2020 + $0x10] sm:$0xff]
        %v2024 = vld [vmem:[%s2020 + $0x18] sm:$0xff]
        %s2025 = scalar_lea.vmem %s197, 200
        %v2026 = vld [vmem:[%s2025] sm:$0xff]
        %v2027 = vld [vmem:[%s2025 + $0x8] sm:$0xff]
        %v2028 = vld [vmem:[%s2025 + $0x10] sm:$0xff]
        %v2029 = vld [vmem:[%s2025 + $0x18] sm:$0xff]
        %v2030 = vld [vmem:[%s2025 + $0x20] sm:$0xff]
        %2032 = vset.pattern.permute.xlu0 1
        %2033 = vperm.xlu0 %2032, %v2027
        %v2034 = vpop.permute.xlu0 %2033
        %2037 = vset.pattern.permute.xlu0 1
        %2038 = vperm.xlu0 %2037, %v2028
        %v2039 = vpop.permute.xlu0 %2038
        %2042 = vset.pattern.permute.xlu0 1
        %2043 = vperm.xlu0 %2042, %v2029
        %v2044 = vpop.permute.xlu0 %2043
        %2047 = vset.pattern.permute.xlu0 1
        %2048 = vperm.xlu0 %2047, %v2030
        %v2049 = vpop.permute.xlu0 %2048
        %v2051 = vmul.f32 %v2034, %v238
        %v2052 = vmul.f32 %v2039, %v238
        %v2053 = vmul.f32 %v2044, %v238
        %v2054 = vmul.f32 %v2049, %v238
        %v2055 = vadd.f32 %v246, %v2051
        %v2056 = vadd.f32 %v246, %v2052
        %v2057 = vadd.f32 %v246, %v2053
        %v2058 = vadd.f32 %v246, %v2054
        %2059 = vset.pattern.permute.xlu0 2
        %2060 = vperm.xlu0 %2059, %v2027
        %v2061 = vpop.permute.xlu0 %2060
        %2063 = vset.pattern.permute.xlu0 2
        %2064 = vperm.xlu0 %2063, %v2028
        %v2065 = vpop.permute.xlu0 %2064
        %2067 = vset.pattern.permute.xlu0 2
        %2068 = vperm.xlu0 %2067, %v2029
        %v2069 = vpop.permute.xlu0 %2068
        %2071 = vset.pattern.permute.xlu0 2
        %2072 = vperm.xlu0 %2071, %v2030
        %v2073 = vpop.permute.xlu0 %2072
        %v2075 = vmul.f32 %v2061, %v270
        %v2076 = vmul.f32 %v2065, %v270
        %v2077 = vmul.f32 %v2069, %v270
        %v2078 = vmul.f32 %v2073, %v270
        %v2079 = vadd.f32 %v2055, %v2075
        %v2080 = vadd.f32 %v2056, %v2076
        %v2081 = vadd.f32 %v2057, %v2077
        %v2082 = vadd.f32 %v2058, %v2078
        %v2084 = vsel %vm283, %v2021, 0
        %v2087 = vsel %vm283, %v2022, 0
        %v2090 = vsel %vm283, %v2023, 0
        %v2093 = vsel %vm283, %v2024, 0
        %2095 = vmatprep.subr.mxu0 0.0
        %2096 = vmatpush1.msra.mxu0 %v2079
        %2097 = vmatprep.subr.mxu0 0.0
        %2098 = vmatpush1.msra.mxu0 %v2080
        %2099 = vmatprep.subr.mxu0 0.0
        %2100 = vmatpush1.msra.mxu0 %v2081
        %2101 = vmatprep.subr.mxu0 0.0
        %2102 = vmatpush1.msra.mxu0 %v2082
        %2103 = vmatprep.subr.mxu0 0.0
        %2104 = vmatpush1.msra.mxu0 0.0
        %2105 = vmatprep.subr.mxu0 0.0
        %2106 = vmatpush1.msra.mxu0 0.0
        %2107 = vmatprep.subr.mxu0 0.0
        %2108 = vmatpush1.msra.mxu0 0.0
        %2109 = vmatprep.subr.mxu0 0.0
        %2110 = vmatpush1.msra.mxu0 0.0
        %2111 = vmatprep.subr.mxu0 0.0
        %2112 = vmatpush1.msra.mxu0 0.0
        %2113 = vmatprep.subr.mxu0 0.0
        %2114 = vmatpush1.msra.mxu0 0.0
        %2115 = vmatprep.subr.mxu0 0.0
        %2116 = vmatpush1.msra.mxu0 0.0
        %2117 = vmatprep.subr.mxu0 0.0
        %2118 = vmatpush1.msra.mxu0 0.0
        %2119 = vmatprep.subr.mxu0 0.0
        %2120 = vmatpush1.msra.mxu0 0.0
        %2121 = vmatprep.subr.mxu0 0.0
        %2122 = vmatpush1.msra.mxu0 0.0
        %2123 = vmatprep.subr.mxu0 0.0
        %2124 = vmatpush1.msra.mxu0 0.0
        %2125 = vmatprep.subr.mxu0 0.0
        %2126 = vmatpush1.msra.mxu0 0.0
        %2127 = vmatprep.subr.mxu0 0.0
        %2128 = vmatpush1.msra.mxu0 0.0
        %2129 = vmatprep.subr.mxu0 0.0
        %2130 = vmatpush1.msra.mxu0 0.0
        %2131 = vmatprep.subr.mxu0 0.0
        %2132 = vmatpush1.msra.mxu0 0.0
        %2133 = vmatprep.subr.mxu0 0.0
        %2134 = vmatpush1.msra.mxu0 0.0
        %2135 = vmatprep.subr.mxu0 0.0
        %2136 = vmatpush1.msra.mxu0 0.0
        %2137 = vmatprep.subr.mxu0 0.0
        %2138 = vmatpush1.msra.mxu0 0.0
        %2139 = vmatprep.subr.mxu0 0.0
        %2140 = vmatpush1.msra.mxu0 0.0
        %2141 = vmatprep.subr.mxu0 0.0
        %2142 = vmatpush1.msra.mxu0 0.0
        %2143 = vmatprep.subr.mxu0 0.0
        %2144 = vmatpush1.msra.mxu0 0.0
        %2145 = vmatprep.subr.mxu0 0.0
        %2146 = vmatpush1.msra.mxu0 0.0
        %2147 = vmatprep.subr.mxu0 0.0
        %2148 = vmatpush1.msra.mxu0 0.0
        %2149 = vmatprep.subr.mxu0 0.0
        %2150 = vmatpush1.msra.mxu0 0.0
        %2151 = vmatprep.subr.mxu0 0.0
        %2152 = vmatpush1.msra.mxu0 0.0
        %2153 = vmatprep.subr.mxu0 0.0
        %2154 = vmatpush1.msra.mxu0 0.0
        %2155 = vmatprep.subr.mxu0 0.0
        %2156 = vmatpush1.msra.mxu0 0.0
        %2157 = vmatprep.subr.mxu0 0.0
        %2158 = vmatpush1.msra.mxu0 0.0
        %2159 = vmatprep.mubr.f32.mxu0 0.0
        %2160 = vmatmul.mubr.f32.gmra.mrb[0].mxu0 %v2084
        %v2161 = vpop.f32.mrb[0].mxu0
        %v2162 = vadd.f32 %v282, %v2161
        %v2163 = vpop.f32.mrb[0].mxu0
        %2164 = vmatprep.mubr.f32.mxu0 0.0
        %2165 = vmatmul.mubr.f32.gmra.mrb[0].mxu0 %v2087
        %v2166 = vpop.f32.mrb[0].mxu0
        %v2167 = vadd.f32 %v282, %v2166
        %v2168 = vpop.f32.mrb[0].mxu0
        %2169 = vmatprep.mubr.f32.mxu0 0.0
        %2170 = vmatmul.mubr.f32.gmra.mrb[0].mxu0 %v2090
        %v2171 = vpop.f32.mrb[0].mxu0
        %v2172 = vadd.f32 %v282, %v2171
        %v2173 = vpop.f32.mrb[0].mxu0
        %2174 = vmatprep.mubr.f32.mxu0 0.0
        %2175 = vmatmul.mubr.f32.gmra.mrb[0].mxu0 %v2093
        %v2176 = vpop.f32.mrb[0].mxu0
        %v2177 = vadd.f32 %v282, %v2176
        %v2178 = vpop.f32.mrb[0].mxu0
        %2179 = vdwg.mxu0
        %v2180 = vmax.f32 %v2162, 0.0
        %v2181 = vmax.f32 %v2167, 0.0
        %v2182 = vmax.f32 %v2172, 0.0
        %v2183 = vmax.f32 %v2177, 0.0
        %v2185 = vsel %vm283, %v2026, 0
        %2187 = vmatprep.subr.mxu0 0.0
        %2188 = vmatpush1.msra.mxu0 %v2180
        %2189 = vmatprep.subr.mxu0 0.0
        %2190 = vmatpush1.msra.mxu0 %v2181
        %2191 = vmatprep.subr.mxu0 0.0
        %2192 = vmatpush1.msra.mxu0 %v2182
        %2193 = vmatprep.subr.mxu0 0.0
        %2194 = vmatpush1.msra.mxu0 %v2183
        %2195 = vmatprep.subr.mxu0 0.0
        %2196 = vmatpush1.msra.mxu0 0.0
        %2197 = vmatprep.subr.mxu0 0.0
        %2198 = vmatpush1.msra.mxu0 0.0
        %2199 = vmatprep.subr.mxu0 0.0
        %2200 = vmatpush1.msra.mxu0 0.0
        %2201 = vmatprep.subr.mxu0 0.0
        %2202 = vmatpush1.msra.mxu0 0.0
        %2203 = vmatprep.subr.mxu0 0.0
        %2204 = vmatpush1.msra.mxu0 0.0
        %2205 = vmatprep.subr.mxu0 0.0
        %2206 = vmatpush1.msra.mxu0 0.0
        %2207 = vmatprep.subr.mxu0 0.0
        %2208 = vmatpush1.msra.mxu0 0.0
        %2209 = vmatprep.subr.mxu0 0.0
        %2210 = vmatpush1.msra.mxu0 0.0
        %2211 = vmatprep.subr.mxu0 0.0
        %2212 = vmatpush1.msra.mxu0 0.0
        %2213 = vmatprep.subr.mxu0 0.0
        %2214 = vmatpush1.msra.mxu0 0.0
        %2215 = vmatprep.subr.mxu0 0.0
        %2216 = vmatpush1.msra.mxu0 0.0
        %2217 = vmatprep.subr.mxu0 0.0
        %2218 = vmatpush1.msra.mxu0 0.0
        %2219 = vmatprep.subr.mxu0 0.0
        %2220 = vmatpush1.msra.mxu0 0.0
        %2221 = vmatprep.subr.mxu0 0.0
        %2222 = vmatpush1.msra.mxu0 0.0
        %2223 = vmatprep.subr.mxu0 0.0
        %2224 = vmatpush1.msra.mxu0 0.0
        %2225 = vmatprep.subr.mxu0 0.0
        %2226 = vmatpush1.msra.mxu0 0.0
        %2227 = vmatprep.subr.mxu0 0.0
        %2228 = vmatpush1.msra.mxu0 0.0
        %2229 = vmatprep.subr.mxu0 0.0
        %2230 = vmatpush1.msra.mxu0 0.0
        %2231 = vmatprep.subr.mxu0 0.0
        %2232 = vmatpush1.msra.mxu0 0.0
        %2233 = vmatprep.subr.mxu0 0.0
        %2234 = vmatpush1.msra.mxu0 0.0
        %2235 = vmatprep.subr.mxu0 0.0
        %2236 = vmatpush1.msra.mxu0 0.0
        %2237 = vmatprep.subr.mxu0 0.0
        %2238 = vmatpush1.msra.mxu0 0.0
        %2239 = vmatprep.subr.mxu0 0.0
        %2240 = vmatpush1.msra.mxu0 0.0
        %2241 = vmatprep.subr.mxu0 0.0
        %2242 = vmatpush1.msra.mxu0 0.0
        %2243 = vmatprep.subr.mxu0 0.0
        %2244 = vmatpush1.msra.mxu0 0.0
        %2245 = vmatprep.subr.mxu0 0.0
        %2246 = vmatpush1.msra.mxu0 0.0
        %2247 = vmatprep.subr.mxu0 0.0
        %2248 = vmatpush1.msra.mxu0 0.0
        %2249 = vmatprep.subr.mxu0 0.0
        %2250 = vmatpush1.msra.mxu0 0.0
        %2251 = vmatprep.mubr.f32.mxu0 0.0
        %2252 = vmatmul.mubr.f32.gmra.mrb[0].mxu0 %v2185
        %v2253 = vpop.f32.mrb[0].mxu0
        %v2254 = vadd.f32 0.0, %v2253
        %v2255 = vpop.f32.mrb[0].mxu0
        %2256 = vdwg.mxu0
        %2258 = vset.pattern.permute.xlu0 0
        %2259 = vperm.xlu0 %2258, %v2254
        %v2260 = vpop.permute.xlu0 %2259
        %v2262 = vmul.f32 %v2260, %v466
        %v2263 = vadd.f32 %v471, %v2262
        %2264 = vset.pattern.permute.xlu0 1
        %2265 = vperm.xlu0 %2264, %v2254
        %v2266 = vpop.permute.xlu0 %2265
        %v2268 = vmul.f32 %v2266, %v480
        %v2269 = vadd.f32 %v2263, %v2268
        %2270 = vset.pattern.permute.xlu0 2
        %2271 = vperm.xlu0 %2270, %v2254
        %v2272 = vpop.permute.xlu0 %2271
        %v2274 = vmul.f32 %v2272, %v490
        %v2275 = vadd.f32 %v2269, %v2274
        %2276 = vset.pattern.permute.xlu0 3
        %2277 = vperm.xlu0 %2276, %v2254
        %v2278 = vpop.permute.xlu0 %2277
        %v2280 = vmul.f32 %v2278, %v500
        %v2281 = vadd.f32 %v2275, %v2280
        %2282 = vset.pattern.permute.xlu0 4
        %2283 = vperm.xlu0 %2282, %v2254
        %v2284 = vpop.permute.xlu0 %2283
        %v2286 = vmul.f32 %v2284, %v510
        %v2287 = vadd.f32 %v2281, %v2286
        %2288 = vset.pattern.permute.xlu0 5
        %2289 = vperm.xlu0 %2288, %v2254
        %v2290 = vpop.permute.xlu0 %2289
        %v2292 = vmul.f32 %v2290, %v520
        %v2293 = vadd.f32 %v2287, %v2292
        %2294 = vset.pattern.permute.xlu0 6
        %2295 = vperm.xlu0 %2294, %v2254
        %v2296 = vpop.permute.xlu0 %2295
        %v2298 = vmul.f32 %v2296, %v530
        %v2299 = vadd.f32 %v2293, %v2298
        %2300 = vset.pattern.permute.xlu0 7
        %2301 = vperm.xlu0 %2300, %v2254
        %v2302 = vpop.permute.xlu0 %2301
        %v2304 = vmul.f32 %v2302, %v540
        %v2305 = vadd.f32 %v2299, %v2304
        %2306 = vset.pattern.permute.xlu0 8
        %2307 = vperm.xlu0 %2306, %v2254
        %v2308 = vpop.permute.xlu0 %2307
        %v2310 = vmul.f32 %v2308, %v550
        %v2311 = vadd.f32 %v2305, %v2310
        %2312 = vset.pattern.permute.xlu0 9
        %2313 = vperm.xlu0 %2312, %v2254
        %v2314 = vpop.permute.xlu0 %2313
        %v2316 = vmul.f32 %v2314, %v560
        %v2317 = vadd.f32 %v2311, %v2316
        %2318 = vset.pattern.permute.xlu0 10
        %2319 = vperm.xlu0 %2318, %v2254
        %v2320 = vpop.permute.xlu0 %2319
        %v2322 = vmul.f32 %v2320, %v570
        %v2323 = vadd.f32 %v2317, %v2322
        %2324 = vset.pattern.permute.xlu0 11
        %2325 = vperm.xlu0 %2324, %v2254
        %v2326 = vpop.permute.xlu0 %2325
        %v2328 = vmul.f32 %v2326, %v580
        %v2329 = vadd.f32 %v2323, %v2328
        %2330 = vset.pattern.permute.xlu0 12
        %2331 = vperm.xlu0 %2330, %v2254
        %v2332 = vpop.permute.xlu0 %2331
        %v2334 = vmul.f32 %v2332, %v590
        %v2335 = vadd.f32 %v2329, %v2334
        %2336 = vset.pattern.permute.xlu0 13
        %2337 = vperm.xlu0 %2336, %v2254
        %v2338 = vpop.permute.xlu0 %2337
        %v2340 = vmul.f32 %v2338, %v600
        %v2341 = vadd.f32 %v2335, %v2340
        %2342 = vset.pattern.permute.xlu0 14
        %2343 = vperm.xlu0 %2342, %v2254
        %v2344 = vpop.permute.xlu0 %2343
        %v2346 = vmul.f32 %v2344, %v610
        %v2347 = vadd.f32 %v2341, %v2346
        %2348 = vset.pattern.permute.xlu0 15
        %2349 = vperm.xlu0 %2348, %v2254
        %v2350 = vpop.permute.xlu0 %2349
        %v2352 = vmul.f32 %v2350, %v620
        %v2353 = vadd.f32 %v2347, %v2352
        %v2354 = vsel %vm623, %v2353, -inf
        %2355 = vmax.xlane.f32.xlu0 %v2354
        %v2356 = vpop.xlane.xlu0 %2355
        %v2357 = vsub.f32 %v2353, %v2356
        %v2358 = vmul.f32 %v2357, 1.442695
        %v2359 = vpow.pop %v2358
        %v2360 = vsel %vm623, %v2359, 0.0
        %2361 = vadd.xlane.f32.xlu0 %v2360
        %v2362 = vpop.xlane.xlu0 %2361
        %v2363 = vlog2.pop %v2362
        %v2364 = vmul.f32 %v2363, 0.6931472
        %v2365 = vsub.f32 %v2357, %v2364
        %s2366 = scalar_lea.vmem %s190, 192
        %v2367 = vld [vmem:[%s2366] sm:$0xff]
        %v2368 = vld [vmem:[%s2366 + $0x8] sm:$0xff]
        %v2369 = vld [vmem:[%s2366 + $0x10] sm:$0xff]
        %v2370 = vld [vmem:[%s2366 + $0x18] sm:$0xff]
        %s2371 = scalar_lea.vmem %s197, 240
        %v2372 = vld [vmem:[%s2371] sm:$0xff]
        %v2373 = vld [vmem:[%s2371 + $0x8] sm:$0xff]
        %v2374 = vld [vmem:[%s2371 + $0x10] sm:$0xff]
        %v2375 = vld [vmem:[%s2371 + $0x18] sm:$0xff]
        %v2376 = vld [vmem:[%s2371 + $0x20] sm:$0xff]
        %2378 = vset.pattern.permute.xlu0 1
        %2379 = vperm.xlu0 %2378, %v2373
        %v2380 = vpop.permute.xlu0 %2379
        %2383 = vset.pattern.permute.xlu0 1
        %2384 = vperm.xlu0 %2383, %v2374
        %v2385 = vpop.permute.xlu0 %2384
        %2388 = vset.pattern.permute.xlu0 1
        %2389 = vperm.xlu0 %2388, %v2375
        %v2390 = vpop.permute.xlu0 %2389
        %2393 = vset.pattern.permute.xlu0 1
        %2394 = vperm.xlu0 %2393, %v2376
        %v2395 = vpop.permute.xlu0 %2394
        %v2397 = vmul.f32 %v2380, %v238
        %v2398 = vmul.f32 %v2385, %v238
        %v2399 = vmul.f32 %v2390, %v238
        %v2400 = vmul.f32 %v2395, %v238
        %v2401 = vadd.f32 %v246, %v2397
        %v2402 = vadd.f32 %v246, %v2398
        %v2403 = vadd.f32 %v246, %v2399
        %v2404 = vadd.f32 %v246, %v2400
        %2405 = vset.pattern.permute.xlu0 2
        %2406 = vperm.xlu0 %2405, %v2373
        %v2407 = vpop.permute.xlu0 %2406
        %2409 = vset.pattern.permute.xlu0 2
        %2410 = vperm.xlu0 %2409, %v2374
        %v2411 = vpop.permute.xlu0 %2410
        %2413 = vset.pattern.permute.xlu0 2
        %2414 = vperm.xlu0 %2413, %v2375
        %v2415 = vpop.permute.xlu0 %2414
        %2417 = vset.pattern.permute.xlu0 2
        %2418 = vperm.xlu0 %2417, %v2376
        %v2419 = vpop.permute.xlu0 %2418
        %v2421 = vmul.f32 %v2407, %v270
        %v2422 = vmul.f32 %v2411, %v270
        %v2423 = vmul.f32 %v2415, %v270
        %v2424 = vmul.f32 %v2419, %v270
        %v2425 = vadd.f32 %v2401, %v2421
        %v2426 = vadd.f32 %v2402, %v2422
        %v2427 = vadd.f32 %v2403, %v2423
        %v2428 = vadd.f32 %v2404, %v2424
        %v2430 = vsel %vm283, %v2367, 0
        %v2433 = vsel %vm283, %v2368, 0
        %v2436 = vsel %vm283, %v2369, 0
        %v2439 = vsel %vm283, %v2370, 0
        %2441 = vmatprep.subr.mxu0 0.0
        %2442 = vmatpush1.msra.mxu0 %v2425
        %2443 = vmatprep.subr.mxu0 0.0
        %2444 = vmatpush1.msra.mxu0 %v2426
        %2445 = vmatprep.subr.mxu0 0.0
        %2446 = vmatpush1.msra.mxu0 %v2427
        %2447 = vmatprep.subr.mxu0 0.0
        %2448 = vmatpush1.msra.mxu0 %v2428
        %2449 = vmatprep.subr.mxu0 0.0
        %2450 = vmatpush1.msra.mxu0 0.0
        %2451 = vmatprep.subr.mxu0 0.0
        %2452 = vmatpush1.msra.mxu0 0.0
        %2453 = vmatprep.subr.mxu0 0.0
        %2454 = vmatpush1.msra.mxu0 0.0
        %2455 = vmatprep.subr.mxu0 0.0
        %2456 = vmatpush1.msra.mxu0 0.0
        %2457 = vmatprep.subr.mxu0 0.0
        %2458 = vmatpush1.msra.mxu0 0.0
        %2459 = vmatprep.subr.mxu0 0.0
        %2460 = vmatpush1.msra.mxu0 0.0
        %2461 = vmatprep.subr.mxu0 0.0
        %2462 = vmatpush1.msra.mxu0 0.0
        %2463 = vmatprep.subr.mxu0 0.0
        %2464 = vmatpush1.msra.mxu0 0.0
        %2465 = vmatprep.subr.mxu0 0.0
        %2466 = vmatpush1.msra.mxu0 0.0
        %2467 = vmatprep.subr.mxu0 0.0
        %2468 = vmatpush1.msra.mxu0 0.0
        %2469 = vmatprep.subr.mxu0 0.0
        %2470 = vmatpush1.msra.mxu0 0.0
        %2471 = vmatprep.subr.mxu0 0.0
        %2472 = vmatpush1.msra.mxu0 0.0
        %2473 = vmatprep.subr.mxu0 0.0
        %2474 = vmatpush1.msra.mxu0 0.0
        %2475 = vmatprep.subr.mxu0 0.0
        %2476 = vmatpush1.msra.mxu0 0.0
        %2477 = vmatprep.subr.mxu0 0.0
        %2478 = vmatpush1.msra.mxu0 0.0
        %2479 = vmatprep.subr.mxu0 0.0
        %2480 = vmatpush1.msra.mxu0 0.0
        %2481 = vmatprep.subr.mxu0 0.0
        %2482 = vmatpush1.msra.mxu0 0.0
        %2483 = vmatprep.subr.mxu0 0.0
        %2484 = vmatpush1.msra.mxu0 0.0
        %2485 = vmatprep.subr.mxu0 0.0
        %2486 = vmatpush1.msra.mxu0 0.0
        %2487 = vmatprep.subr.mxu0 0.0
        %2488 = vmatpush1.msra.mxu0 0.0
        %2489 = vmatprep.subr.mxu0 0.0
        %2490 = vmatpush1.msra.mxu0 0.0
        %2491 = vmatprep.subr.mxu0 0.0
        %2492 = vmatpush1.msra.mxu0 0.0
        %2493 = vmatprep.subr.mxu0 0.0
        %2494 = vmatpush1.msra.mxu0 0.0
        %2495 = vmatprep.subr.mxu0 0.0
        %2496 = vmatpush1.msra.mxu0 0.0
        %2497 = vmatprep.subr.mxu0 0.0
        %2498 = vmatpush1.msra.mxu0 0.0
        %2499 = vmatprep.subr.mxu0 0.0
        %2500 = vmatpush1.msra.mxu0 0.0
        %2501 = vmatprep.subr.mxu0 0.0
        %2502 = vmatpush1.msra.mxu0 0.0
        %2503 = vmatprep.subr.mxu0 0.0
        %2504 = vmatpush1.msra.mxu0 0.0
        %2505 = vmatprep.mubr.f32.mxu0 0.0
        %2506 = vmatmul.mubr.f32.gmra.mrb[0].mxu0 %v2430
        %v2507 = vpop.f32.mrb[0].mxu0
        %v2508 = vadd.f32 %v282, %v2507
        %v2509 = vpop.f32.mrb[0].mxu0
        %2510 = vmatprep.mubr.f32.mxu0 0.0
        %2511 = vmatmul.mubr.f32.gmra.mrb[0].mxu0 %v2433
        %v2512 = vpop.f32.mrb[0].mxu0
        %v2513 = vadd.f32 %v282, %v2512
        %v2514 = vpop.f32.mrb[0].mxu0
        %2515 = vmatprep.mubr.f32.mxu0 0.0
        %2516 = vmatmul.mubr.f32.gmra.mrb[0].mxu0 %v2436
        %v2517 = vpop.f32.mrb[0].mxu0
        %v2518 = vadd.f32 %v282, %v2517
        %v2519 = vpop.f32.mrb[0].mxu0
        %2520 = vmatprep.mubr.f32.mxu0 0.0
        %2521 = vmatmul.mubr.f32.gmra.mrb[0].mxu0 %v2439
        %v2522 = vpop.f32.mrb[0].mxu0
        %v2523 = vadd.f32 %v282, %v2522
        %v2524 = vpop.f32.mrb[0].mxu0
        %2525 = vdwg.mxu0
        %v2526 = vmax.f32 %v2508, 0.0
        %v2527 = vmax.f32 %v2513, 0.0
        %v2528 = vmax.f32 %v2518, 0.0
        %v2529 = vmax.f32 %v2523, 0.0
        %v2531 = vsel %vm283, %v2372, 0
        %2533 = vmatprep.subr.mxu0 0.0
        %2534 = vmatpush1.msra.mxu0 %v2526
        %2535 = vmatprep.subr.mxu0 0.0
        %2536 = vmatpush1.msra.mxu0 %v2527
        %2537 = vmatprep.subr.mxu0 0.0
        %2538 = vmatpush1.msra.mxu0 %v2528
        %2539 = vmatprep.subr.mxu0 0.0
        %2540 = vmatpush1.msra.mxu0 %v2529
        %2541 = vmatprep.subr.mxu0 0.0
        %2542 = vmatpush1.msra.mxu0 0.0
        %2543 = vmatprep.subr.mxu0 0.0
        %2544 = vmatpush1.msra.mxu0 0.0
        %2545 = vmatprep.subr.mxu0 0.0
        %2546 = vmatpush1.msra.mxu0 0.0
        %2547 = vmatprep.subr.mxu0 0.0
        %2548 = vmatpush1.msra.mxu0 0.0
        %2549 = vmatprep.subr.mxu0 0.0
        %2550 = vmatpush1.msra.mxu0 0.0
        %2551 = vmatprep.subr.mxu0 0.0
        %2552 = vmatpush1.msra.mxu0 0.0
        %2553 = vmatprep.subr.mxu0 0.0
        %2554 = vmatpush1.msra.mxu0 0.0
        %2555 = vmatprep.subr.mxu0 0.0
        %2556 = vmatpush1.msra.mxu0 0.0
        %2557 = vmatprep.subr.mxu0 0.0
        %2558 = vmatpush1.msra.mxu0 0.0
        %2559 = vmatprep.subr.mxu0 0.0
        %2560 = vmatpush1.msra.mxu0 0.0
        %2561 = vmatprep.subr.mxu0 0.0
        %2562 = vmatpush1.msra.mxu0 0.0
        %2563 = vmatprep.subr.mxu0 0.0
        %2564 = vmatpush1.msra.mxu0 0.0
        %2565 = vmatprep.subr.mxu0 0.0
        %2566 = vmatpush1.msra.mxu0 0.0
        %2567 = vmatprep.subr.mxu0 0.0
        %2568 = vmatpush1.msra.mxu0 0.0
        %2569 = vmatprep.subr.mxu0 0.0
        %2570 = vmatpush1.msra.mxu0 0.0
        %2571 = vmatprep.subr.mxu0 0.0
        %2572 = vmatpush1.msra.mxu0 0.0
        %2573 = vmatprep.subr.mxu0 0.0
        %2574 = vmatpush1.msra.mxu0 0.0
        %2575 = vmatprep.subr.mxu0 0.0
        %2576 = vmatpush1.msra.mxu0 0.0
        %2577 = vmatprep.subr.mxu0 0.0
        %2578 = vmatpush1.msra.mxu0 0.0
        %2579 = vmatprep.subr.mxu0 0.0
        %2580 = vmatpush1.msra.mxu0 0.0
        %2581 = vmatprep.subr.mxu0 0.0
        %2582 = vmatpush1.msra.mxu0 0.0
        %2583 = vmatprep.subr.mxu0 0.0
        %2584 = vmatpush1.msra.mxu0 0.0
        %2585 = vmatprep.subr.mxu0 0.0
        %2586 = vmatpush1.msra.mxu0 0.0
        %2587 = vmatprep.subr.mxu0 0.0
        %2588 = vmatpush1.msra.mxu0 0.0
        %2589 = vmatprep.subr.mxu0 0.0
        %2590 = vmatpush1.msra.mxu0 0.0
        %2591 = vmatprep.subr.mxu0 0.0
        %2592 = vmatpush1.msra.mxu0 0.0
        %2593 = vmatprep.subr.mxu0 0.0
        %2594 = vmatpush1.msra.mxu0 0.0
        %2595 = vmatprep.subr.mxu0 0.0
        %2596 = vmatpush1.msra.mxu0 0.0
        %2597 = vmatprep.mubr.f32.mxu0 0.0
        %2598 = vmatmul.mubr.f32.gmra.mrb[0].mxu0 %v2531
        %v2599 = vpop.f32.mrb[0].mxu0
        %v2600 = vadd.f32 0.0, %v2599
        %v2601 = vpop.f32.mrb[0].mxu0
        %2602 = vdwg.mxu0
        %2604 = vset.pattern.permute.xlu0 0
        %2605 = vperm.xlu0 %2604, %v2600
        %v2606 = vpop.permute.xlu0 %2605
        %v2608 = vmul.f32 %v2606, %v466
        %v2609 = vadd.f32 %v471, %v2608
        %2610 = vset.pattern.permute.xlu0 1
        %2611 = vperm.xlu0 %2610, %v2600
        %v2612 = vpop.permute.xlu0 %2611
        %v2614 = vmul.f32 %v2612, %v480
        %v2615 = vadd.f32 %v2609, %v2614
        %2616 = vset.pattern.permute.xlu0 2
        %2617 = vperm.xlu0 %2616, %v2600
        %v2618 = vpop.permute.xlu0 %2617
        %v2620 = vmul.f32 %v2618, %v490
        %v2621 = vadd.f32 %v2615, %v2620
        %2622 = vset.pattern.permute.xlu0 3
        %2623 = vperm.xlu0 %2622, %v2600
        %v2624 = vpop.permute.xlu0 %2623
        %v2626 = vmul.f32 %v2624, %v500
        %v2627 = vadd.f32 %v2621, %v2626
        %2628 = vset.pattern.permute.xlu0 4
        %2629 = vperm.xlu0 %2628, %v2600
        %v2630 = vpop.permute.xlu0 %2629
        %v2632 = vmul.f32 %v2630, %v510
        %v2633 = vadd.f32 %v2627, %v2632
        %2634 = vset.pattern.permute.xlu0 5
        %2635 = vperm.xlu0 %2634, %v2600
        %v2636 = vpop.permute.xlu0 %2635
        %v2638 = vmul.f32 %v2636, %v520
        %v2639 = vadd.f32 %v2633, %v2638
        %2640 = vset.pattern.permute.xlu0 6
        %2641 = vperm.xlu0 %2640, %v2600
        %v2642 = vpop.permute.xlu0 %2641
        %v2644 = vmul.f32 %v2642, %v530
        %v2645 = vadd.f32 %v2639, %v2644
        %2646 = vset.pattern.permute.xlu0 7
        %2647 = vperm.xlu0 %2646, %v2600
        %v2648 = vpop.permute.xlu0 %2647
        %v2650 = vmul.f32 %v2648, %v540
        %v2651 = vadd.f32 %v2645, %v2650
        %2652 = vset.pattern.permute.xlu0 8
        %2653 = vperm.xlu0 %2652, %v2600
        %v2654 = vpop.permute.xlu0 %2653
        %v2656 = vmul.f32 %v2654, %v550
        %v2657 = vadd.f32 %v2651, %v2656
        %2658 = vset.pattern.permute.xlu0 9
        %2659 = vperm.xlu0 %2658, %v2600
        %v2660 = vpop.permute.xlu0 %2659
        %v2662 = vmul.f32 %v2660, %v560
        %v2663 = vadd.f32 %v2657, %v2662
        %2664 = vset.pattern.permute.xlu0 10
        %2665 = vperm.xlu0 %2664, %v2600
        %v2666 = vpop.permute.xlu0 %2665
        %v2668 = vmul.f32 %v2666, %v570
        %v2669 = vadd.f32 %v2663, %v2668
        %2670 = vset.pattern.permute.xlu0 11
        %2671 = vperm.xlu0 %2670, %v2600
        %v2672 = vpop.permute.xlu0 %2671
        %v2674 = vmul.f32 %v2672, %v580
        %v2675 = vadd.f32 %v2669, %v2674
        %2676 = vset.pattern.permute.xlu0 12
        %2677 = vperm.xlu0 %2676, %v2600
        %v2678 = vpop.permute.xlu0 %2677
        %v2680 = vmul.f32 %v2678, %v590
        %v2681 = vadd.f32 %v2675, %v2680
        %2682 = vset.pattern.permute.xlu0 13
        %2683 = vperm.xlu0 %2682, %v2600
        %v2684 = vpop.permute.xlu0 %2683
        %v2686 = vmul.f32 %v2684, %v600
        %v2687 = vadd.f32 %v2681, %v2686
        %2688 = vset.pattern.permute.xlu0 14
        %2689 = vperm.xlu0 %2688, %v2600
        %v2690 = vpop.permute.xlu0 %2689
        %v2692 = vmul.f32 %v2690, %v610
        %v2693 = vadd.f32 %v2687, %v2692
        %2694 = vset.pattern.permute.xlu0 15
        %2695 = vperm.xlu0 %2694, %v2600
        %v2696 = vpop.permute.xlu0 %2695
        %v2698 = vmul.f32 %v2696, %v620
        %v2699 = vadd.f32 %v2693, %v2698
        %v2700 = vsel %vm623, %v2699, -inf
        %2701 = vmax.xlane.f32.xlu0 %v2700
        %v2702 = vpop.xlane.xlu0 %2701
        %v2703 = vsub.f32 %v2699, %v2702
        %v2704 = vmul.f32 %v2703, 1.442695
        %v2705 = vpow.pop %v2704
        %v2706 = vsel %vm623, %v2705, 0.0
        %2707 = vadd.xlane.f32.xlu0 %v2706
        %v2708 = vpop.xlane.xlu0 %2707
        %v2709 = vlog2.pop %v2708
        %v2710 = vmul.f32 %v2709, 0.6931472
        %v2711 = vsub.f32 %v2703, %v2710
        %s2712 = scalar_lea.vmem %s190, 224
        %v2713 = vld [vmem:[%s2712] sm:$0xff]
        %v2714 = vld [vmem:[%s2712 + $0x8] sm:$0xff]
        %v2715 = vld [vmem:[%s2712 + $0x10] sm:$0xff]
        %v2716 = vld [vmem:[%s2712 + $0x18] sm:$0xff]
        %s2717 = scalar_lea.vmem %s197, 280
        %v2718 = vld [vmem:[%s2717] sm:$0xff]
        %v2719 = vld [vmem:[%s2717 + $0x8] sm:$0xff]
        %v2720 = vld [vmem:[%s2717 + $0x10] sm:$0xff]
        %v2721 = vld [vmem:[%s2717 + $0x18] sm:$0xff]
        %v2722 = vld [vmem:[%s2717 + $0x20] sm:$0xff]
        %2724 = vset.pattern.permute.xlu0 1
        %2725 = vperm.xlu0 %2724, %v2719
        %v2726 = vpop.permute.xlu0 %2725
        %2729 = vset.pattern.permute.xlu0 1
        %2730 = vperm.xlu0 %2729, %v2720
        %v2731 = vpop.permute.xlu0 %2730
        %2734 = vset.pattern.permute.xlu0 1
        %2735 = vperm.xlu0 %2734, %v2721
        %v2736 = vpop.permute.xlu0 %2735
        %2739 = vset.pattern.permute.xlu0 1
        %2740 = vperm.xlu0 %2739, %v2722
        %v2741 = vpop.permute.xlu0 %2740
        %v2743 = vmul.f32 %v2726, %v238
        %v2744 = vmul.f32 %v2731, %v238
        %v2745 = vmul.f32 %v2736, %v238
        %v2746 = vmul.f32 %v2741, %v238
        %v2747 = vadd.f32 %v246, %v2743
        %v2748 = vadd.f32 %v246, %v2744
        %v2749 = vadd.f32 %v246, %v2745
        %v2750 = vadd.f32 %v246, %v2746
        %2751 = vset.pattern.permute.xlu0 2
        %2752 = vperm.xlu0 %2751, %v2719
        %v2753 = vpop.permute.xlu0 %2752
        %2755 = vset.pattern.permute.xlu0 2
        %2756 = vperm.xlu0 %2755, %v2720
        %v2757 = vpop.permute.xlu0 %2756
        %2759 = vset.pattern.permute.xlu0 2
        %2760 = vperm.xlu0 %2759, %v2721
        %v2761 = vpop.permute.xlu0 %2760
        %2763 = vset.pattern.permute.xlu0 2
        %2764 = vperm.xlu0 %2763, %v2722
        %v2765 = vpop.permute.xlu0 %2764
        %v2767 = vmul.f32 %v2753, %v270
        %v2768 = vmul.f32 %v2757, %v270
        %v2769 = vmul.f32 %v2761, %v270
        %v2770 = vmul.f32 %v2765, %v270
        %v2771 = vadd.f32 %v2747, %v2767
        %v2772 = vadd.f32 %v2748, %v2768
        %v2773 = vadd.f32 %v2749, %v2769
        %v2774 = vadd.f32 %v2750, %v2770
        %v2776 = vsel %vm283, %v2713, 0
        %v2779 = vsel %vm283, %v2714, 0
        %v2782 = vsel %vm283, %v2715, 0
        %v2785 = vsel %vm283, %v2716, 0
        %2787 = vmatprep.subr.mxu0 0.0
        %2788 = vmatpush1.msra.mxu0 %v2771
        %2789 = vmatprep.subr.mxu0 0.0
        %2790 = vmatpush1.msra.mxu0 %v2772
        %2791 = vmatprep.subr.mxu0 0.0
        %2792 = vmatpush1.msra.mxu0 %v2773
        %2793 = vmatprep.subr.mxu0 0.0
        %2794 = vmatpush1.msra.mxu0 %v2774
        %2795 = vmatprep.subr.mxu0 0.0
        %2796 = vmatpush1.msra.mxu0 0.0
        %2797 = vmatprep.subr.mxu0 0.0
        %2798 = vmatpush1.msra.mxu0 0.0
        %2799 = vmatprep.subr.mxu0 0.0
        %2800 = vmatpush1.msra.mxu0 0.0
        %2801 = vmatprep.subr.mxu0 0.0
        %2802 = vmatpush1.msra.mxu0 0.0
        %2803 = vmatprep.subr.mxu0 0.0
        %2804 = vmatpush1.msra.mxu0 0.0
        %2805 = vmatprep.subr.mxu0 0.0
        %2806 = vmatpush1.msra.mxu0 0.0
        %2807 = vmatprep.subr.mxu0 0.0
        %2808 = vmatpush1.msra.mxu0 0.0
        %2809 = vmatprep.subr.mxu0 0.0
        %2810 = vmatpush1.msra.mxu0 0.0
        %2811 = vmatprep.subr.mxu0 0.0
        %2812 = vmatpush1.msra.mxu0 0.0
        %2813 = vmatprep.subr.mxu0 0.0
        %2814 = vmatpush1.msra.mxu0 0.0
        %2815 = vmatprep.subr.mxu0 0.0
        %2816 = vmatpush1.msra.mxu0 0.0
        %2817 = vmatprep.subr.mxu0 0.0
        %2818 = vmatpush1.msra.mxu0 0.0
        %2819 = vmatprep.subr.mxu0 0.0
        %2820 = vmatpush1.msra.mxu0 0.0
        %2821 = vmatprep.subr.mxu0 0.0
        %2822 = vmatpush1.msra.mxu0 0.0
        %2823 = vmatprep.subr.mxu0 0.0
        %2824 = vmatpush1.msra.mxu0 0.0
        %2825 = vmatprep.subr.mxu0 0.0
        %2826 = vmatpush1.msra.mxu0 0.0
        %2827 = vmatprep.subr.mxu0 0.0
        %2828 = vmatpush1.msra.mxu0 0.0
        %2829 = vmatprep.subr.mxu0 0.0
        %2830 = vmatpush1.msra.mxu0 0.0
        %2831 = vmatprep.subr.mxu0 0.0
        %2832 = vmatpush1.msra.mxu0 0.0
        %2833 = vmatprep.subr.mxu0 0.0
        %2834 = vmatpush1.msra.mxu0 0.0
        %2835 = vmatprep.subr.mxu0 0.0
        %2836 = vmatpush1.msra.mxu0 0.0
        %2837 = vmatprep.subr.mxu0 0.0
        %2838 = vmatpush1.msra.mxu0 0.0
        %2839 = vmatprep.subr.mxu0 0.0
        %2840 = vmatpush1.msra.mxu0 0.0
        %2841 = vmatprep.subr.mxu0 0.0
        %2842 = vmatpush1.msra.mxu0 0.0
        %2843 = vmatprep.subr.mxu0 0.0
        %2844 = vmatpush1.msra.mxu0 0.0
        %2845 = vmatprep.subr.mxu0 0.0
        %2846 = vmatpush1.msra.mxu0 0.0
        %2847 = vmatprep.subr.mxu0 0.0
        %2848 = vmatpush1.msra.mxu0 0.0
        %2849 = vmatprep.subr.mxu0 0.0
        %2850 = vmatpush1.msra.mxu0 0.0
        %2851 = vmatprep.mubr.f32.mxu0 0.0
        %2852 = vmatmul.mubr.f32.gmra.mrb[0].mxu0 %v2776
        %v2853 = vpop.f32.mrb[0].mxu0
        %v2854 = vadd.f32 %v282, %v2853
        %v2855 = vpop.f32.mrb[0].mxu0
        %2856 = vmatprep.mubr.f32.mxu0 0.0
        %2857 = vmatmul.mubr.f32.gmra.mrb[0].mxu0 %v2779
        %v2858 = vpop.f32.mrb[0].mxu0
        %v2859 = vadd.f32 %v282, %v2858
        %v2860 = vpop.f32.mrb[0].mxu0
        %2861 = vmatprep.mubr.f32.mxu0 0.0
        %2862 = vmatmul.mubr.f32.gmra.mrb[0].mxu0 %v2782
        %v2863 = vpop.f32.mrb[0].mxu0
        %v2864 = vadd.f32 %v282, %v2863
        %v2865 = vpop.f32.mrb[0].mxu0
        %2866 = vmatprep.mubr.f32.mxu0 0.0
        %2867 = vmatmul.mubr.f32.gmra.mrb[0].mxu0 %v2785
        %v2868 = vpop.f32.mrb[0].mxu0
        %v2869 = vadd.f32 %v282, %v2868
        %v2870 = vpop.f32.mrb[0].mxu0
        %2871 = vdwg.mxu0
        %v2872 = vmax.f32 %v2854, 0.0
        %v2873 = vmax.f32 %v2859, 0.0
        %v2874 = vmax.f32 %v2864, 0.0
        %v2875 = vmax.f32 %v2869, 0.0
        %v2877 = vsel %vm283, %v2718, 0
        %2879 = vmatprep.subr.mxu0 0.0
        %2880 = vmatpush1.msra.mxu0 %v2872
        %2881 = vmatprep.subr.mxu0 0.0
        %2882 = vmatpush1.msra.mxu0 %v2873
        %2883 = vmatprep.subr.mxu0 0.0
        %2884 = vmatpush1.msra.mxu0 %v2874
        %2885 = vmatprep.subr.mxu0 0.0
        %2886 = vmatpush1.msra.mxu0 %v2875
        %2887 = vmatprep.subr.mxu0 0.0
        %2888 = vmatpush1.msra.mxu0 0.0
        %2889 = vmatprep.subr.mxu0 0.0
        %2890 = vmatpush1.msra.mxu0 0.0
        %2891 = vmatprep.subr.mxu0 0.0
        %2892 = vmatpush1.msra.mxu0 0.0
        %2893 = vmatprep.subr.mxu0 0.0
        %2894 = vmatpush1.msra.mxu0 0.0
        %2895 = vmatprep.subr.mxu0 0.0
        %2896 = vmatpush1.msra.mxu0 0.0
        %2897 = vmatprep.subr.mxu0 0.0
        %2898 = vmatpush1.msra.mxu0 0.0
        %2899 = vmatprep.subr.mxu0 0.0
        %2900 = vmatpush1.msra.mxu0 0.0
        %2901 = vmatprep.subr.mxu0 0.0
        %2902 = vmatpush1.msra.mxu0 0.0
        %2903 = vmatprep.subr.mxu0 0.0
        %2904 = vmatpush1.msra.mxu0 0.0
        %2905 = vmatprep.subr.mxu0 0.0
        %2906 = vmatpush1.msra.mxu0 0.0
        %2907 = vmatprep.subr.mxu0 0.0
        %2908 = vmatpush1.msra.mxu0 0.0
        %2909 = vmatprep.subr.mxu0 0.0
        %2910 = vmatpush1.msra.mxu0 0.0
        %2911 = vmatprep.subr.mxu0 0.0
        %2912 = vmatpush1.msra.mxu0 0.0
        %2913 = vmatprep.subr.mxu0 0.0
        %2914 = vmatpush1.msra.mxu0 0.0
        %2915 = vmatprep.subr.mxu0 0.0
        %2916 = vmatpush1.msra.mxu0 0.0
        %2917 = vmatprep.subr.mxu0 0.0
        %2918 = vmatpush1.msra.mxu0 0.0
        %2919 = vmatprep.subr.mxu0 0.0
        %2920 = vmatpush1.msra.mxu0 0.0
        %2921 = vmatprep.subr.mxu0 0.0
        %2922 = vmatpush1.msra.mxu0 0.0
        %2923 = vmatprep.subr.mxu0 0.0
        %2924 = vmatpush1.msra.mxu0 0.0
        %2925 = vmatprep.subr.mxu0 0.0
        %2926 = vmatpush1.msra.mxu0 0.0
        %2927 = vmatprep.subr.mxu0 0.0
        %2928 = vmatpush1.msra.mxu0 0.0
        %2929 = vmatprep.subr.mxu0 0.0
        %2930 = vmatpush1.msra.mxu0 0.0
        %2931 = vmatprep.subr.mxu0 0.0
        %2932 = vmatpush1.msra.mxu0 0.0
        %2933 = vmatprep.subr.mxu0 0.0
        %2934 = vmatpush1.msra.mxu0 0.0
        %2935 = vmatprep.subr.mxu0 0.0
        %2936 = vmatpush1.msra.mxu0 0.0
        %2937 = vmatprep.subr.mxu0 0.0
        %2938 = vmatpush1.msra.mxu0 0.0
        %2939 = vmatprep.subr.mxu0 0.0
        %2940 = vmatpush1.msra.mxu0 0.0
        %2941 = vmatprep.subr.mxu0 0.0
        %2942 = vmatpush1.msra.mxu0 0.0
        %2943 = vmatprep.mubr.f32.mxu0 0.0
        %2944 = vmatmul.mubr.f32.gmra.mrb[0].mxu0 %v2877
        %v2945 = vpop.f32.mrb[0].mxu0
        %v2946 = vadd.f32 0.0, %v2945
        %v2947 = vpop.f32.mrb[0].mxu0
        %2948 = vdwg.mxu0
        %2950 = vset.pattern.permute.xlu0 0
        %2951 = vperm.xlu0 %2950, %v2946
        %v2952 = vpop.permute.xlu0 %2951
        %v2954 = vmul.f32 %v2952, %v466
        %v2955 = vadd.f32 %v471, %v2954
        %2956 = vset.pattern.permute.xlu0 1
        %2957 = vperm.xlu0 %2956, %v2946
        %v2958 = vpop.permute.xlu0 %2957
        %v2960 = vmul.f32 %v2958, %v480
        %v2961 = vadd.f32 %v2955, %v2960
        %2962 = vset.pattern.permute.xlu0 2
        %2963 = vperm.xlu0 %2962, %v2946
        %v2964 = vpop.permute.xlu0 %2963
        %v2966 = vmul.f32 %v2964, %v490
        %v2967 = vadd.f32 %v2961, %v2966
        %2968 = vset.pattern.permute.xlu0 3
        %2969 = vperm.xlu0 %2968, %v2946
        %v2970 = vpop.permute.xlu0 %2969
        %v2972 = vmul.f32 %v2970, %v500
        %v2973 = vadd.f32 %v2967, %v2972
        %2974 = vset.pattern.permute.xlu0 4
        %2975 = vperm.xlu0 %2974, %v2946
        %v2976 = vpop.permute.xlu0 %2975
        %v2978 = vmul.f32 %v2976, %v510
        %v2979 = vadd.f32 %v2973, %v2978
        %2980 = vset.pattern.permute.xlu0 5
        %2981 = vperm.xlu0 %2980, %v2946
        %v2982 = vpop.permute.xlu0 %2981
        %v2984 = vmul.f32 %v2982, %v520
        %v2985 = vadd.f32 %v2979, %v2984
        %2986 = vset.pattern.permute.xlu0 6
        %2987 = vperm.xlu0 %2986, %v2946
        %v2988 = vpop.permute.xlu0 %2987
        %v2990 = vmul.f32 %v2988, %v530
        %v2991 = vadd.f32 %v2985, %v2990
        %2992 = vset.pattern.permute.xlu0 7
        %2993 = vperm.xlu0 %2992, %v2946
        %v2994 = vpop.permute.xlu0 %2993
        %v2996 = vmul.f32 %v2994, %v540
        %v2997 = vadd.f32 %v2991, %v2996
        %2998 = vset.pattern.permute.xlu0 8
        %2999 = vperm.xlu0 %2998, %v2946
        %v3000 = vpop.permute.xlu0 %2999
        %v3002 = vmul.f32 %v3000, %v550
        %v3003 = vadd.f32 %v2997, %v3002
        %3004 = vset.pattern.permute.xlu0 9
        %3005 = vperm.xlu0 %3004, %v2946
        %v3006 = vpop.permute.xlu0 %3005
        %v3008 = vmul.f32 %v3006, %v560
        %v3009 = vadd.f32 %v3003, %v3008
        %3010 = vset.pattern.permute.xlu0 10
        %3011 = vperm.xlu0 %3010, %v2946
        %v3012 = vpop.permute.xlu0 %3011
        %v3014 = vmul.f32 %v3012, %v570
        %v3015 = vadd.f32 %v3009, %v3014
        %3016 = vset.pattern.permute.xlu0 11
        %3017 = vperm.xlu0 %3016, %v2946
        %v3018 = vpop.permute.xlu0 %3017
        %v3020 = vmul.f32 %v3018, %v580
        %v3021 = vadd.f32 %v3015, %v3020
        %3022 = vset.pattern.permute.xlu0 12
        %3023 = vperm.xlu0 %3022, %v2946
        %v3024 = vpop.permute.xlu0 %3023
        %v3026 = vmul.f32 %v3024, %v590
        %v3027 = vadd.f32 %v3021, %v3026
        %3028 = vset.pattern.permute.xlu0 13
        %3029 = vperm.xlu0 %3028, %v2946
        %v3030 = vpop.permute.xlu0 %3029
        %v3032 = vmul.f32 %v3030, %v600
        %v3033 = vadd.f32 %v3027, %v3032
        %3034 = vset.pattern.permute.xlu0 14
        %3035 = vperm.xlu0 %3034, %v2946
        %v3036 = vpop.permute.xlu0 %3035
        %v3038 = vmul.f32 %v3036, %v610
        %v3039 = vadd.f32 %v3033, %v3038
        %3040 = vset.pattern.permute.xlu0 15
        %3041 = vperm.xlu0 %3040, %v2946
        %v3042 = vpop.permute.xlu0 %3041
        %v3044 = vmul.f32 %v3042, %v620
        %v3045 = vadd.f32 %v3039, %v3044
        %v3046 = vsel %vm623, %v3045, -inf
        %3047 = vmax.xlane.f32.xlu0 %v3046
        %v3048 = vpop.xlane.xlu0 %3047
        %v3049 = vsub.f32 %v3045, %v3048
        %v3050 = vmul.f32 %v3049, 1.442695
        %v3051 = vpow.pop %v3050
        %v3052 = vsel %vm623, %v3051, 0.0
        %3053 = vadd.xlane.f32.xlu0 %v3052
        %v3054 = vpop.xlane.xlu0 %3053
        %v3055 = vlog2.pop %v3054
        %v3056 = vmul.f32 %v3055, 0.6931472
        %v3057 = vsub.f32 %v3049, %v3056
        %3059 = vrot.lane.b32.xlu0 %v981, 16
        %v3060 = vpop.permute.xlu0 %3059
        %3063 = vrot.lane.b32.xlu0 %v1327, 32
        %v3064 = vpop.permute.xlu0 %3063
        %3067 = vrot.lane.b32.xlu0 %v1673, 48
        %v3068 = vpop.permute.xlu0 %3067
        %3071 = vrot.lane.b32.xlu0 %v2019, 64
        %v3072 = vpop.permute.xlu0 %3071
        %3075 = vrot.lane.b32.xlu0 %v2365, 80
        %v3076 = vpop.permute.xlu0 %3075
        %3079 = vrot.lane.b32.xlu0 %v2711, 96
        %v3080 = vpop.permute.xlu0 %3079
        %3083 = vrot.lane.b32.xlu0 %v3057, 112
        %v3084 = vpop.permute.xlu0 %3083
        %vm3086 = vcmask 130048
        %v3087 = vsel %vm3086, %v635, %v3060
        %v3088 = vsel %vm283, %v3087, %v3064
        %vm3089 = vcmask 392192
        %v3090 = vsel %vm3089, %v3088, %v3068
        %vm3091 = vcmask 523264
        %v3092 = vsel %vm3091, %v3090, %v3072
        %vm3093 = vcmask 654336
        %v3094 = vsel %vm3093, %v3092, %v3076
        %vm3095 = vcmask 785408
        %v3096 = vsel %vm3095, %v3094, %v3080
        %vm3097 = vcmask 916480
        %v3098 = vsel %vm3097, %v3096, %v3084
        %3099 = vst [vmem:[%s184] sm:$0xf] %v3098
        %s3100 = sand.u32 %s98, 1
        %s3101 = scalar_lea.sflag [#allocation3], %s3100
        %s3102 = sand.u32 %s98, 1
        %s3103 = smul.addr %s3102, 4
        %s3104 = scalar_lea.vmem [#allocation2], %s3103
        // Predicated region
        $region33: #{tpu_custom_call.1} parent=31 // pred_check
          %p3105 = pneg %p108
        $region34: #{tpu_custom_call.1} parent=31 // pred_check_branch
          %3107 = sbr.rel (%p3105) target = $region36
        $region35: #{tpu_custom_call.1} parent=31 // pred_region
          %s3109 = ssub.s32 64, 64
          %3110 = vsyncadd %s3101, %s3109
          %s3111 = smul.addr %s17, 64
          %s3112 = scalar_lea.hbm %s3, %s3111
          %s3114 = sshll.u32 %s3104, 4
          %s3115 = int_to_ptr.vmem [resolvable:$true] %s3114
          %3117 = dma.vmem_to_hbm [thread:$0]  %s3115, 64, %s3112, %s3101
        $region36: #{tpu_custom_call.1} parent=31 // pred_fallthru
          _
      $region32: #{tpu_custom_call.1} parent=5 // pred_fallthru
        _
      %p3118 = scmp.le.s32.totalorder 2, %s12
      // Predicated region
      $region37: #{tpu_custom_call.1} parent=5 // pred_check
        %p3119 = pneg %p3118
      $region38: #{tpu_custom_call.1} parent=5 // pred_check_branch
        %3121 = sbr.rel (%p3119) target = $region40
      $region39: #{tpu_custom_call.1} parent=5 // pred_region
        %s3122 = ssub.s32 %s12, 2
        // Predicated region
        $region41: #{tpu_custom_call.1} parent=39 // pred_check
          %p3123 = pneg %p114
        $region42: #{tpu_custom_call.1} parent=39 // pred_check_branch
          %3125 = sbr.rel (%p3123) target = $region44
        $region43: #{tpu_custom_call.1} parent=39 // pred_region
          %s3126 = sand.u32 %s99, 1
          %s3127 = scalar_lea.sflag [#allocation3], %s3126
          %s3128 = sand.u32 %s99, 1
          %s3129 = smul.addr %s3128, 4
          %s3130 = scalar_lea.vmem [#allocation2], %s3129
          %3131 = dma.done %s3127, 64
        $region44: #{tpu_custom_call.1} parent=39 // pred_fallthru
          _
      $region40: #{tpu_custom_call.1} parent=5 // pred_fallthru
        _
    $region6: #{tpu_custom_call.1} parent=1 // loop_footer
      %s16 = sadd.s32 1, %s12
    $region7: #{tpu_custom_call.1} parent=1 // loop_footer_branch
      %11 = sbr.rel target = $region3
    $region8: #{tpu_custom_call.1} parent=1 // loop_exit
      _
    %3132 = vsyncpa [#allocation3], 1
    %s3133 = scalar_lea.sflag [#allocation3], 1
    %3134 = vsyncpa %s3133, 1

</llo_original>
